<compile_context>
chip_gen: v7x
topology: tpu7x:2x2x1
jax: 0.10.0
libtpu: 0.0.40
codegen_flags: <defaults>
</compile_context>

<pallas_src>
import numpy as np
import jax
import jax.numpy as jnp
from jax import lax
from jax.experimental import pallas as pl
from jax.experimental.pallas import tpu as pltpu


# ---------------------------------------------------------------------------
# Weight init: replicate scipy.ndimage.gaussian_laplace applied to a 5x5 delta
# (what LoGLayer.weights_init does), in plain numpy.
# ---------------------------------------------------------------------------
def _gaussian_kernel1d(sigma, order, radius):
    exponent_range = np.arange(order + 1)
    sigma2 = sigma * sigma
    x = np.arange(-radius, radius + 1)
    phi_x = np.exp(-0.5 / sigma2 * x ** 2)
    phi_x = phi_x / phi_x.sum()
    if order == 0:
        return phi_x
    q = np.zeros(order + 1)
    q[0] = 1.0
    D = np.diag(exponent_range[1:], 1)
    P = np.diag(np.ones(order) / -sigma2, -1)
    Q_deriv = D + P
    for _ in range(order):
        q = Q_deriv.dot(q)
    q = (x[:, None] ** exponent_range).dot(q)
    return q * phi_x


def _correlate1d_reflect(arr, weights, axis):
    # scipy.ndimage mode='reflect' == numpy pad mode='symmetric'
    r = (len(weights) - 1) // 2
    pad = [(0, 0)] * arr.ndim
    pad[axis] = (r, r)
    ap = np.pad(arr, pad, mode="symmetric")
    out = np.zeros_like(arr, dtype=np.float64)
    n = arr.shape[axis]
    for k, wk in enumerate(weights):
        sl = [slice(None)] * arr.ndim
        sl[axis] = slice(k, k + n)
        out += wk * ap[tuple(sl)]
    return out


def gaussian_laplace_np(inp, sigma, truncate=4.0):
    out = np.zeros_like(inp, dtype=np.float64)
    radius = int(truncate * float(sigma) + 0.5)
    for axis in range(inp.ndim):
        tmp = inp.astype(np.float64)
        for ax in range(inp.ndim):
            order = 2 if ax == axis else 0
            w = _gaussian_kernel1d(sigma, order, radius)[::-1]
            tmp = _correlate1d_reflect(tmp, w, ax)
        out += tmp
    return out


def make_log_weights(sigma):
    """5x5 LoG kernel (float32) exactly as LoGLayer.weights_init computes it."""
    delta = np.zeros((5, 5))
    delta[2, 2] = 1.0
    return gaussian_laplace_np(delta, sigma).astype(np.float32)


def _separable_factors(k5):
    """Rank decomposition: k = sum_t outer(rows[t], cols[t]) (exact via SVD).

    The LoG kernel is rank-2, so this yields two 5-tap 1-D factor pairs.
    Returned as tuples of Python floats (compile-time constants in the kernel).
    """
    u, s, vt = np.linalg.svd(np.asarray(k5, np.float64))
    thresh = s[0] * 1e-10 if s[0] > 0 else np.inf
    keep = s > thresh
    rows = [tuple(float(v) for v in u[:, i] * s[i]) for i in range(len(s)) if keep[i]]
    cols = [tuple(float(v) for v in vt[i, :]) for i in range(len(s)) if keep[i]]
    return rows, cols


# ---------------------------------------------------------------------------
# Pallas kernel: depthwise 5x5 LoG conv with fused ReflectionPad2d(2), computed
# in separable (rank-2) form.  Two block layouts share one body:
#   channels_last=True  : block (H, W, Cb)  - channels on lanes (lane-dense)
#   channels_last=False : block (Cb, H, W)  - W on lanes (small-NC fallback)
# ---------------------------------------------------------------------------
def _make_log_kernel(H, W, rows, cols, channels_last):
    nterms = len(rows)
    _all = slice(None)

    if channels_last:
        def idx(h, w):                      # (H, W, C) blocks
            return (h, w, _all)
    else:
        def idx(h, w):                      # (C, H, W) blocks
            return (_all, h, w)

    def kernel(x_ref, o_ref, pad_ref):
        # ---- ReflectionPad2d(2) into the VMEM scratch (exclude-edge reflect).
        # Interior first, then row halos, then column halos (corners fall out of
        # the column copies, which read the already-filled halo rows).
        pad_ref[idx(slice(2, 2 + H), slice(2, 2 + W))] = x_ref[...].astype(jnp.float32)
        pad_ref[idx(slice(0, 1), _all)] = pad_ref[idx(slice(4, 5), _all)]              # row -2 <- 2
        pad_ref[idx(slice(1, 2), _all)] = pad_ref[idx(slice(3, 4), _all)]              # row -1 <- 1
        pad_ref[idx(slice(H + 2, H + 3), _all)] = pad_ref[idx(slice(H, H + 1), _all)]  # row H   <- H-2
        pad_ref[idx(slice(H + 3, H + 4), _all)] = pad_ref[idx(slice(H - 1, H), _all)]  # row H+1 <- H-3
        pad_ref[idx(_all, slice(0, 1))] = pad_ref[idx(_all, slice(4, 5))]              # col -2 <- 2
        pad_ref[idx(_all, slice(1, 2))] = pad_ref[idx(_all, slice(3, 4))]              # col -1 <- 1
        pad_ref[idx(_all, slice(W + 2, W + 3))] = pad_ref[idx(_all, slice(W, W + 1))]  # col W   <- W-2
        pad_ref[idx(_all, slice(W + 3, W + 4))] = pad_ref[idx(_all, slice(W - 1, W))]  # col W+1 <- W-3

        # ---- W pass: each of the 5 W-shifted slabs is loaded exactly once and
        # shared by every separable term (5 shifted loads, not 25).
        u = [None] * nterms
        for dj in range(5):
            slab = pad_ref[idx(_all, slice(dj, dj + W))]        # (.., H+4, W, ..)
            for t in range(nterms):
                c = cols[t][dj]
                if c == 0.0:
                    continue
                contrib = c * slab
                u[t] = contrib if u[t] is None else u[t] + contrib

        # ---- H pass: shifts along the H axis only (the leading, non-vreg axis
        # when channels are on lanes), accumulating every term in f32.
        acc = None
        for t in range(nterms):
            if u[t] is None:
                continue
            for di in range(5):
                r = rows[t][di]
                if r == 0.0:
                    continue
                contrib = r * u[t][idx(slice(di, di + H), _all)]
                acc = contrib if acc is None else acc + contrib
        if acc is None:
            acc = jnp.zeros(x_ref.shape, jnp.float32)

        o_ref[...] = acc.astype(o_ref.dtype)                    # single store per block

    return kernel


# ---------------------------------------------------------------------------
# Block-size selection (per-chip VMEM budget, (8,128)-tile-padding aware).
# ---------------------------------------------------------------------------
def _cdiv(a, b):
    return -(-a // b)


def _ru(a, b):
    return _cdiv(a, b) * b


def _f32_vmem_bytes(shape):
    """f32 VMEM footprint with (8,128) tile padding on the last two dims."""
    lead = 1
    for d in shape[:-2]:
        lead *= int(d)
    return 4 * lead * _ru(int(shape[-2]), 8) * _ru(int(shape[-1]), 128)


def _block_vmem_bytes(H, W, nb, channels_last):
    """Live VMEM per grid step: double-buffered in/out blocks (2 x 2 x block),
    the pad scratch (single copy) and the live separable temporaries."""
    if channels_last:
        io, pad_s, u, acc = (H, W, nb), (H + 4, W + 4, nb), (H + 4, W, nb), (H, W, nb)
    else:
        io, pad_s, u, acc = (nb, H, W), (nb, H + 4, W + 4), (nb, H + 4, W), (nb, H, W)
    return (4 * _f32_vmem_bytes(io)
            + _f32_vmem_bytes(pad_s)
            + 2 * _f32_vmem_bytes(u)
            + _f32_vmem_bytes(acc))


def _chip_config():
    """(num_tensorcores, per-step VMEM budget).  Conservative if unknown."""
    kind = ""
    try:
        kind = jax.devices()[0].device_kind.lower()
    except Exception:
        pass
    if "v5p" in kind or "v4" in kind:
        return 2, 24 << 20          # megacore: 2 TCs, 128 MiB physical VMEM
    if "v7" in kind or "7x" in kind:
        return 2, 16 << 20          # v7x: 2 TCs, 64 MiB physical / 32 MiB scoped
    if "v6" in kind:
        return 1, 24 << 20          # v6e: 1 TC, 32 MiB scoped default
    if "v5" in kind:
        return 1, 12 << 20          # v5e: 1 TC, 16 MiB scoped default
    return 1, 12 << 20


def _pick_channel_block(NC, H, W, channels_last, n_cores, budget):
    unit = 128 if channels_last else 1      # lane-dense blocks stay 128-aligned
    cap = _ru(NC, unit)
    per_unit = _block_vmem_bytes(H, W, unit, channels_last)
    nb = min(cap, max(unit, (budget // max(per_unit, 1)) * unit))
    # Multi-TensorCore chips: aim for >=4 grid steps (both cores busy, with
    # pipelining slack), but only if per-step blocks stay reasonably large.
    if n_cores > 1 and _cdiv(cap, nb) < 4:
        nb_split = max(unit, _ru(_cdiv(cap, 4), unit))
        if _block_vmem_bytes(H, W, nb_split, channels_last) >= (256 << 10):
            nb = min(nb, nb_split)
    return nb


# ---------------------------------------------------------------------------
# Forward pass: ReflectionPad2d(2) + depthwise 5x5 LoG conv (bias=None).
# ---------------------------------------------------------------------------
def log_layer_forward(x, log_kernel_5x5):
    """x: (N, C, H, W); log_kernel_5x5: (5, 5).  Returns LoGLayer.forward(x)."""
    N, C, H, W = x.shape
    assert H >= 3 and W >= 3, "ReflectionPad2d(2) requires spatial dims >= 3"
    NC = N * C
    rows, cols = _separable_factors(log_kernel_5x5)
    n_cores, budget = _chip_config()

    # Lane-dense layout (channels on the 128-wide lane axis) only pays once
    # there are enough channels to fill the lanes.
    channels_last = NC >= 128
    nb = _pick_channel_block(NC, H, W, channels_last, n_cores, budget)
    NCp = _ru(NC, nb)               # pad channels to the block size (review:
                                    # cheaper than shrinking nb until it divides)

    cp_kwargs = dict(dimension_semantics=("parallel",))
    need = _block_vmem_bytes(H, W, nb, channels_last)
    if need > budget:               # only for degenerate huge-spatial cases
        cp_kwargs["vmem_limit_bytes"] = int(min(need + (2 << 20), 100 << 20))
    params = pltpu.CompilerParams(**cp_kwargs)

    kernel = _make_log_kernel(H, W, rows, cols, channels_last)

    if channels_last:
        # Layout plumbing: channels onto lanes.
        xr = jnp.transpose(x.reshape(NC, H, W), (1, 2, 0))      # (H, W, NC)
        if NCp != NC:
            xr = jnp.pad(xr, ((0, 0), (0, 0), (0, NCp - NC)))
        out = pl.pallas_call(
            kernel,
            out_shape=jax.ShapeDtypeStruct((H, W, NCp), x.dtype),
            grid=(NCp // nb,),
            in_specs=[pl.BlockSpec((H, W, nb), lambda i: (0, 0, i))],
            out_specs=pl.BlockSpec((H, W, nb), lambda i: (0, 0, i)),
            scratch_shapes=[pltpu.VMEM((H + 4, W + 4, nb), jnp.float32)],
            compiler_params=params,
        )(xr)
        out = jnp.transpose(out[:, :, :NC], (2, 0, 1))
        return out.reshape(N, C, H, W)
    else:
        x2 = x.reshape(NC, H, W)
        if NCp != NC:
            x2 = jnp.pad(x2, ((0, NCp - NC), (0, 0), (0, 0)))
        out = pl.pallas_call(
            kernel,
            out_shape=jax.ShapeDtypeStruct((NCp, H, W), x.dtype),
            grid=(NCp // nb,),
            in_specs=[pl.BlockSpec((nb, H, W), lambda i: (i, 0, 0))],
            out_specs=pl.BlockSpec((nb, H, W), lambda i: (i, 0, 0)),
            scratch_shapes=[pltpu.VMEM((nb, H + 4, W + 4), jnp.float32)],
            compiler_params=params,
        )(x2)
        return out[:NC].reshape(N, C, H, W)


# ---------------------------------------------------------------------------
if __name__ == "__main__":
    sigma = 1.0
    k5 = make_log_weights(sigma)                                # (5, 5) float32

    def reference(x):
        n, c, h, w = x.shape
        xp = jnp.pad(x, ((0, 0), (0, 0), (2, 2), (2, 2)), mode="reflect")
        wk = jnp.asarray(np.repeat(k5[None, None], c, axis=0))  # (C, 1, 5, 5)
        return lax.conv_general_dilated(
            xp, wk, window_strides=(1, 1), padding="VALID",
            dimension_numbers=("NCHW", "OIHW", "NCHW"), feature_group_count=c)

    key_small, key_wide = jax.random.split(jax.random.PRNGKey(0))

    # Module-sized input (N=2, C=4, H=W=16): exercises the small-NC path.
    x_small = jax.random.normal(key_small, (2, 4, 16, 16), dtype=jnp.float32)
    out_small = jax.block_until_ready(log_layer_forward(x_small, k5))
    assert out_small.shape == x_small.shape
    assert jnp.allclose(out_small, reference(x_small), atol=1e-4, rtol=1e-4)

    # More channels (N=2, C=128): exercises the lane-dense channels-on-lanes path.
    x_wide = jax.random.normal(key_wide, (2, 128, 16, 16), dtype=jnp.float32)
    out_wide = jax.block_until_ready(log_layer_forward(x_wide, k5))
    assert out_wide.shape == x_wide.shape
    assert jnp.allclose(out_wide, reference(x_wide), atol=1e-4, rtol=1e-4)

    print("KERNEL_OK")
</pallas_src>

<mosaic_0001>
module attributes {stable_mosaic.version = 11 : i64} {
  func.func @kernel(%arg0: i32, %arg1: memref<8x16x16xf32, #tpu.memory_space<vmem>>, %arg2: memref<8x16x16xf32, #tpu.memory_space<vmem>>, %arg3: memref<8x20x20xf32, #tpu.memory_space<vmem>>) attributes {dimension_semantics = [#tpu.dimension_semantics<parallel>], iteration_bounds = array<i64: 1>, scalar_prefetch = 0 : i64, scratch_operands = 1 : i64, tpu.core_type = #tpu.core_type<tc>, window_params = [{transform_indices = @transform_0, window_bounds = array<i64: 8, 16, 16>}, {transform_indices = @transform_1, window_bounds = array<i64: 8, 16, 16>}]} {
    %c0 = arith.constant 0 : index
    %c0_0 = arith.constant 0 : index
    %c0_1 = arith.constant 0 : index
    %0 = vector.load %arg1[%c0, %c0_0, %c0_1] : memref<8x16x16xf32, #tpu.memory_space<vmem>>, vector<8x16x16xf32>
    %c0_2 = arith.constant 0 : index
    %c2 = arith.constant 2 : index
    %c2_3 = arith.constant 2 : index
    %1 = vector.load %arg3[%c0_2, %c2, %c2_3] : memref<8x20x20xf32, #tpu.memory_space<vmem>>, vector<8x16x16xf32>
    tpu.vector_store %arg3[%c0_2, %c2, %c2_3], %0 {strides = array<i32>} : memref<8x20x20xf32, #tpu.memory_space<vmem>>, vector<8x16x16xf32>,
    %c0_4 = arith.constant 0 : index
    %c4 = arith.constant 4 : index
    %c0_5 = arith.constant 0 : index
    %2 = vector.load %arg3[%c0_4, %c4, %c0_5] : memref<8x20x20xf32, #tpu.memory_space<vmem>>, vector<8x1x20xf32>
    %c0_6 = arith.constant 0 : index
    %c0_7 = arith.constant 0 : index
    %c0_8 = arith.constant 0 : index
    %3 = vector.load %arg3[%c0_6, %c0_7, %c0_8] : memref<8x20x20xf32, #tpu.memory_space<vmem>>, vector<8x1x20xf32>
    tpu.vector_store %arg3[%c0_6, %c0_7, %c0_8], %2 {strides = array<i32>} : memref<8x20x20xf32, #tpu.memory_space<vmem>>, vector<8x1x20xf32>,
    %c0_9 = arith.constant 0 : index
    %c3 = arith.constant 3 : index
    %c0_10 = arith.constant 0 : index
    %4 = vector.load %arg3[%c0_9, %c3, %c0_10] : memref<8x20x20xf32, #tpu.memory_space<vmem>>, vector<8x1x20xf32>
    %c0_11 = arith.constant 0 : index
    %c1 = arith.constant 1 : index
    %c0_12 = arith.constant 0 : index
    %5 = vector.load %arg3[%c0_11, %c1, %c0_12] : memref<8x20x20xf32, #tpu.memory_space<vmem>>, vector<8x1x20xf32>
    tpu.vector_store %arg3[%c0_11, %c1, %c0_12], %4 {strides = array<i32>} : memref<8x20x20xf32, #tpu.memory_space<vmem>>, vector<8x1x20xf32>,
    %c0_13 = arith.constant 0 : index
    %c16 = arith.constant 16 : index
    %c0_14 = arith.constant 0 : index
    %6 = vector.load %arg3[%c0_13, %c16, %c0_14] : memref<8x20x20xf32, #tpu.memory_space<vmem>>, vector<8x1x20xf32>
    %c0_15 = arith.constant 0 : index
    %c18 = arith.constant 18 : index
    %c0_16 = arith.constant 0 : index
    %7 = vector.load %arg3[%c0_15, %c18, %c0_16] : memref<8x20x20xf32, #tpu.memory_space<vmem>>, vector<8x1x20xf32>
    tpu.vector_store %arg3[%c0_15, %c18, %c0_16], %6 {strides = array<i32>} : memref<8x20x20xf32, #tpu.memory_space<vmem>>, vector<8x1x20xf32>,
    %c0_17 = arith.constant 0 : index
    %c15 = arith.constant 15 : index
    %c0_18 = arith.constant 0 : index
    %8 = vector.load %arg3[%c0_17, %c15, %c0_18] : memref<8x20x20xf32, #tpu.memory_space<vmem>>, vector<8x1x20xf32>
    %c0_19 = arith.constant 0 : index
    %c19 = arith.constant 19 : index
    %c0_20 = arith.constant 0 : index
    %9 = vector.load %arg3[%c0_19, %c19, %c0_20] : memref<8x20x20xf32, #tpu.memory_space<vmem>>, vector<8x1x20xf32>
    tpu.vector_store %arg3[%c0_19, %c19, %c0_20], %8 {strides = array<i32>} : memref<8x20x20xf32, #tpu.memory_space<vmem>>, vector<8x1x20xf32>,
    %c0_21 = arith.constant 0 : index
    %c0_22 = arith.constant 0 : index
    %c4_23 = arith.constant 4 : index
    %10 = vector.load %arg3[%c0_21, %c0_22, %c4_23] : memref<8x20x20xf32, #tpu.memory_space<vmem>>, vector<8x20x1xf32>
    %c0_24 = arith.constant 0 : index
    %c0_25 = arith.constant 0 : index
    %c0_26 = arith.constant 0 : index
    %11 = vector.load %arg3[%c0_24, %c0_25, %c0_26] : memref<8x20x20xf32, #tpu.memory_space<vmem>>, vector<8x20x1xf32>
    tpu.vector_store %arg3[%c0_24, %c0_25, %c0_26], %10 {strides = array<i32>} : memref<8x20x20xf32, #tpu.memory_space<vmem>>, vector<8x20x1xf32>,
    %c0_27 = arith.constant 0 : index
    %c0_28 = arith.constant 0 : index
    %c3_29 = arith.constant 3 : index
    %12 = vector.load %arg3[%c0_27, %c0_28, %c3_29] : memref<8x20x20xf32, #tpu.memory_space<vmem>>, vector<8x20x1xf32>
    %c0_30 = arith.constant 0 : index
    %c0_31 = arith.constant 0 : index
    %c1_32 = arith.constant 1 : index
    %13 = vector.load %arg3[%c0_30, %c0_31, %c1_32] : memref<8x20x20xf32, #tpu.memory_space<vmem>>, vector<8x20x1xf32>
    tpu.vector_store %arg3[%c0_30, %c0_31, %c1_32], %12 {strides = array<i32>} : memref<8x20x20xf32, #tpu.memory_space<vmem>>, vector<8x20x1xf32>,
    %c0_33 = arith.constant 0 : index
    %c0_34 = arith.constant 0 : index
    %c16_35 = arith.constant 16 : index
    %14 = vector.load %arg3[%c0_33, %c0_34, %c16_35] : memref<8x20x20xf32, #tpu.memory_space<vmem>>, vector<8x20x1xf32>
    %c0_36 = arith.constant 0 : index
    %c0_37 = arith.constant 0 : index
    %c18_38 = arith.constant 18 : index
    %15 = vector.load %arg3[%c0_36, %c0_37, %c18_38] : memref<8x20x20xf32, #tpu.memory_space<vmem>>, vector<8x20x1xf32>
    tpu.vector_store %arg3[%c0_36, %c0_37, %c18_38], %14 {strides = array<i32>} : memref<8x20x20xf32, #tpu.memory_space<vmem>>, vector<8x20x1xf32>,
    %c0_39 = arith.constant 0 : index
    %c0_40 = arith.constant 0 : index
    %c15_41 = arith.constant 15 : index
    %16 = vector.load %arg3[%c0_39, %c0_40, %c15_41] : memref<8x20x20xf32, #tpu.memory_space<vmem>>, vector<8x20x1xf32>
    %c0_42 = arith.constant 0 : index
    %c0_43 = arith.constant 0 : index
    %c19_44 = arith.constant 19 : index
    %17 = vector.load %arg3[%c0_42, %c0_43, %c19_44] : memref<8x20x20xf32, #tpu.memory_space<vmem>>, vector<8x20x1xf32>
    tpu.vector_store %arg3[%c0_42, %c0_43, %c19_44], %16 {strides = array<i32>} : memref<8x20x20xf32, #tpu.memory_space<vmem>>, vector<8x20x1xf32>,
    %c0_45 = arith.constant 0 : index
    %c0_46 = arith.constant 0 : index
    %c0_47 = arith.constant 0 : index
    %18 = vector.load %arg3[%c0_45, %c0_46, %c0_47] : memref<8x20x20xf32, #tpu.memory_space<vmem>>, vector<8x20x16xf32>
    %cst = arith.constant -0.169493794 : f32
    %19 = vector.broadcast %cst : f32 to vector<8x20x16xf32>
    %20 = arith.mulf %19, %18 : vector<8x20x16xf32>
    %cst_48 = arith.constant 0.526608229 : f32
    %21 = vector.broadcast %cst_48 : f32 to vector<8x20x16xf32>
    %22 = arith.mulf %21, %18 : vector<8x20x16xf32>
    %cst_49 = arith.constant -0.440403938 : f32
    %23 = vector.broadcast %cst_49 : f32 to vector<8x20x16xf32>
    %24 = arith.mulf %23, %18 : vector<8x20x16xf32>
    %c0_50 = arith.constant 0 : index
    %c0_51 = arith.constant 0 : index
    %c1_52 = arith.constant 1 : index
    %25 = vector.load %arg3[%c0_50, %c0_51, %c1_52] : memref<8x20x20xf32, #tpu.memory_space<vmem>>, vector<8x20x16xf32>
    %cst_53 = arith.constant 0.25843972 : f32
    %26 = vector.broadcast %cst_53 : f32 to vector<8x20x16xf32>
    %27 = arith.mulf %26, %25 : vector<8x20x16xf32>
    %28 = arith.addf %20, %27 : vector<8x20x16xf32>
    %cst_54 = arith.constant 0.469203055 : f32
    %29 = vector.broadcast %cst_54 : f32 to vector<8x20x16xf32>
    %30 = arith.mulf %29, %25 : vector<8x20x16xf32>
    %31 = arith.addf %22, %30 : vector<8x20x16xf32>
    %cst_55 = arith.constant 0.461581439 : f32
    %32 = vector.broadcast %cst_55 : f32 to vector<8x20x16xf32>
    %33 = arith.mulf %32, %25 : vector<8x20x16xf32>
    %34 = arith.addf %24, %33 : vector<8x20x16xf32>
    %c0_56 = arith.constant 0 : index
    %c0_57 = arith.constant 0 : index
    %c2_58 = arith.constant 2 : index
    %35 = vector.load %arg3[%c0_56, %c0_57, %c2_58] : memref<8x20x20xf32, #tpu.memory_space<vmem>>, vector<8x20x16xf32>
    %cst_59 = arith.constant 0.899422884 : f32
    %36 = vector.broadcast %cst_59 : f32 to vector<8x20x16xf32>
    %37 = arith.mulf %36, %35 : vector<8x20x16xf32>
    %38 = arith.addf %28, %37 : vector<8x20x16xf32>
    %cst_60 = arith.constant -0.0711653382 : f32
    %39 = vector.broadcast %cst_60 : f32 to vector<8x20x16xf32>
    %40 = arith.mulf %39, %35 : vector<8x20x16xf32>
    %41 = arith.addf %31, %40 : vector<8x20x16xf32>
    %cst_61 = arith.constant -0.431246966 : f32
    %42 = vector.broadcast %cst_61 : f32 to vector<8x20x16xf32>
    %43 = arith.mulf %42, %35 : vector<8x20x16xf32>
    %44 = arith.addf %34, %43 : vector<8x20x16xf32>
    %c0_62 = arith.constant 0 : index
    %c0_63 = arith.constant 0 : index
    %c3_64 = arith.constant 3 : index
    %45 = vector.load %arg3[%c0_62, %c0_63, %c3_64] : memref<8x20x20xf32, #tpu.memory_space<vmem>>, vector<8x20x16xf32>
    %cst_65 = arith.constant 0.25843972 : f32
    %46 = vector.broadcast %cst_65 : f32 to vector<8x20x16xf32>
    %47 = arith.mulf %46, %45 : vector<8x20x16xf32>
    %48 = arith.addf %38, %47 : vector<8x20x16xf32>
    %cst_66 = arith.constant 0.469203055 : f32
    %49 = vector.broadcast %cst_66 : f32 to vector<8x20x16xf32>
    %50 = arith.mulf %49, %45 : vector<8x20x16xf32>
    %51 = arith.addf %41, %50 : vector<8x20x16xf32>
    %cst_67 = arith.constant 0.461581409 : f32
    %52 = vector.broadcast %cst_67 : f32 to vector<8x20x16xf32>
    %53 = arith.mulf %52, %45 : vector<8x20x16xf32>
    %54 = arith.addf %44, %53 : vector<8x20x16xf32>
    %c0_68 = arith.constant 0 : index
    %c0_69 = arith.constant 0 : index
    %c4_70 = arith.constant 4 : index
    %55 = vector.load %arg3[%c0_68, %c0_69, %c4_70] : memref<8x20x20xf32, #tpu.memory_space<vmem>>, vector<8x20x16xf32>
    %cst_71 = arith.constant -0.169493794 : f32
    %56 = vector.broadcast %cst_71 : f32 to vector<8x20x16xf32>
    %57 = arith.mulf %56, %55 : vector<8x20x16xf32>
    %58 = arith.addf %48, %57 : vector<8x20x16xf32>
    %cst_72 = arith.constant 0.526608229 : f32
    %59 = vector.broadcast %cst_72 : f32 to vector<8x20x16xf32>
    %60 = arith.mulf %59, %55 : vector<8x20x16xf32>
    %61 = arith.addf %51, %60 : vector<8x20x16xf32>
    %cst_73 = arith.constant -0.440403908 : f32
    %62 = vector.broadcast %cst_73 : f32 to vector<8x20x16xf32>
    %63 = arith.mulf %62, %55 : vector<8x20x16xf32>
    %64 = arith.addf %54, %63 : vector<8x20x16xf32>
    %65 = vector.extract_strided_slice %58 {offsets = [0, 0, 0], sizes = [8, 16, 16], strides = [1, 1, 1]} : vector<8x20x16xf32> to vector<8x16x16xf32>
    %cst_74 = arith.constant 0.0668243617 : f32
    %66 = vector.broadcast %cst_74 : f32 to vector<8x16x16xf32>
    %67 = arith.mulf %66, %65 : vector<8x16x16xf32>
    %68 = vector.extract_strided_slice %58 {offsets = [0, 1, 0], sizes = [8, 16, 16], strides = [1, 1, 1]} : vector<8x20x16xf32> to vector<8x16x16xf32>
    %cst_75 = arith.constant -0.101892039 : f32
    %69 = vector.broadcast %cst_75 : f32 to vector<8x16x16xf32>
    %70 = arith.mulf %69, %68 : vector<8x16x16xf32>
    %71 = arith.addf %67, %70 : vector<8x16x16xf32>
    %72 = vector.extract_strided_slice %58 {offsets = [0, 2, 0], sizes = [8, 16, 16], strides = [1, 1, 1]} : vector<8x20x16xf32> to vector<8x16x16xf32>
    %cst_76 = arith.constant -0.354605079 : f32
    %73 = vector.broadcast %cst_76 : f32 to vector<8x16x16xf32>
    %74 = arith.mulf %73, %72 : vector<8x16x16xf32>
    %75 = arith.addf %71, %74 : vector<8x16x16xf32>
    %76 = vector.extract_strided_slice %58 {offsets = [0, 3, 0], sizes = [8, 16, 16], strides = [1, 1, 1]} : vector<8x20x16xf32> to vector<8x16x16xf32>
    %cst_77 = arith.constant -0.101892039 : f32
    %77 = vector.broadcast %cst_77 : f32 to vector<8x16x16xf32>
    %78 = arith.mulf %77, %76 : vector<8x16x16xf32>
    %79 = arith.addf %75, %78 : vector<8x16x16xf32>
    %80 = vector.extract_strided_slice %58 {offsets = [0, 4, 0], sizes = [8, 16, 16], strides = [1, 1, 1]} : vector<8x20x16xf32> to vector<8x16x16xf32>
    %cst_78 = arith.constant 0.0668243617 : f32
    %81 = vector.broadcast %cst_78 : f32 to vector<8x16x16xf32>
    %82 = arith.mulf %81, %80 : vector<8x16x16xf32>
    %83 = arith.addf %79, %82 : vector<8x16x16xf32>
    %84 = vector.extract_strided_slice %61 {offsets = [0, 0, 0], sizes = [8, 16, 16], strides = [1, 1, 1]} : vector<8x20x16xf32> to vector<8x16x16xf32>
    %cst_79 = arith.constant 0.0653142333 : f32
    %85 = vector.broadcast %cst_79 : f32 to vector<8x16x16xf32>
    %86 = arith.mulf %85, %84 : vector<8x16x16xf32>
    %87 = arith.addf %83, %86 : vector<8x16x16xf32>
    %88 = vector.extract_strided_slice %61 {offsets = [0, 1, 0], sizes = [8, 16, 16], strides = [1, 1, 1]} : vector<8x20x16xf32> to vector<8x16x16xf32>
    %cst_80 = arith.constant 0.0581943803 : f32
    %89 = vector.broadcast %cst_80 : f32 to vector<8x16x16xf32>
    %90 = arith.mulf %89, %88 : vector<8x16x16xf32>
    %91 = arith.addf %87, %90 : vector<8x16x16xf32>
    %92 = vector.extract_strided_slice %61 {offsets = [0, 2, 0], sizes = [8, 16, 16], strides = [1, 1, 1]} : vector<8x20x16xf32> to vector<8x16x16xf32>
    %cst_81 = arith.constant -0.00882650446 : f32
    %93 = vector.broadcast %cst_81 : f32 to vector<8x16x16xf32>
    %94 = arith.mulf %93, %92 : vector<8x16x16xf32>
    %95 = arith.addf %91, %94 : vector<8x16x16xf32>
    %96 = vector.extract_strided_slice %61 {offsets = [0, 3, 0], sizes = [8, 16, 16], strides = [1, 1, 1]} : vector<8x20x16xf32> to vector<8x16x16xf32>
    %cst_82 = arith.constant 0.0581943803 : f32
    %97 = vector.broadcast %cst_82 : f32 to vector<8x16x16xf32>
    %98 = arith.mulf %97, %96 : vector<8x16x16xf32>
    %99 = arith.addf %95, %98 : vector<8x16x16xf32>
    %100 = vector.extract_strided_slice %61 {offsets = [0, 4, 0], sizes = [8, 16, 16], strides = [1, 1, 1]} : vector<8x20x16xf32> to vector<8x16x16xf32>
    %cst_83 = arith.constant 0.0653142333 : f32
    %101 = vector.broadcast %cst_83 : f32 to vector<8x16x16xf32>
    %102 = arith.mulf %101, %100 : vector<8x16x16xf32>
    %103 = arith.addf %99, %102 : vector<8x16x16xf32>
    %104 = vector.extract_strided_slice %64 {offsets = [0, 0, 0], sizes = [8, 16, 16], strides = [1, 1, 1]} : vector<8x20x16xf32> to vector<8x16x16xf32>
    %cst_84 = arith.constant -4.1256995E-10 : f32
    %105 = vector.broadcast %cst_84 : f32 to vector<8x16x16xf32>
    %106 = arith.mulf %105, %104 : vector<8x16x16xf32>
    %107 = arith.addf %103, %106 : vector<8x16x16xf32>
    %108 = vector.extract_strided_slice %64 {offsets = [0, 1, 0], sizes = [8, 16, 16], strides = [1, 1, 1]} : vector<8x20x16xf32> to vector<8x16x16xf32>
    %cst_85 = arith.constant 4.32409025E-10 : f32
    %109 = vector.broadcast %cst_85 : f32 to vector<8x16x16xf32>
    %110 = arith.mulf %109, %108 : vector<8x16x16xf32>
    %111 = arith.addf %107, %110 : vector<8x16x16xf32>
    %112 = vector.extract_strided_slice %64 {offsets = [0, 2, 0], sizes = [8, 16, 16], strides = [1, 1, 1]} : vector<8x20x16xf32> to vector<8x16x16xf32>
    %cst_86 = arith.constant -4.03991729E-10 : f32
    %113 = vector.broadcast %cst_86 : f32 to vector<8x16x16xf32>
    %114 = arith.mulf %113, %112 : vector<8x16x16xf32>
    %115 = arith.addf %111, %114 : vector<8x16x16xf32>
    %116 = vector.extract_strided_slice %64 {offsets = [0, 3, 0], sizes = [8, 16, 16], strides = [1, 1, 1]} : vector<8x20x16xf32> to vector<8x16x16xf32>
    %cst_87 = arith.constant 4.324090e-10 : f32
    %117 = vector.broadcast %cst_87 : f32 to vector<8x16x16xf32>
    %118 = arith.mulf %117, %116 : vector<8x16x16xf32>
    %119 = arith.addf %115, %118 : vector<8x16x16xf32>
    %120 = vector.extract_strided_slice %64 {offsets = [0, 4, 0], sizes = [8, 16, 16], strides = [1, 1, 1]} : vector<8x20x16xf32> to vector<8x16x16xf32>
    %cst_88 = arith.constant -4.12569978E-10 : f32
    %121 = vector.broadcast %cst_88 : f32 to vector<8x16x16xf32>
    %122 = arith.mulf %121, %120 : vector<8x16x16xf32>
    %123 = arith.addf %119, %122 : vector<8x16x16xf32>
    %c0_89 = arith.constant 0 : index
    %c0_90 = arith.constant 0 : index
    %c0_91 = arith.constant 0 : index
    %124 = vector.load %arg2[%c0_89, %c0_90, %c0_91] : memref<8x16x16xf32, #tpu.memory_space<vmem>>, vector<8x16x16xf32>
    tpu.vector_store %arg2[%c0_89, %c0_90, %c0_91], %123 {strides = array<i32>} : memref<8x16x16xf32, #tpu.memory_space<vmem>>, vector<8x16x16xf32>,
    return
  }
  func.func @transform_0(%arg0: i32) -> (i32, i32, i32) {
    %c0_i32 = arith.constant 0 : i32
    %c0_i32_0 = arith.constant 0 : i32
    %c0_i32_1 = arith.constant 0 : i32
    return %arg0, %c0_i32, %c0_i32_0 : i32, i32, i32
  }
  func.func @transform_1(%arg0: i32) -> (i32, i32, i32) {
    %c0_i32 = arith.constant 0 : i32
    %c0_i32_0 = arith.constant 0 : i32
    %c0_i32_1 = arith.constant 0 : i32
    return %arg0, %c0_i32, %c0_i32_0 : i32, i32, i32
  }
}

</mosaic_0001>

<llo_original>
// kernel: tpu_custom_call.1
$region0: #{tpu_custom_call.1}
  #allocation0 [shape = 'u32[]', space=smem, size = 0x4, offset = 0x4, fixed_abs, tag = 'smem constant byte address 0x4 - core index']
  #allocation1 [shape = 'u32[144,128]{1,0:T(1,128)}', space=vmem, size = 0x12000, scoped, tag = 'internal scratch']
  #allocation2 [shape = 'f32[8,20,20]{2,1,0:T(8,128)}', space=vmem, size = 0x18000, scoped, tag = 'scratch operand']
  %s0 = inlined_call_operand.hbm [shape: f32[8,16,16], index: 0, kind: input, shape index: {}]
  %s1 = inlined_call_operand.hbm [shape: f32[8,16,16], index: 1, kind: output, shape index: {}]
  %s2 = sld [smem:[#allocation0]]
  $region18: #{tpu_custom_call.1} parent=0
    _
  %s4 = ssub.s32 1, %s2
  %s5 = scalar_select 0, %s4, %s2
  $region1: #{tpu_custom_call.1} parent=0
    #allocation3 [shape = 'u8[65536]{0}', space=vmem, size = 0x10000, scoped, tag = 'input window, operand 0, single buffered']
    #allocation4 [shape = 's32[1]{0}', space=sflag, size = 0x4, scoped, tag = 'scoped memory for tpu_custom_call.1']
    #allocation5 [shape = 's32[1]{0}', space=sflag, size = 0x4, scoped, tag = 'scoped memory for tpu_custom_call.1']
    #allocation6 [shape = 'u8[65536]{0}', space=vmem, size = 0x10000, scoped, tag = 'output window, operand 0, single buffered']
    %6 = vsyncpa [#allocation4], 0
    %7 = vsyncpa [#allocation5], 0
    // Predicated region
    $region2: #{tpu_custom_call.1} parent=1 // pred_check
      _
    $region3: #{tpu_custom_call.1} parent=1 // pred_check_branch
      %9 = sbr.rel (0) target = $region5
    $region4: #{tpu_custom_call.1} parent=1 // pred_region
      %s11 = ssub.s32 2048, 2048
      %12 = vsyncadd [#allocation4], %s11
      %s13 = sshll.u32 [#allocation3], 4
      %s14 = int_to_ptr.vmem [resolvable:$true] %s13
      %19 = dma.hbm_to_vmem [thread:$0]  %s0, 2048, %s14, [#allocation4], 128, 128, 8
    $region5: #{tpu_custom_call.1} parent=1 // pred_fallthru
      _
    // Predicated region
    $region6: #{tpu_custom_call.1} parent=1 // pred_check
      _
    $region7: #{tpu_custom_call.1} parent=1 // pred_check_branch
      %21 = sbr.rel (0) target = $region9
    $region8: #{tpu_custom_call.1} parent=1 // pred_region
      %22 = dma.done [#allocation4], 2048
    $region9: #{tpu_custom_call.1} parent=1 // pred_fallthru
      _
    %v23 = vld [vmem:[#allocation3] sm:$0xff]
    %v24 = vld [vmem:[#allocation3 + $0x8] sm:$0xff]
    %v25 = vld [vmem:[#allocation3 + $0x10] sm:$0xff]
    %v26 = vld [vmem:[#allocation3 + $0x18] sm:$0xff]
    %v27 = vld [vmem:[#allocation3 + $0x20] sm:$0xff]
    %v28 = vld [vmem:[#allocation3 + $0x28] sm:$0xff]
    %v29 = vld [vmem:[#allocation3 + $0x30] sm:$0xff]
    %v30 = vld [vmem:[#allocation3 + $0x38] sm:$0xff]
    %v31 = vld [vmem:[#allocation3 + $0x40] sm:$0xff]
    %v32 = vld [vmem:[#allocation3 + $0x48] sm:$0xff]
    %v33 = vld [vmem:[#allocation3 + $0x50] sm:$0xff]
    %v34 = vld [vmem:[#allocation3 + $0x58] sm:$0xff]
    %v35 = vld [vmem:[#allocation3 + $0x60] sm:$0xff]
    %v36 = vld [vmem:[#allocation3 + $0x68] sm:$0xff]
    %v37 = vld [vmem:[#allocation3 + $0x70] sm:$0xff]
    %v38 = vld [vmem:[#allocation3 + $0x78] sm:$0xff]
    %55 = vrot.lane.b32.xlu0 %v23, 2
    %v56 = vpop.permute.xlu0 %55
    %57 = vrot.lane.b32.xlu0 %v24, 2
    %v58 = vpop.permute.xlu0 %57
    %59 = vrot.lane.b32.xlu0 %v25, 2
    %v60 = vpop.permute.xlu0 %59
    %61 = vrot.lane.b32.xlu0 %v26, 2
    %v62 = vpop.permute.xlu0 %61
    %63 = vrot.lane.b32.xlu0 %v27, 2
    %v64 = vpop.permute.xlu0 %63
    %65 = vrot.lane.b32.xlu0 %v28, 2
    %v66 = vpop.permute.xlu0 %65
    %67 = vrot.lane.b32.xlu0 %v29, 2
    %v68 = vpop.permute.xlu0 %67
    %69 = vrot.lane.b32.xlu0 %v30, 2
    %v70 = vpop.permute.xlu0 %69
    %71 = vrot.lane.b32.xlu0 %v31, 2
    %v72 = vpop.permute.xlu0 %71
    %73 = vrot.lane.b32.xlu0 %v32, 2
    %v74 = vpop.permute.xlu0 %73
    %75 = vrot.lane.b32.xlu0 %v33, 2
    %v76 = vpop.permute.xlu0 %75
    %77 = vrot.lane.b32.xlu0 %v34, 2
    %v78 = vpop.permute.xlu0 %77
    %79 = vrot.lane.b32.xlu0 %v35, 2
    %v80 = vpop.permute.xlu0 %79
    %81 = vrot.lane.b32.xlu0 %v36, 2
    %v82 = vpop.permute.xlu0 %81
    %83 = vrot.lane.b32.xlu0 %v37, 2
    %v84 = vpop.permute.xlu0 %83
    %85 = vrot.lane.b32.xlu0 %v38, 2
    %v86 = vpop.permute.xlu0 %85
    %vm103 = vcmask 146448
    %104 = vst.msk [vmem:[#allocation2 + $0x2] sm:$0xff] %vm103, %v56
    %105 = vst.msk [vmem:[#allocation2 + $0xa] sm:$0xff] %vm103, %v58
    %106 = vst.msk [vmem:[#allocation2 + $0x1a] sm:$0xff] %vm103, %v60
    %107 = vst.msk [vmem:[#allocation2 + $0x22] sm:$0xff] %vm103, %v62
    %108 = vst.msk [vmem:[#allocation2 + $0x32] sm:$0xff] %vm103, %v64
    %109 = vst.msk [vmem:[#allocation2 + $0x3a] sm:$0xff] %vm103, %v66
    %110 = vst.msk [vmem:[#allocation2 + $0x4a] sm:$0xff] %vm103, %v68
    %111 = vst.msk [vmem:[#allocation2 + $0x52] sm:$0xff] %vm103, %v70
    %112 = vst.msk [vmem:[#allocation2 + $0x62] sm:$0xff] %vm103, %v72
    %113 = vst.msk [vmem:[#allocation2 + $0x6a] sm:$0xff] %vm103, %v74
    %114 = vst.msk [vmem:[#allocation2 + $0x7a] sm:$0xff] %vm103, %v76
    %115 = vst.msk [vmem:[#allocation2 + $0x82] sm:$0xff] %vm103, %v78
    %116 = vst.msk [vmem:[#allocation2 + $0x92] sm:$0xff] %vm103, %v80
    %117 = vst.msk [vmem:[#allocation2 + $0x9a] sm:$0xff] %vm103, %v82
    %118 = vst.msk [vmem:[#allocation2 + $0xaa] sm:$0xff] %vm103, %v84
    %119 = vst.msk [vmem:[#allocation2 + $0xb2] sm:$0xff] %vm103, %v86
    %v120 = vld [vmem:[#allocation2 + $0x4] sm:$0x1]
    %v121 = vld [vmem:[#allocation2 + $0x1c] sm:$0x1]
    %v122 = vld [vmem:[#allocation2 + $0x34] sm:$0x1]
    %v123 = vld [vmem:[#allocation2 + $0x4c] sm:$0x1]
    %v124 = vld [vmem:[#allocation2 + $0x64] sm:$0x1]
    %v125 = vld [vmem:[#allocation2 + $0x7c] sm:$0x1]
    %v126 = vld [vmem:[#allocation2 + $0x94] sm:$0x1]
    %v127 = vld [vmem:[#allocation2 + $0xac] sm:$0x1]
    %vm128 = vcmask 155648
    %129 = vst.msk [vmem:[#allocation2] sm:$0x1] %vm128, %v120
    %130 = vst.msk [vmem:[#allocation2 + $0x18] sm:$0x1] %vm128, %v121
    %131 = vst.msk [vmem:[#allocation2 + $0x30] sm:$0x1] %vm128, %v122
    %132 = vst.msk [vmem:[#allocation2 + $0x48] sm:$0x1] %vm128, %v123
    %133 = vst.msk [vmem:[#allocation2 + $0x60] sm:$0x1] %vm128, %v124
    %134 = vst.msk [vmem:[#allocation2 + $0x78] sm:$0x1] %vm128, %v125
    %135 = vst.msk [vmem:[#allocation2 + $0x90] sm:$0x1] %vm128, %v126
    %136 = vst.msk [vmem:[#allocation2 + $0xa8] sm:$0x1] %vm128, %v127
    %v137 = vld [vmem:[#allocation2 + $0x3] sm:$0x1]
    %v138 = vld [vmem:[#allocation2 + $0x1b] sm:$0x1]
    %v139 = vld [vmem:[#allocation2 + $0x33] sm:$0x1]
    %v140 = vld [vmem:[#allocation2 + $0x4b] sm:$0x1]
    %v141 = vld [vmem:[#allocation2 + $0x63] sm:$0x1]
    %v142 = vld [vmem:[#allocation2 + $0x7b] sm:$0x1]
    %v143 = vld [vmem:[#allocation2 + $0x93] sm:$0x1]
    %v144 = vld [vmem:[#allocation2 + $0xab] sm:$0x1]
    %145 = vst.msk [vmem:[#allocation2 + $0x1] sm:$0x1] %vm128, %v137
    %146 = vst.msk [vmem:[#allocation2 + $0x19] sm:$0x1] %vm128, %v138
    %147 = vst.msk [vmem:[#allocation2 + $0x31] sm:$0x1] %vm128, %v139
    %148 = vst.msk [vmem:[#allocation2 + $0x49] sm:$0x1] %vm128, %v140
    %149 = vst.msk [vmem:[#allocation2 + $0x61] sm:$0x1] %vm128, %v141
    %150 = vst.msk [vmem:[#allocation2 + $0x79] sm:$0x1] %vm128, %v142
    %151 = vst.msk [vmem:[#allocation2 + $0x91] sm:$0x1] %vm128, %v143
    %152 = vst.msk [vmem:[#allocation2 + $0xa9] sm:$0x1] %vm128, %v144
    %v153 = vld [vmem:[#allocation2 + $0x10] sm:$0x1]
    %v154 = vld [vmem:[#allocation2 + $0x28] sm:$0x1]
    %v155 = vld [vmem:[#allocation2 + $0x40] sm:$0x1]
    %v156 = vld [vmem:[#allocation2 + $0x58] sm:$0x1]
    %v157 = vld [vmem:[#allocation2 + $0x70] sm:$0x1]
    %v158 = vld [vmem:[#allocation2 + $0x88] sm:$0x1]
    %v159 = vld [vmem:[#allocation2 + $0xa0] sm:$0x1]
    %v160 = vld [vmem:[#allocation2 + $0xb8] sm:$0x1]
    %161 = vst.msk [vmem:[#allocation2 + $0x12] sm:$0x1] %vm128, %v153
    %162 = vst.msk [vmem:[#allocation2 + $0x2a] sm:$0x1] %vm128, %v154
    %163 = vst.msk [vmem:[#allocation2 + $0x42] sm:$0x1] %vm128, %v155
    %164 = vst.msk [vmem:[#allocation2 + $0x5a] sm:$0x1] %vm128, %v156
    %165 = vst.msk [vmem:[#allocation2 + $0x72] sm:$0x1] %vm128, %v157
    %166 = vst.msk [vmem:[#allocation2 + $0x8a] sm:$0x1] %vm128, %v158
    %167 = vst.msk [vmem:[#allocation2 + $0xa2] sm:$0x1] %vm128, %v159
    %168 = vst.msk [vmem:[#allocation2 + $0xba] sm:$0x1] %vm128, %v160
    %v169 = vld [vmem:[#allocation2 + $0xf] sm:$0x1]
    %v170 = vld [vmem:[#allocation2 + $0x27] sm:$0x1]
    %v171 = vld [vmem:[#allocation2 + $0x3f] sm:$0x1]
    %v172 = vld [vmem:[#allocation2 + $0x57] sm:$0x1]
    %v173 = vld [vmem:[#allocation2 + $0x6f] sm:$0x1]
    %v174 = vld [vmem:[#allocation2 + $0x87] sm:$0x1]
    %v175 = vld [vmem:[#allocation2 + $0x9f] sm:$0x1]
    %v176 = vld [vmem:[#allocation2 + $0xb7] sm:$0x1]
    %177 = vst.msk [vmem:[#allocation2 + $0x13] sm:$0x1] %vm128, %v169
    %178 = vst.msk [vmem:[#allocation2 + $0x2b] sm:$0x1] %vm128, %v170
    %179 = vst.msk [vmem:[#allocation2 + $0x43] sm:$0x1] %vm128, %v171
    %180 = vst.msk [vmem:[#allocation2 + $0x5b] sm:$0x1] %vm128, %v172
    %181 = vst.msk [vmem:[#allocation2 + $0x73] sm:$0x1] %vm128, %v173
    %182 = vst.msk [vmem:[#allocation2 + $0x8b] sm:$0x1] %vm128, %v174
    %183 = vst.msk [vmem:[#allocation2 + $0xa3] sm:$0x1] %vm128, %v175
    %184 = vst.msk [vmem:[#allocation2 + $0xbb] sm:$0x1] %vm128, %v176
    %v185 = vld [vmem:[#allocation2] sm:$0xff]
    %v186 = vld [vmem:[#allocation2 + $0x8] sm:$0xff]
    %v187 = vld [vmem:[#allocation2 + $0x10] sm:$0xf]
    %v188 = vld [vmem:[#allocation2 + $0x18] sm:$0xff]
    %v189 = vld [vmem:[#allocation2 + $0x20] sm:$0xff]
    %v190 = vld [vmem:[#allocation2 + $0x28] sm:$0xf]
    %v191 = vld [vmem:[#allocation2 + $0x30] sm:$0xff]
    %v192 = vld [vmem:[#allocation2 + $0x38] sm:$0xff]
    %v193 = vld [vmem:[#allocation2 + $0x40] sm:$0xf]
    %v194 = vld [vmem:[#allocation2 + $0x48] sm:$0xff]
    %v195 = vld [vmem:[#allocation2 + $0x50] sm:$0xff]
    %v196 = vld [vmem:[#allocation2 + $0x58] sm:$0xf]
    %v197 = vld [vmem:[#allocation2 + $0x60] sm:$0xff]
    %v198 = vld [vmem:[#allocation2 + $0x68] sm:$0xff]
    %v199 = vld [vmem:[#allocation2 + $0x70] sm:$0xf]
    %v200 = vld [vmem:[#allocation2 + $0x78] sm:$0xff]
    %v201 = vld [vmem:[#allocation2 + $0x80] sm:$0xff]
    %v202 = vld [vmem:[#allocation2 + $0x88] sm:$0xf]
    %v203 = vld [vmem:[#allocation2 + $0x90] sm:$0xff]
    %v204 = vld [vmem:[#allocation2 + $0x98] sm:$0xff]
    %v205 = vld [vmem:[#allocation2 + $0xa0] sm:$0xf]
    %v206 = vld [vmem:[#allocation2 + $0xa8] sm:$0xff]
    %v207 = vld [vmem:[#allocation2 + $0xb0] sm:$0xff]
    %v208 = vld [vmem:[#allocation2 + $0xb8] sm:$0xf]
    %233 = vrot.lane.b32.xlu0 %v185, 124
    %v234 = vpop.permute.xlu0 %233
    %235 = vrot.lane.b32.xlu0 %v186, 124
    %v236 = vpop.permute.xlu0 %235
    %237 = vrot.lane.b32.xlu0 %v187, 124
    %v238 = vpop.permute.xlu0 %237
    %239 = vrot.lane.b32.xlu0 %v188, 124
    %v240 = vpop.permute.xlu0 %239
    %241 = vrot.lane.b32.xlu0 %v189, 124
    %v242 = vpop.permute.xlu0 %241
    %243 = vrot.lane.b32.xlu0 %v190, 124
    %v244 = vpop.permute.xlu0 %243
    %245 = vrot.lane.b32.xlu0 %v191, 124
    %v246 = vpop.permute.xlu0 %245
    %247 = vrot.lane.b32.xlu0 %v192, 124
    %v248 = vpop.permute.xlu0 %247
    %249 = vrot.lane.b32.xlu0 %v193, 124
    %v250 = vpop.permute.xlu0 %249
    %251 = vrot.lane.b32.xlu0 %v194, 124
    %v252 = vpop.permute.xlu0 %251
    %253 = vrot.lane.b32.xlu0 %v195, 124
    %v254 = vpop.permute.xlu0 %253
    %255 = vrot.lane.b32.xlu0 %v196, 124
    %v256 = vpop.permute.xlu0 %255
    %257 = vrot.lane.b32.xlu0 %v197, 124
    %v258 = vpop.permute.xlu0 %257
    %259 = vrot.lane.b32.xlu0 %v198, 124
    %v260 = vpop.permute.xlu0 %259
    %261 = vrot.lane.b32.xlu0 %v199, 124
    %v262 = vpop.permute.xlu0 %261
    %263 = vrot.lane.b32.xlu0 %v200, 124
    %v264 = vpop.permute.xlu0 %263
    %265 = vrot.lane.b32.xlu0 %v201, 124
    %v266 = vpop.permute.xlu0 %265
    %267 = vrot.lane.b32.xlu0 %v202, 124
    %v268 = vpop.permute.xlu0 %267
    %269 = vrot.lane.b32.xlu0 %v203, 124
    %v270 = vpop.permute.xlu0 %269
    %271 = vrot.lane.b32.xlu0 %v204, 124
    %v272 = vpop.permute.xlu0 %271
    %273 = vrot.lane.b32.xlu0 %v205, 124
    %v274 = vpop.permute.xlu0 %273
    %275 = vrot.lane.b32.xlu0 %v206, 124
    %v276 = vpop.permute.xlu0 %275
    %277 = vrot.lane.b32.xlu0 %v207, 124
    %v278 = vpop.permute.xlu0 %277
    %279 = vrot.lane.b32.xlu0 %v208, 124
    %v280 = vpop.permute.xlu0 %279
    %vm305 = vcmask 7168
    %306 = vst.msk [vmem:[#allocation2] sm:$0xff] %vm305, %v234
    %307 = vst.msk [vmem:[#allocation2 + $0x8] sm:$0xff] %vm305, %v236
    %vm308 = vcmask 3072
    %309 = vst.msk [vmem:[#allocation2 + $0x10] sm:$0xf] %vm308, %v238
    %310 = vst.msk [vmem:[#allocation2 + $0x18] sm:$0xff] %vm305, %v240
    %311 = vst.msk [vmem:[#allocation2 + $0x20] sm:$0xff] %vm305, %v242
    %312 = vst.msk [vmem:[#allocation2 + $0x28] sm:$0xf] %vm308, %v244
    %313 = vst.msk [vmem:[#allocation2 + $0x30] sm:$0xff] %vm305, %v246
    %314 = vst.msk [vmem:[#allocation2 + $0x38] sm:$0xff] %vm305, %v248
    %315 = vst.msk [vmem:[#allocation2 + $0x40] sm:$0xf] %vm308, %v250
    %316 = vst.msk [vmem:[#allocation2 + $0x48] sm:$0xff] %vm305, %v252
    %317 = vst.msk [vmem:[#allocation2 + $0x50] sm:$0xff] %vm305, %v254
    %318 = vst.msk [vmem:[#allocation2 + $0x58] sm:$0xf] %vm308, %v256
    %319 = vst.msk [vmem:[#allocation2 + $0x60] sm:$0xff] %vm305, %v258
    %320 = vst.msk [vmem:[#allocation2 + $0x68] sm:$0xff] %vm305, %v260
    %321 = vst.msk [vmem:[#allocation2 + $0x70] sm:$0xf] %vm308, %v262
    %322 = vst.msk [vmem:[#allocation2 + $0x78] sm:$0xff] %vm305, %v264
    %323 = vst.msk [vmem:[#allocation2 + $0x80] sm:$0xff] %vm305, %v266
    %324 = vst.msk [vmem:[#allocation2 + $0x88] sm:$0xf] %vm308, %v268
    %325 = vst.msk [vmem:[#allocation2 + $0x90] sm:$0xff] %vm305, %v270
    %326 = vst.msk [vmem:[#allocation2 + $0x98] sm:$0xff] %vm305, %v272
    %327 = vst.msk [vmem:[#allocation2 + $0xa0] sm:$0xf] %vm308, %v274
    %328 = vst.msk [vmem:[#allocation2 + $0xa8] sm:$0xff] %vm305, %v276
    %329 = vst.msk [vmem:[#allocation2 + $0xb0] sm:$0xff] %vm305, %v278
    %330 = vst.msk [vmem:[#allocation2 + $0xb8] sm:$0xf] %vm308, %v280
    %v331 = vld [vmem:[#allocation2] sm:$0xff]
    %v332 = vld [vmem:[#allocation2 + $0x8] sm:$0xff]
    %v333 = vld [vmem:[#allocation2 + $0x10] sm:$0xf]
    %v334 = vld [vmem:[#allocation2 + $0x18] sm:$0xff]
    %v335 = vld [vmem:[#allocation2 + $0x20] sm:$0xff]
    %v336 = vld [vmem:[#allocation2 + $0x28] sm:$0xf]
    %v337 = vld [vmem:[#allocation2 + $0x30] sm:$0xff]
    %v338 = vld [vmem:[#allocation2 + $0x38] sm:$0xff]
    %v339 = vld [vmem:[#allocation2 + $0x40] sm:$0xf]
    %v340 = vld [vmem:[#allocation2 + $0x48] sm:$0xff]
    %v341 = vld [vmem:[#allocation2 + $0x50] sm:$0xff]
    %v342 = vld [vmem:[#allocation2 + $0x58] sm:$0xf]
    %v343 = vld [vmem:[#allocation2 + $0x60] sm:$0xff]
    %v344 = vld [vmem:[#allocation2 + $0x68] sm:$0xff]
    %v345 = vld [vmem:[#allocation2 + $0x70] sm:$0xf]
    %v346 = vld [vmem:[#allocation2 + $0x78] sm:$0xff]
    %v347 = vld [vmem:[#allocation2 + $0x80] sm:$0xff]
    %v348 = vld [vmem:[#allocation2 + $0x88] sm:$0xf]
    %v349 = vld [vmem:[#allocation2 + $0x90] sm:$0xff]
    %v350 = vld [vmem:[#allocation2 + $0x98] sm:$0xff]
    %v351 = vld [vmem:[#allocation2 + $0xa0] sm:$0xf]
    %v352 = vld [vmem:[#allocation2 + $0xa8] sm:$0xff]
    %v353 = vld [vmem:[#allocation2 + $0xb0] sm:$0xff]
    %v354 = vld [vmem:[#allocation2 + $0xb8] sm:$0xf]
    %379 = vrot.lane.b32.xlu0 %v331, 126
    %v380 = vpop.permute.xlu0 %379
    %381 = vrot.lane.b32.xlu0 %v332, 126
    %v382 = vpop.permute.xlu0 %381
    %383 = vrot.lane.b32.xlu0 %v333, 126
    %v384 = vpop.permute.xlu0 %383
    %385 = vrot.lane.b32.xlu0 %v334, 126
    %v386 = vpop.permute.xlu0 %385
    %387 = vrot.lane.b32.xlu0 %v335, 126
    %v388 = vpop.permute.xlu0 %387
    %389 = vrot.lane.b32.xlu0 %v336, 126
    %v390 = vpop.permute.xlu0 %389
    %391 = vrot.lane.b32.xlu0 %v337, 126
    %v392 = vpop.permute.xlu0 %391
    %393 = vrot.lane.b32.xlu0 %v338, 126
    %v394 = vpop.permute.xlu0 %393
    %395 = vrot.lane.b32.xlu0 %v339, 126
    %v396 = vpop.permute.xlu0 %395
    %397 = vrot.lane.b32.xlu0 %v340, 126
    %v398 = vpop.permute.xlu0 %397
    %399 = vrot.lane.b32.xlu0 %v341, 126
    %v400 = vpop.permute.xlu0 %399
    %401 = vrot.lane.b32.xlu0 %v342, 126
    %v402 = vpop.permute.xlu0 %401
    %403 = vrot.lane.b32.xlu0 %v343, 126
    %v404 = vpop.permute.xlu0 %403
    %405 = vrot.lane.b32.xlu0 %v344, 126
    %v406 = vpop.permute.xlu0 %405
    %407 = vrot.lane.b32.xlu0 %v345, 126
    %v408 = vpop.permute.xlu0 %407
    %409 = vrot.lane.b32.xlu0 %v346, 126
    %v410 = vpop.permute.xlu0 %409
    %411 = vrot.lane.b32.xlu0 %v347, 126
    %v412 = vpop.permute.xlu0 %411
    %413 = vrot.lane.b32.xlu0 %v348, 126
    %v414 = vpop.permute.xlu0 %413
    %415 = vrot.lane.b32.xlu0 %v349, 126
    %v416 = vpop.permute.xlu0 %415
    %417 = vrot.lane.b32.xlu0 %v350, 126
    %v418 = vpop.permute.xlu0 %417
    %419 = vrot.lane.b32.xlu0 %v351, 126
    %v420 = vpop.permute.xlu0 %419
    %421 = vrot.lane.b32.xlu0 %v352, 126
    %v422 = vpop.permute.xlu0 %421
    %423 = vrot.lane.b32.xlu0 %v353, 126
    %v424 = vpop.permute.xlu0 %423
    %425 = vrot.lane.b32.xlu0 %v354, 126
    %v426 = vpop.permute.xlu0 %425
    %vm451 = vcmask 15368
    %452 = vst.msk [vmem:[#allocation2] sm:$0xff] %vm451, %v380
    %453 = vst.msk [vmem:[#allocation2 + $0x8] sm:$0xff] %vm451, %v382
    %vm454 = vcmask 11272
    %455 = vst.msk [vmem:[#allocation2 + $0x10] sm:$0xf] %vm454, %v384
    %456 = vst.msk [vmem:[#allocation2 + $0x18] sm:$0xff] %vm451, %v386
    %457 = vst.msk [vmem:[#allocation2 + $0x20] sm:$0xff] %vm451, %v388
    %458 = vst.msk [vmem:[#allocation2 + $0x28] sm:$0xf] %vm454, %v390
    %459 = vst.msk [vmem:[#allocation2 + $0x30] sm:$0xff] %vm451, %v392
    %460 = vst.msk [vmem:[#allocation2 + $0x38] sm:$0xff] %vm451, %v394
    %461 = vst.msk [vmem:[#allocation2 + $0x40] sm:$0xf] %vm454, %v396
    %462 = vst.msk [vmem:[#allocation2 + $0x48] sm:$0xff] %vm451, %v398
    %463 = vst.msk [vmem:[#allocation2 + $0x50] sm:$0xff] %vm451, %v400
    %464 = vst.msk [vmem:[#allocation2 + $0x58] sm:$0xf] %vm454, %v402
    %465 = vst.msk [vmem:[#allocation2 + $0x60] sm:$0xff] %vm451, %v404
    %466 = vst.msk [vmem:[#allocation2 + $0x68] sm:$0xff] %vm451, %v406
    %467 = vst.msk [vmem:[#allocation2 + $0x70] sm:$0xf] %vm454, %v408
    %468 = vst.msk [vmem:[#allocation2 + $0x78] sm:$0xff] %vm451, %v410
    %469 = vst.msk [vmem:[#allocation2 + $0x80] sm:$0xff] %vm451, %v412
    %470 = vst.msk [vmem:[#allocation2 + $0x88] sm:$0xf] %vm454, %v414
    %471 = vst.msk [vmem:[#allocation2 + $0x90] sm:$0xff] %vm451, %v416
    %472 = vst.msk [vmem:[#allocation2 + $0x98] sm:$0xff] %vm451, %v418
    %473 = vst.msk [vmem:[#allocation2 + $0xa0] sm:$0xf] %vm454, %v420
    %474 = vst.msk [vmem:[#allocation2 + $0xa8] sm:$0xff] %vm451, %v422
    %475 = vst.msk [vmem:[#allocation2 + $0xb0] sm:$0xff] %vm451, %v424
    %476 = vst.msk [vmem:[#allocation2 + $0xb8] sm:$0xf] %vm454, %v426
    %v477 = vld [vmem:[#allocation2] sm:$0xff]
    %v478 = vld [vmem:[#allocation2 + $0x8] sm:$0xff]
    %v479 = vld [vmem:[#allocation2 + $0x10] sm:$0xf]
    %v480 = vld [vmem:[#allocation2 + $0x18] sm:$0xff]
    %v481 = vld [vmem:[#allocation2 + $0x20] sm:$0xff]
    %v482 = vld [vmem:[#allocation2 + $0x28] sm:$0xf]
    %v483 = vld [vmem:[#allocation2 + $0x30] sm:$0xff]
    %v484 = vld [vmem:[#allocation2 + $0x38] sm:$0xff]
    %v485 = vld [vmem:[#allocation2 + $0x40] sm:$0xf]
    %v486 = vld [vmem:[#allocation2 + $0x48] sm:$0xff]
    %v487 = vld [vmem:[#allocation2 + $0x50] sm:$0xff]
    %v488 = vld [vmem:[#allocation2 + $0x58] sm:$0xf]
    %v489 = vld [vmem:[#allocation2 + $0x60] sm:$0xff]
    %v490 = vld [vmem:[#allocation2 + $0x68] sm:$0xff]
    %v491 = vld [vmem:[#allocation2 + $0x70] sm:$0xf]
    %v492 = vld [vmem:[#allocation2 + $0x78] sm:$0xff]
    %v493 = vld [vmem:[#allocation2 + $0x80] sm:$0xff]
    %v494 = vld [vmem:[#allocation2 + $0x88] sm:$0xf]
    %v495 = vld [vmem:[#allocation2 + $0x90] sm:$0xff]
    %v496 = vld [vmem:[#allocation2 + $0x98] sm:$0xff]
    %v497 = vld [vmem:[#allocation2 + $0xa0] sm:$0xf]
    %v498 = vld [vmem:[#allocation2 + $0xa8] sm:$0xff]
    %v499 = vld [vmem:[#allocation2 + $0xb0] sm:$0xff]
    %v500 = vld [vmem:[#allocation2 + $0xb8] sm:$0xf]
    %525 = vrot.lane.b32.xlu0 %v477, 2
    %v526 = vpop.permute.xlu0 %525
    %527 = vrot.lane.b32.xlu0 %v478, 2
    %v528 = vpop.permute.xlu0 %527
    %529 = vrot.lane.b32.xlu0 %v479, 2
    %v530 = vpop.permute.xlu0 %529
    %531 = vrot.lane.b32.xlu0 %v480, 2
    %v532 = vpop.permute.xlu0 %531
    %533 = vrot.lane.b32.xlu0 %v481, 2
    %v534 = vpop.permute.xlu0 %533
    %535 = vrot.lane.b32.xlu0 %v482, 2
    %v536 = vpop.permute.xlu0 %535
    %537 = vrot.lane.b32.xlu0 %v483, 2
    %v538 = vpop.permute.xlu0 %537
    %539 = vrot.lane.b32.xlu0 %v484, 2
    %v540 = vpop.permute.xlu0 %539
    %541 = vrot.lane.b32.xlu0 %v485, 2
    %v542 = vpop.permute.xlu0 %541
    %543 = vrot.lane.b32.xlu0 %v486, 2
    %v544 = vpop.permute.xlu0 %543
    %545 = vrot.lane.b32.xlu0 %v487, 2
    %v546 = vpop.permute.xlu0 %545
    %547 = vrot.lane.b32.xlu0 %v488, 2
    %v548 = vpop.permute.xlu0 %547
    %549 = vrot.lane.b32.xlu0 %v489, 2
    %v550 = vpop.permute.xlu0 %549
    %551 = vrot.lane.b32.xlu0 %v490, 2
    %v552 = vpop.permute.xlu0 %551
    %553 = vrot.lane.b32.xlu0 %v491, 2
    %v554 = vpop.permute.xlu0 %553
    %555 = vrot.lane.b32.xlu0 %v492, 2
    %v556 = vpop.permute.xlu0 %555
    %557 = vrot.lane.b32.xlu0 %v493, 2
    %v558 = vpop.permute.xlu0 %557
    %559 = vrot.lane.b32.xlu0 %v494, 2
    %v560 = vpop.permute.xlu0 %559
    %561 = vrot.lane.b32.xlu0 %v495, 2
    %v562 = vpop.permute.xlu0 %561
    %563 = vrot.lane.b32.xlu0 %v496, 2
    %v564 = vpop.permute.xlu0 %563
    %565 = vrot.lane.b32.xlu0 %v497, 2
    %v566 = vpop.permute.xlu0 %565
    %567 = vrot.lane.b32.xlu0 %v498, 2
    %v568 = vpop.permute.xlu0 %567
    %569 = vrot.lane.b32.xlu0 %v499, 2
    %v570 = vpop.permute.xlu0 %569
    %571 = vrot.lane.b32.xlu0 %v500, 2
    %v572 = vpop.permute.xlu0 %571
    %vm597 = vcmask 154768
    %598 = vst.msk [vmem:[#allocation2] sm:$0xff] %vm597, %v526
    %599 = vst.msk [vmem:[#allocation2 + $0x8] sm:$0xff] %vm597, %v528
    %vm600 = vcmask 150672
    %601 = vst.msk [vmem:[#allocation2 + $0x10] sm:$0xf] %vm600, %v530
    %602 = vst.msk [vmem:[#allocation2 + $0x18] sm:$0xff] %vm597, %v532
    %603 = vst.msk [vmem:[#allocation2 + $0x20] sm:$0xff] %vm597, %v534
    %604 = vst.msk [vmem:[#allocation2 + $0x28] sm:$0xf] %vm600, %v536
    %605 = vst.msk [vmem:[#allocation2 + $0x30] sm:$0xff] %vm597, %v538
    %606 = vst.msk [vmem:[#allocation2 + $0x38] sm:$0xff] %vm597, %v540
    %607 = vst.msk [vmem:[#allocation2 + $0x40] sm:$0xf] %vm600, %v542
    %608 = vst.msk [vmem:[#allocation2 + $0x48] sm:$0xff] %vm597, %v544
    %609 = vst.msk [vmem:[#allocation2 + $0x50] sm:$0xff] %vm597, %v546
    %610 = vst.msk [vmem:[#allocation2 + $0x58] sm:$0xf] %vm600, %v548
    %611 = vst.msk [vmem:[#allocation2 + $0x60] sm:$0xff] %vm597, %v550
    %612 = vst.msk [vmem:[#allocation2 + $0x68] sm:$0xff] %vm597, %v552
    %613 = vst.msk [vmem:[#allocation2 + $0x70] sm:$0xf] %vm600, %v554
    %614 = vst.msk [vmem:[#allocation2 + $0x78] sm:$0xff] %vm597, %v556
    %615 = vst.msk [vmem:[#allocation2 + $0x80] sm:$0xff] %vm597, %v558
    %616 = vst.msk [vmem:[#allocation2 + $0x88] sm:$0xf] %vm600, %v560
    %617 = vst.msk [vmem:[#allocation2 + $0x90] sm:$0xff] %vm597, %v562
    %618 = vst.msk [vmem:[#allocation2 + $0x98] sm:$0xff] %vm597, %v564
    %619 = vst.msk [vmem:[#allocation2 + $0xa0] sm:$0xf] %vm600, %v566
    %620 = vst.msk [vmem:[#allocation2 + $0xa8] sm:$0xff] %vm597, %v568
    %621 = vst.msk [vmem:[#allocation2 + $0xb0] sm:$0xff] %vm597, %v570
    %622 = vst.msk [vmem:[#allocation2 + $0xb8] sm:$0xf] %vm600, %v572
    %v623 = vld [vmem:[#allocation2] sm:$0xff]
    %v624 = vld [vmem:[#allocation2 + $0x8] sm:$0xff]
    %v625 = vld [vmem:[#allocation2 + $0x10] sm:$0xf]
    %v626 = vld [vmem:[#allocation2 + $0x18] sm:$0xff]
    %v627 = vld [vmem:[#allocation2 + $0x20] sm:$0xff]
    %v628 = vld [vmem:[#allocation2 + $0x28] sm:$0xf]
    %v629 = vld [vmem:[#allocation2 + $0x30] sm:$0xff]
    %v630 = vld [vmem:[#allocation2 + $0x38] sm:$0xff]
    %v631 = vld [vmem:[#allocation2 + $0x40] sm:$0xf]
    %v632 = vld [vmem:[#allocation2 + $0x48] sm:$0xff]
    %v633 = vld [vmem:[#allocation2 + $0x50] sm:$0xff]
    %v634 = vld [vmem:[#allocation2 + $0x58] sm:$0xf]
    %v635 = vld [vmem:[#allocation2 + $0x60] sm:$0xff]
    %v636 = vld [vmem:[#allocation2 + $0x68] sm:$0xff]
    %v637 = vld [vmem:[#allocation2 + $0x70] sm:$0xf]
    %v638 = vld [vmem:[#allocation2 + $0x78] sm:$0xff]
    %v639 = vld [vmem:[#allocation2 + $0x80] sm:$0xff]
    %v640 = vld [vmem:[#allocation2 + $0x88] sm:$0xf]
    %v641 = vld [vmem:[#allocation2 + $0x90] sm:$0xff]
    %v642 = vld [vmem:[#allocation2 + $0x98] sm:$0xff]
    %v643 = vld [vmem:[#allocation2 + $0xa0] sm:$0xf]
    %v644 = vld [vmem:[#allocation2 + $0xa8] sm:$0xff]
    %v645 = vld [vmem:[#allocation2 + $0xb0] sm:$0xff]
    %v646 = vld [vmem:[#allocation2 + $0xb8] sm:$0xf]
    %671 = vrot.lane.b32.xlu0 %v623, 4
    %v672 = vpop.permute.xlu0 %671
    %673 = vrot.lane.b32.xlu0 %v624, 4
    %v674 = vpop.permute.xlu0 %673
    %675 = vrot.lane.b32.xlu0 %v625, 4
    %v676 = vpop.permute.xlu0 %675
    %677 = vrot.lane.b32.xlu0 %v626, 4
    %v678 = vpop.permute.xlu0 %677
    %679 = vrot.lane.b32.xlu0 %v627, 4
    %v680 = vpop.permute.xlu0 %679
    %681 = vrot.lane.b32.xlu0 %v628, 4
    %v682 = vpop.permute.xlu0 %681
    %683 = vrot.lane.b32.xlu0 %v629, 4
    %v684 = vpop.permute.xlu0 %683
    %685 = vrot.lane.b32.xlu0 %v630, 4
    %v686 = vpop.permute.xlu0 %685
    %687 = vrot.lane.b32.xlu0 %v631, 4
    %v688 = vpop.permute.xlu0 %687
    %689 = vrot.lane.b32.xlu0 %v632, 4
    %v690 = vpop.permute.xlu0 %689
    %691 = vrot.lane.b32.xlu0 %v633, 4
    %v692 = vpop.permute.xlu0 %691
    %693 = vrot.lane.b32.xlu0 %v634, 4
    %v694 = vpop.permute.xlu0 %693
    %695 = vrot.lane.b32.xlu0 %v635, 4
    %v696 = vpop.permute.xlu0 %695
    %697 = vrot.lane.b32.xlu0 %v636, 4
    %v698 = vpop.permute.xlu0 %697
    %699 = vrot.lane.b32.xlu0 %v637, 4
    %v700 = vpop.permute.xlu0 %699
    %701 = vrot.lane.b32.xlu0 %v638, 4
    %v702 = vpop.permute.xlu0 %701
    %703 = vrot.lane.b32.xlu0 %v639, 4
    %v704 = vpop.permute.xlu0 %703
    %705 = vrot.lane.b32.xlu0 %v640, 4
    %v706 = vpop.permute.xlu0 %705
    %707 = vrot.lane.b32.xlu0 %v641, 4
    %v708 = vpop.permute.xlu0 %707
    %709 = vrot.lane.b32.xlu0 %v642, 4
    %v710 = vpop.permute.xlu0 %709
    %711 = vrot.lane.b32.xlu0 %v643, 4
    %v712 = vpop.permute.xlu0 %711
    %713 = vrot.lane.b32.xlu0 %v644, 4
    %v714 = vpop.permute.xlu0 %713
    %715 = vrot.lane.b32.xlu0 %v645, 4
    %v716 = vpop.permute.xlu0 %715
    %717 = vrot.lane.b32.xlu0 %v646, 4
    %v718 = vpop.permute.xlu0 %717
    %vm743 = vcmask 162968
    %744 = vst.msk [vmem:[#allocation2] sm:$0xff] %vm743, %v672
    %745 = vst.msk [vmem:[#allocation2 + $0x8] sm:$0xff] %vm743, %v674
    %vm746 = vcmask 158872
    %747 = vst.msk [vmem:[#allocation2 + $0x10] sm:$0xf] %vm746, %v676
    %748 = vst.msk [vmem:[#allocation2 + $0x18] sm:$0xff] %vm743, %v678
    %749 = vst.msk [vmem:[#allocation2 + $0x20] sm:$0xff] %vm743, %v680
    %750 = vst.msk [vmem:[#allocation2 + $0x28] sm:$0xf] %vm746, %v682
    %751 = vst.msk [vmem:[#allocation2 + $0x30] sm:$0xff] %vm743, %v684
    %752 = vst.msk [vmem:[#allocation2 + $0x38] sm:$0xff] %vm743, %v686
    %753 = vst.msk [vmem:[#allocation2 + $0x40] sm:$0xf] %vm746, %v688
    %754 = vst.msk [vmem:[#allocation2 + $0x48] sm:$0xff] %vm743, %v690
    %755 = vst.msk [vmem:[#allocation2 + $0x50] sm:$0xff] %vm743, %v692
    %756 = vst.msk [vmem:[#allocation2 + $0x58] sm:$0xf] %vm746, %v694
    %757 = vst.msk [vmem:[#allocation2 + $0x60] sm:$0xff] %vm743, %v696
    %758 = vst.msk [vmem:[#allocation2 + $0x68] sm:$0xff] %vm743, %v698
    %759 = vst.msk [vmem:[#allocation2 + $0x70] sm:$0xf] %vm746, %v700
    %760 = vst.msk [vmem:[#allocation2 + $0x78] sm:$0xff] %vm743, %v702
    %761 = vst.msk [vmem:[#allocation2 + $0x80] sm:$0xff] %vm743, %v704
    %762 = vst.msk [vmem:[#allocation2 + $0x88] sm:$0xf] %vm746, %v706
    %763 = vst.msk [vmem:[#allocation2 + $0x90] sm:$0xff] %vm743, %v708
    %764 = vst.msk [vmem:[#allocation2 + $0x98] sm:$0xff] %vm743, %v710
    %765 = vst.msk [vmem:[#allocation2 + $0xa0] sm:$0xf] %vm746, %v712
    %766 = vst.msk [vmem:[#allocation2 + $0xa8] sm:$0xff] %vm743, %v714
    %767 = vst.msk [vmem:[#allocation2 + $0xb0] sm:$0xff] %vm743, %v716
    %768 = vst.msk [vmem:[#allocation2 + $0xb8] sm:$0xf] %vm746, %v718
    %v769 = vld [vmem:[#allocation2] sm:$0xff]
    %v770 = vld [vmem:[#allocation2 + $0x8] sm:$0xff]
    %v771 = vld [vmem:[#allocation2 + $0x10] sm:$0xf]
    %v772 = vld [vmem:[#allocation2 + $0x18] sm:$0xff]
    %v773 = vld [vmem:[#allocation2 + $0x20] sm:$0xff]
    %v774 = vld [vmem:[#allocation2 + $0x28] sm:$0xf]
    %v775 = vld [vmem:[#allocation2 + $0x30] sm:$0xff]
    %v776 = vld [vmem:[#allocation2 + $0x38] sm:$0xff]
    %v777 = vld [vmem:[#allocation2 + $0x40] sm:$0xf]
    %v778 = vld [vmem:[#allocation2 + $0x48] sm:$0xff]
    %v779 = vld [vmem:[#allocation2 + $0x50] sm:$0xff]
    %v780 = vld [vmem:[#allocation2 + $0x58] sm:$0xf]
    %v781 = vld [vmem:[#allocation2 + $0x60] sm:$0xff]
    %v782 = vld [vmem:[#allocation2 + $0x68] sm:$0xff]
    %v783 = vld [vmem:[#allocation2 + $0x70] sm:$0xf]
    %v784 = vld [vmem:[#allocation2 + $0x78] sm:$0xff]
    %v785 = vld [vmem:[#allocation2 + $0x80] sm:$0xff]
    %v786 = vld [vmem:[#allocation2 + $0x88] sm:$0xf]
    %v787 = vld [vmem:[#allocation2 + $0x90] sm:$0xff]
    %v788 = vld [vmem:[#allocation2 + $0x98] sm:$0xff]
    %v789 = vld [vmem:[#allocation2 + $0xa0] sm:$0xf]
    %v790 = vld [vmem:[#allocation2 + $0xa8] sm:$0xff]
    %v791 = vld [vmem:[#allocation2 + $0xb0] sm:$0xff]
    %v792 = vld [vmem:[#allocation2 + $0xb8] sm:$0xf]
    %v793 = vmul.f32 %v769, -0.1694938
    %v794 = vmul.f32 %v770, -0.1694938
    %v795 = vmul.f32 %v771, -0.1694938
    %v796 = vmul.f32 %v772, -0.1694938
    %v797 = vmul.f32 %v773, -0.1694938
    %v798 = vmul.f32 %v774, -0.1694938
    %v799 = vmul.f32 %v775, -0.1694938
    %v800 = vmul.f32 %v776, -0.1694938
    %v801 = vmul.f32 %v777, -0.1694938
    %v802 = vmul.f32 %v778, -0.1694938
    %v803 = vmul.f32 %v779, -0.1694938
    %v804 = vmul.f32 %v780, -0.1694938
    %v805 = vmul.f32 %v781, -0.1694938
    %v806 = vmul.f32 %v782, -0.1694938
    %v807 = vmul.f32 %v783, -0.1694938
    %v808 = vmul.f32 %v784, -0.1694938
    %v809 = vmul.f32 %v785, -0.1694938
    %v810 = vmul.f32 %v786, -0.1694938
    %v811 = vmul.f32 %v787, -0.1694938
    %v812 = vmul.f32 %v788, -0.1694938
    %v813 = vmul.f32 %v789, -0.1694938
    %v814 = vmul.f32 %v790, -0.1694938
    %v815 = vmul.f32 %v791, -0.1694938
    %v816 = vmul.f32 %v792, -0.1694938
    %v817 = vmul.f32 %v769, 0.5266082
    %v818 = vmul.f32 %v770, 0.5266082
    %v819 = vmul.f32 %v771, 0.5266082
    %v820 = vmul.f32 %v772, 0.5266082
    %v821 = vmul.f32 %v773, 0.5266082
    %v822 = vmul.f32 %v774, 0.5266082
    %v823 = vmul.f32 %v775, 0.5266082
    %v824 = vmul.f32 %v776, 0.5266082
    %v825 = vmul.f32 %v777, 0.5266082
    %v826 = vmul.f32 %v778, 0.5266082
    %v827 = vmul.f32 %v779, 0.5266082
    %v828 = vmul.f32 %v780, 0.5266082
    %v829 = vmul.f32 %v781, 0.5266082
    %v830 = vmul.f32 %v782, 0.5266082
    %v831 = vmul.f32 %v783, 0.5266082
    %v832 = vmul.f32 %v784, 0.5266082
    %v833 = vmul.f32 %v785, 0.5266082
    %v834 = vmul.f32 %v786, 0.5266082
    %v835 = vmul.f32 %v787, 0.5266082
    %v836 = vmul.f32 %v788, 0.5266082
    %v837 = vmul.f32 %v789, 0.5266082
    %v838 = vmul.f32 %v790, 0.5266082
    %v839 = vmul.f32 %v791, 0.5266082
    %v840 = vmul.f32 %v792, 0.5266082
    %v841 = vmul.f32 %v769, -0.44040394
    %v842 = vmul.f32 %v770, -0.44040394
    %v843 = vmul.f32 %v771, -0.44040394
    %v844 = vmul.f32 %v772, -0.44040394
    %v845 = vmul.f32 %v773, -0.44040394
    %v846 = vmul.f32 %v774, -0.44040394
    %v847 = vmul.f32 %v775, -0.44040394
    %v848 = vmul.f32 %v776, -0.44040394
    %v849 = vmul.f32 %v777, -0.44040394
    %v850 = vmul.f32 %v778, -0.44040394
    %v851 = vmul.f32 %v779, -0.44040394
    %v852 = vmul.f32 %v780, -0.44040394
    %v853 = vmul.f32 %v781, -0.44040394
    %v854 = vmul.f32 %v782, -0.44040394
    %v855 = vmul.f32 %v783, -0.44040394
    %v856 = vmul.f32 %v784, -0.44040394
    %v857 = vmul.f32 %v785, -0.44040394
    %v858 = vmul.f32 %v786, -0.44040394
    %v859 = vmul.f32 %v787, -0.44040394
    %v860 = vmul.f32 %v788, -0.44040394
    %v861 = vmul.f32 %v789, -0.44040394
    %v862 = vmul.f32 %v790, -0.44040394
    %v863 = vmul.f32 %v791, -0.44040394
    %v864 = vmul.f32 %v792, -0.44040394
    %v865 = vmul.f32 %v769, 0.25843972
    %v866 = vmul.f32 %v770, 0.25843972
    %v867 = vmul.f32 %v771, 0.25843972
    %v868 = vmul.f32 %v772, 0.25843972
    %v869 = vmul.f32 %v773, 0.25843972
    %v870 = vmul.f32 %v774, 0.25843972
    %v871 = vmul.f32 %v775, 0.25843972
    %v872 = vmul.f32 %v776, 0.25843972
    %v873 = vmul.f32 %v777, 0.25843972
    %v874 = vmul.f32 %v778, 0.25843972
    %v875 = vmul.f32 %v779, 0.25843972
    %v876 = vmul.f32 %v780, 0.25843972
    %v877 = vmul.f32 %v781, 0.25843972
    %v878 = vmul.f32 %v782, 0.25843972
    %v879 = vmul.f32 %v783, 0.25843972
    %v880 = vmul.f32 %v784, 0.25843972
    %v881 = vmul.f32 %v785, 0.25843972
    %v882 = vmul.f32 %v786, 0.25843972
    %v883 = vmul.f32 %v787, 0.25843972
    %v884 = vmul.f32 %v788, 0.25843972
    %v885 = vmul.f32 %v789, 0.25843972
    %v886 = vmul.f32 %v790, 0.25843972
    %v887 = vmul.f32 %v791, 0.25843972
    %v888 = vmul.f32 %v792, 0.25843972
    %913 = vrot.lane.b32.xlu0 %v865, 127
    %v914 = vpop.permute.xlu0 %913
    %915 = vrot.lane.b32.xlu0 %v866, 127
    %v916 = vpop.permute.xlu0 %915
    %917 = vrot.lane.b32.xlu0 %v867, 127
    %v918 = vpop.permute.xlu0 %917
    %919 = vrot.lane.b32.xlu0 %v868, 127
    %v920 = vpop.permute.xlu0 %919
    %921 = vrot.lane.b32.xlu0 %v869, 127
    %v922 = vpop.permute.xlu0 %921
    %923 = vrot.lane.b32.xlu0 %v870, 127
    %v924 = vpop.permute.xlu0 %923
    %925 = vrot.lane.b32.xlu0 %v871, 127
    %v926 = vpop.permute.xlu0 %925
    %927 = vrot.lane.b32.xlu0 %v872, 127
    %v928 = vpop.permute.xlu0 %927
    %929 = vrot.lane.b32.xlu0 %v873, 127
    %v930 = vpop.permute.xlu0 %929
    %931 = vrot.lane.b32.xlu0 %v874, 127
    %v932 = vpop.permute.xlu0 %931
    %933 = vrot.lane.b32.xlu0 %v875, 127
    %v934 = vpop.permute.xlu0 %933
    %935 = vrot.lane.b32.xlu0 %v876, 127
    %v936 = vpop.permute.xlu0 %935
    %937 = vrot.lane.b32.xlu0 %v877, 127
    %v938 = vpop.permute.xlu0 %937
    %939 = vrot.lane.b32.xlu0 %v878, 127
    %v940 = vpop.permute.xlu0 %939
    %941 = vrot.lane.b32.xlu0 %v879, 127
    %v942 = vpop.permute.xlu0 %941
    %943 = vrot.lane.b32.xlu0 %v880, 127
    %v944 = vpop.permute.xlu0 %943
    %945 = vrot.lane.b32.xlu0 %v881, 127
    %v946 = vpop.permute.xlu0 %945
    %947 = vrot.lane.b32.xlu0 %v882, 127
    %v948 = vpop.permute.xlu0 %947
    %949 = vrot.lane.b32.xlu0 %v883, 127
    %v950 = vpop.permute.xlu0 %949
    %951 = vrot.lane.b32.xlu0 %v884, 127
    %v952 = vpop.permute.xlu0 %951
    %953 = vrot.lane.b32.xlu0 %v885, 127
    %v954 = vpop.permute.xlu0 %953
    %955 = vrot.lane.b32.xlu0 %v886, 127
    %v956 = vpop.permute.xlu0 %955
    %957 = vrot.lane.b32.xlu0 %v887, 127
    %v958 = vpop.permute.xlu0 %957
    %959 = vrot.lane.b32.xlu0 %v888, 127
    %v960 = vpop.permute.xlu0 %959
    %v985 = vadd.f32 %v793, %v914
    %v986 = vadd.f32 %v794, %v916
    %v987 = vadd.f32 %v795, %v918
    %v988 = vadd.f32 %v796, %v920
    %v989 = vadd.f32 %v797, %v922
    %v990 = vadd.f32 %v798, %v924
    %v991 = vadd.f32 %v799, %v926
    %v992 = vadd.f32 %v800, %v928
    %v993 = vadd.f32 %v801, %v930
    %v994 = vadd.f32 %v802, %v932
    %v995 = vadd.f32 %v803, %v934
    %v996 = vadd.f32 %v804, %v936
    %v997 = vadd.f32 %v805, %v938
    %v998 = vadd.f32 %v806, %v940
    %v999 = vadd.f32 %v807, %v942
    %v1000 = vadd.f32 %v808, %v944
    %v1001 = vadd.f32 %v809, %v946
    %v1002 = vadd.f32 %v810, %v948
    %v1003 = vadd.f32 %v811, %v950
    %v1004 = vadd.f32 %v812, %v952
    %v1005 = vadd.f32 %v813, %v954
    %v1006 = vadd.f32 %v814, %v956
    %v1007 = vadd.f32 %v815, %v958
    %v1008 = vadd.f32 %v816, %v960
    %v1009 = vmul.f32 %v769, 0.46920305
    %v1010 = vmul.f32 %v770, 0.46920305
    %v1011 = vmul.f32 %v771, 0.46920305
    %v1012 = vmul.f32 %v772, 0.46920305
    %v1013 = vmul.f32 %v773, 0.46920305
    %v1014 = vmul.f32 %v774, 0.46920305
    %v1015 = vmul.f32 %v775, 0.46920305
    %v1016 = vmul.f32 %v776, 0.46920305
    %v1017 = vmul.f32 %v777, 0.46920305
    %v1018 = vmul.f32 %v778, 0.46920305
    %v1019 = vmul.f32 %v779, 0.46920305
    %v1020 = vmul.f32 %v780, 0.46920305
    %v1021 = vmul.f32 %v781, 0.46920305
    %v1022 = vmul.f32 %v782, 0.46920305
    %v1023 = vmul.f32 %v783, 0.46920305
    %v1024 = vmul.f32 %v784, 0.46920305
    %v1025 = vmul.f32 %v785, 0.46920305
    %v1026 = vmul.f32 %v786, 0.46920305
    %v1027 = vmul.f32 %v787, 0.46920305
    %v1028 = vmul.f32 %v788, 0.46920305
    %v1029 = vmul.f32 %v789, 0.46920305
    %v1030 = vmul.f32 %v790, 0.46920305
    %v1031 = vmul.f32 %v791, 0.46920305
    %v1032 = vmul.f32 %v792, 0.46920305
    %1057 = vrot.lane.b32.xlu0 %v1009, 127
    %v1058 = vpop.permute.xlu0 %1057
    %1059 = vrot.lane.b32.xlu0 %v1010, 127
    %v1060 = vpop.permute.xlu0 %1059
    %1061 = vrot.lane.b32.xlu0 %v1011, 127
    %v1062 = vpop.permute.xlu0 %1061
    %1063 = vrot.lane.b32.xlu0 %v1012, 127
    %v1064 = vpop.permute.xlu0 %1063
    %1065 = vrot.lane.b32.xlu0 %v1013, 127
    %v1066 = vpop.permute.xlu0 %1065
    %1067 = vrot.lane.b32.xlu0 %v1014, 127
    %v1068 = vpop.permute.xlu0 %1067
    %1069 = vrot.lane.b32.xlu0 %v1015, 127
    %v1070 = vpop.permute.xlu0 %1069
    %1071 = vrot.lane.b32.xlu0 %v1016, 127
    %v1072 = vpop.permute.xlu0 %1071
    %1073 = vrot.lane.b32.xlu0 %v1017, 127
    %v1074 = vpop.permute.xlu0 %1073
    %1075 = vrot.lane.b32.xlu0 %v1018, 127
    %v1076 = vpop.permute.xlu0 %1075
    %1077 = vrot.lane.b32.xlu0 %v1019, 127
    %v1078 = vpop.permute.xlu0 %1077
    %1079 = vrot.lane.b32.xlu0 %v1020, 127
    %v1080 = vpop.permute.xlu0 %1079
    %1081 = vrot.lane.b32.xlu0 %v1021, 127
    %v1082 = vpop.permute.xlu0 %1081
    %1083 = vrot.lane.b32.xlu0 %v1022, 127
    %v1084 = vpop.permute.xlu0 %1083
    %1085 = vrot.lane.b32.xlu0 %v1023, 127
    %v1086 = vpop.permute.xlu0 %1085
    %1087 = vrot.lane.b32.xlu0 %v1024, 127
    %v1088 = vpop.permute.xlu0 %1087
    %1089 = vrot.lane.b32.xlu0 %v1025, 127
    %v1090 = vpop.permute.xlu0 %1089
    %1091 = vrot.lane.b32.xlu0 %v1026, 127
    %v1092 = vpop.permute.xlu0 %1091
    %1093 = vrot.lane.b32.xlu0 %v1027, 127
    %v1094 = vpop.permute.xlu0 %1093
    %1095 = vrot.lane.b32.xlu0 %v1028, 127
    %v1096 = vpop.permute.xlu0 %1095
    %1097 = vrot.lane.b32.xlu0 %v1029, 127
    %v1098 = vpop.permute.xlu0 %1097
    %1099 = vrot.lane.b32.xlu0 %v1030, 127
    %v1100 = vpop.permute.xlu0 %1099
    %1101 = vrot.lane.b32.xlu0 %v1031, 127
    %v1102 = vpop.permute.xlu0 %1101
    %1103 = vrot.lane.b32.xlu0 %v1032, 127
    %v1104 = vpop.permute.xlu0 %1103
    %v1129 = vadd.f32 %v817, %v1058
    %v1130 = vadd.f32 %v818, %v1060
    %v1131 = vadd.f32 %v819, %v1062
    %v1132 = vadd.f32 %v820, %v1064
    %v1133 = vadd.f32 %v821, %v1066
    %v1134 = vadd.f32 %v822, %v1068
    %v1135 = vadd.f32 %v823, %v1070
    %v1136 = vadd.f32 %v824, %v1072
    %v1137 = vadd.f32 %v825, %v1074
    %v1138 = vadd.f32 %v826, %v1076
    %v1139 = vadd.f32 %v827, %v1078
    %v1140 = vadd.f32 %v828, %v1080
    %v1141 = vadd.f32 %v829, %v1082
    %v1142 = vadd.f32 %v830, %v1084
    %v1143 = vadd.f32 %v831, %v1086
    %v1144 = vadd.f32 %v832, %v1088
    %v1145 = vadd.f32 %v833, %v1090
    %v1146 = vadd.f32 %v834, %v1092
    %v1147 = vadd.f32 %v835, %v1094
    %v1148 = vadd.f32 %v836, %v1096
    %v1149 = vadd.f32 %v837, %v1098
    %v1150 = vadd.f32 %v838, %v1100
    %v1151 = vadd.f32 %v839, %v1102
    %v1152 = vadd.f32 %v840, %v1104
    %v1153 = vmul.f32 %v769, 0.46158144
    %v1154 = vmul.f32 %v770, 0.46158144
    %v1155 = vmul.f32 %v771, 0.46158144
    %v1156 = vmul.f32 %v772, 0.46158144
    %v1157 = vmul.f32 %v773, 0.46158144
    %v1158 = vmul.f32 %v774, 0.46158144
    %v1159 = vmul.f32 %v775, 0.46158144
    %v1160 = vmul.f32 %v776, 0.46158144
    %v1161 = vmul.f32 %v777, 0.46158144
    %v1162 = vmul.f32 %v778, 0.46158144
    %v1163 = vmul.f32 %v779, 0.46158144
    %v1164 = vmul.f32 %v780, 0.46158144
    %v1165 = vmul.f32 %v781, 0.46158144
    %v1166 = vmul.f32 %v782, 0.46158144
    %v1167 = vmul.f32 %v783, 0.46158144
    %v1168 = vmul.f32 %v784, 0.46158144
    %v1169 = vmul.f32 %v785, 0.46158144
    %v1170 = vmul.f32 %v786, 0.46158144
    %v1171 = vmul.f32 %v787, 0.46158144
    %v1172 = vmul.f32 %v788, 0.46158144
    %v1173 = vmul.f32 %v789, 0.46158144
    %v1174 = vmul.f32 %v790, 0.46158144
    %v1175 = vmul.f32 %v791, 0.46158144
    %v1176 = vmul.f32 %v792, 0.46158144
    %1201 = vrot.lane.b32.xlu0 %v1153, 127
    %v1202 = vpop.permute.xlu0 %1201
    %1203 = vrot.lane.b32.xlu0 %v1154, 127
    %v1204 = vpop.permute.xlu0 %1203
    %1205 = vrot.lane.b32.xlu0 %v1155, 127
    %v1206 = vpop.permute.xlu0 %1205
    %1207 = vrot.lane.b32.xlu0 %v1156, 127
    %v1208 = vpop.permute.xlu0 %1207
    %1209 = vrot.lane.b32.xlu0 %v1157, 127
    %v1210 = vpop.permute.xlu0 %1209
    %1211 = vrot.lane.b32.xlu0 %v1158, 127
    %v1212 = vpop.permute.xlu0 %1211
    %1213 = vrot.lane.b32.xlu0 %v1159, 127
    %v1214 = vpop.permute.xlu0 %1213
    %1215 = vrot.lane.b32.xlu0 %v1160, 127
    %v1216 = vpop.permute.xlu0 %1215
    %1217 = vrot.lane.b32.xlu0 %v1161, 127
    %v1218 = vpop.permute.xlu0 %1217
    %1219 = vrot.lane.b32.xlu0 %v1162, 127
    %v1220 = vpop.permute.xlu0 %1219
    %1221 = vrot.lane.b32.xlu0 %v1163, 127
    %v1222 = vpop.permute.xlu0 %1221
    %1223 = vrot.lane.b32.xlu0 %v1164, 127
    %v1224 = vpop.permute.xlu0 %1223
    %1225 = vrot.lane.b32.xlu0 %v1165, 127
    %v1226 = vpop.permute.xlu0 %1225
    %1227 = vrot.lane.b32.xlu0 %v1166, 127
    %v1228 = vpop.permute.xlu0 %1227
    %1229 = vrot.lane.b32.xlu0 %v1167, 127
    %v1230 = vpop.permute.xlu0 %1229
    %1231 = vrot.lane.b32.xlu0 %v1168, 127
    %v1232 = vpop.permute.xlu0 %1231
    %1233 = vrot.lane.b32.xlu0 %v1169, 127
    %v1234 = vpop.permute.xlu0 %1233
    %1235 = vrot.lane.b32.xlu0 %v1170, 127
    %v1236 = vpop.permute.xlu0 %1235
    %1237 = vrot.lane.b32.xlu0 %v1171, 127
    %v1238 = vpop.permute.xlu0 %1237
    %1239 = vrot.lane.b32.xlu0 %v1172, 127
    %v1240 = vpop.permute.xlu0 %1239
    %1241 = vrot.lane.b32.xlu0 %v1173, 127
    %v1242 = vpop.permute.xlu0 %1241
    %1243 = vrot.lane.b32.xlu0 %v1174, 127
    %v1244 = vpop.permute.xlu0 %1243
    %1245 = vrot.lane.b32.xlu0 %v1175, 127
    %v1246 = vpop.permute.xlu0 %1245
    %1247 = vrot.lane.b32.xlu0 %v1176, 127
    %v1248 = vpop.permute.xlu0 %1247
    %v1273 = vadd.f32 %v841, %v1202
    %v1274 = vadd.f32 %v842, %v1204
    %v1275 = vadd.f32 %v843, %v1206
    %v1276 = vadd.f32 %v844, %v1208
    %v1277 = vadd.f32 %v845, %v1210
    %v1278 = vadd.f32 %v846, %v1212
    %v1279 = vadd.f32 %v847, %v1214
    %v1280 = vadd.f32 %v848, %v1216
    %v1281 = vadd.f32 %v849, %v1218
    %v1282 = vadd.f32 %v850, %v1220
    %v1283 = vadd.f32 %v851, %v1222
    %v1284 = vadd.f32 %v852, %v1224
    %v1285 = vadd.f32 %v853, %v1226
    %v1286 = vadd.f32 %v854, %v1228
    %v1287 = vadd.f32 %v855, %v1230
    %v1288 = vadd.f32 %v856, %v1232
    %v1289 = vadd.f32 %v857, %v1234
    %v1290 = vadd.f32 %v858, %v1236
    %v1291 = vadd.f32 %v859, %v1238
    %v1292 = vadd.f32 %v860, %v1240
    %v1293 = vadd.f32 %v861, %v1242
    %v1294 = vadd.f32 %v862, %v1244
    %v1295 = vadd.f32 %v863, %v1246
    %v1296 = vadd.f32 %v864, %v1248
    %v1297 = vmul.f32 %v769, 0.8994229
    %v1298 = vmul.f32 %v770, 0.8994229
    %v1299 = vmul.f32 %v771, 0.8994229
    %v1300 = vmul.f32 %v772, 0.8994229
    %v1301 = vmul.f32 %v773, 0.8994229
    %v1302 = vmul.f32 %v774, 0.8994229
    %v1303 = vmul.f32 %v775, 0.8994229
    %v1304 = vmul.f32 %v776, 0.8994229
    %v1305 = vmul.f32 %v777, 0.8994229
    %v1306 = vmul.f32 %v778, 0.8994229
    %v1307 = vmul.f32 %v779, 0.8994229
    %v1308 = vmul.f32 %v780, 0.8994229
    %v1309 = vmul.f32 %v781, 0.8994229
    %v1310 = vmul.f32 %v782, 0.8994229
    %v1311 = vmul.f32 %v783, 0.8994229
    %v1312 = vmul.f32 %v784, 0.8994229
    %v1313 = vmul.f32 %v785, 0.8994229
    %v1314 = vmul.f32 %v786, 0.8994229
    %v1315 = vmul.f32 %v787, 0.8994229
    %v1316 = vmul.f32 %v788, 0.8994229
    %v1317 = vmul.f32 %v789, 0.8994229
    %v1318 = vmul.f32 %v790, 0.8994229
    %v1319 = vmul.f32 %v791, 0.8994229
    %v1320 = vmul.f32 %v792, 0.8994229
    %1345 = vrot.lane.b32.xlu0 %v1297, 126
    %v1346 = vpop.permute.xlu0 %1345
    %1347 = vrot.lane.b32.xlu0 %v1298, 126
    %v1348 = vpop.permute.xlu0 %1347
    %1349 = vrot.lane.b32.xlu0 %v1299, 126
    %v1350 = vpop.permute.xlu0 %1349
    %1351 = vrot.lane.b32.xlu0 %v1300, 126
    %v1352 = vpop.permute.xlu0 %1351
    %1353 = vrot.lane.b32.xlu0 %v1301, 126
    %v1354 = vpop.permute.xlu0 %1353
    %1355 = vrot.lane.b32.xlu0 %v1302, 126
    %v1356 = vpop.permute.xlu0 %1355
    %1357 = vrot.lane.b32.xlu0 %v1303, 126
    %v1358 = vpop.permute.xlu0 %1357
    %1359 = vrot.lane.b32.xlu0 %v1304, 126
    %v1360 = vpop.permute.xlu0 %1359
    %1361 = vrot.lane.b32.xlu0 %v1305, 126
    %v1362 = vpop.permute.xlu0 %1361
    %1363 = vrot.lane.b32.xlu0 %v1306, 126
    %v1364 = vpop.permute.xlu0 %1363
    %1365 = vrot.lane.b32.xlu0 %v1307, 126
    %v1366 = vpop.permute.xlu0 %1365
    %1367 = vrot.lane.b32.xlu0 %v1308, 126
    %v1368 = vpop.permute.xlu0 %1367
    %1369 = vrot.lane.b32.xlu0 %v1309, 126
    %v1370 = vpop.permute.xlu0 %1369
    %1371 = vrot.lane.b32.xlu0 %v1310, 126
    %v1372 = vpop.permute.xlu0 %1371
    %1373 = vrot.lane.b32.xlu0 %v1311, 126
    %v1374 = vpop.permute.xlu0 %1373
    %1375 = vrot.lane.b32.xlu0 %v1312, 126
    %v1376 = vpop.permute.xlu0 %1375
    %1377 = vrot.lane.b32.xlu0 %v1313, 126
    %v1378 = vpop.permute.xlu0 %1377
    %1379 = vrot.lane.b32.xlu0 %v1314, 126
    %v1380 = vpop.permute.xlu0 %1379
    %1381 = vrot.lane.b32.xlu0 %v1315, 126
    %v1382 = vpop.permute.xlu0 %1381
    %1383 = vrot.lane.b32.xlu0 %v1316, 126
    %v1384 = vpop.permute.xlu0 %1383
    %1385 = vrot.lane.b32.xlu0 %v1317, 126
    %v1386 = vpop.permute.xlu0 %1385
    %1387 = vrot.lane.b32.xlu0 %v1318, 126
    %v1388 = vpop.permute.xlu0 %1387
    %1389 = vrot.lane.b32.xlu0 %v1319, 126
    %v1390 = vpop.permute.xlu0 %1389
    %1391 = vrot.lane.b32.xlu0 %v1320, 126
    %v1392 = vpop.permute.xlu0 %1391
    %v1417 = vadd.f32 %v985, %v1346
    %v1418 = vadd.f32 %v986, %v1348
    %v1419 = vadd.f32 %v987, %v1350
    %v1420 = vadd.f32 %v988, %v1352
    %v1421 = vadd.f32 %v989, %v1354
    %v1422 = vadd.f32 %v990, %v1356
    %v1423 = vadd.f32 %v991, %v1358
    %v1424 = vadd.f32 %v992, %v1360
    %v1425 = vadd.f32 %v993, %v1362
    %v1426 = vadd.f32 %v994, %v1364
    %v1427 = vadd.f32 %v995, %v1366
    %v1428 = vadd.f32 %v996, %v1368
    %v1429 = vadd.f32 %v997, %v1370
    %v1430 = vadd.f32 %v998, %v1372
    %v1431 = vadd.f32 %v999, %v1374
    %v1432 = vadd.f32 %v1000, %v1376
    %v1433 = vadd.f32 %v1001, %v1378
    %v1434 = vadd.f32 %v1002, %v1380
    %v1435 = vadd.f32 %v1003, %v1382
    %v1436 = vadd.f32 %v1004, %v1384
    %v1437 = vadd.f32 %v1005, %v1386
    %v1438 = vadd.f32 %v1006, %v1388
    %v1439 = vadd.f32 %v1007, %v1390
    %v1440 = vadd.f32 %v1008, %v1392
    %v1441 = vmul.f32 %v769, -0.07116534
    %v1442 = vmul.f32 %v770, -0.07116534
    %v1443 = vmul.f32 %v771, -0.07116534
    %v1444 = vmul.f32 %v772, -0.07116534
    %v1445 = vmul.f32 %v773, -0.07116534
    %v1446 = vmul.f32 %v774, -0.07116534
    %v1447 = vmul.f32 %v775, -0.07116534
    %v1448 = vmul.f32 %v776, -0.07116534
    %v1449 = vmul.f32 %v777, -0.07116534
    %v1450 = vmul.f32 %v778, -0.07116534
    %v1451 = vmul.f32 %v779, -0.07116534
    %v1452 = vmul.f32 %v780, -0.07116534
    %v1453 = vmul.f32 %v781, -0.07116534
    %v1454 = vmul.f32 %v782, -0.07116534
    %v1455 = vmul.f32 %v783, -0.07116534
    %v1456 = vmul.f32 %v784, -0.07116534
    %v1457 = vmul.f32 %v785, -0.07116534
    %v1458 = vmul.f32 %v786, -0.07116534
    %v1459 = vmul.f32 %v787, -0.07116534
    %v1460 = vmul.f32 %v788, -0.07116534
    %v1461 = vmul.f32 %v789, -0.07116534
    %v1462 = vmul.f32 %v790, -0.07116534
    %v1463 = vmul.f32 %v791, -0.07116534
    %v1464 = vmul.f32 %v792, -0.07116534
    %1489 = vrot.lane.b32.xlu0 %v1441, 126
    %v1490 = vpop.permute.xlu0 %1489
    %1491 = vrot.lane.b32.xlu0 %v1442, 126
    %v1492 = vpop.permute.xlu0 %1491
    %1493 = vrot.lane.b32.xlu0 %v1443, 126
    %v1494 = vpop.permute.xlu0 %1493
    %1495 = vrot.lane.b32.xlu0 %v1444, 126
    %v1496 = vpop.permute.xlu0 %1495
    %1497 = vrot.lane.b32.xlu0 %v1445, 126
    %v1498 = vpop.permute.xlu0 %1497
    %1499 = vrot.lane.b32.xlu0 %v1446, 126
    %v1500 = vpop.permute.xlu0 %1499
    %1501 = vrot.lane.b32.xlu0 %v1447, 126
    %v1502 = vpop.permute.xlu0 %1501
    %1503 = vrot.lane.b32.xlu0 %v1448, 126
    %v1504 = vpop.permute.xlu0 %1503
    %1505 = vrot.lane.b32.xlu0 %v1449, 126
    %v1506 = vpop.permute.xlu0 %1505
    %1507 = vrot.lane.b32.xlu0 %v1450, 126
    %v1508 = vpop.permute.xlu0 %1507
    %1509 = vrot.lane.b32.xlu0 %v1451, 126
    %v1510 = vpop.permute.xlu0 %1509
    %1511 = vrot.lane.b32.xlu0 %v1452, 126
    %v1512 = vpop.permute.xlu0 %1511
    %1513 = vrot.lane.b32.xlu0 %v1453, 126
    %v1514 = vpop.permute.xlu0 %1513
    %1515 = vrot.lane.b32.xlu0 %v1454, 126
    %v1516 = vpop.permute.xlu0 %1515
    %1517 = vrot.lane.b32.xlu0 %v1455, 126
    %v1518 = vpop.permute.xlu0 %1517
    %1519 = vrot.lane.b32.xlu0 %v1456, 126
    %v1520 = vpop.permute.xlu0 %1519
    %1521 = vrot.lane.b32.xlu0 %v1457, 126
    %v1522 = vpop.permute.xlu0 %1521
    %1523 = vrot.lane.b32.xlu0 %v1458, 126
    %v1524 = vpop.permute.xlu0 %1523
    %1525 = vrot.lane.b32.xlu0 %v1459, 126
    %v1526 = vpop.permute.xlu0 %1525
    %1527 = vrot.lane.b32.xlu0 %v1460, 126
    %v1528 = vpop.permute.xlu0 %1527
    %1529 = vrot.lane.b32.xlu0 %v1461, 126
    %v1530 = vpop.permute.xlu0 %1529
    %1531 = vrot.lane.b32.xlu0 %v1462, 126
    %v1532 = vpop.permute.xlu0 %1531
    %1533 = vrot.lane.b32.xlu0 %v1463, 126
    %v1534 = vpop.permute.xlu0 %1533
    %1535 = vrot.lane.b32.xlu0 %v1464, 126
    %v1536 = vpop.permute.xlu0 %1535
    %v1561 = vadd.f32 %v1129, %v1490
    %v1562 = vadd.f32 %v1130, %v1492
    %v1563 = vadd.f32 %v1131, %v1494
    %v1564 = vadd.f32 %v1132, %v1496
    %v1565 = vadd.f32 %v1133, %v1498
    %v1566 = vadd.f32 %v1134, %v1500
    %v1567 = vadd.f32 %v1135, %v1502
    %v1568 = vadd.f32 %v1136, %v1504
    %v1569 = vadd.f32 %v1137, %v1506
    %v1570 = vadd.f32 %v1138, %v1508
    %v1571 = vadd.f32 %v1139, %v1510
    %v1572 = vadd.f32 %v1140, %v1512
    %v1573 = vadd.f32 %v1141, %v1514
    %v1574 = vadd.f32 %v1142, %v1516
    %v1575 = vadd.f32 %v1143, %v1518
    %v1576 = vadd.f32 %v1144, %v1520
    %v1577 = vadd.f32 %v1145, %v1522
    %v1578 = vadd.f32 %v1146, %v1524
    %v1579 = vadd.f32 %v1147, %v1526
    %v1580 = vadd.f32 %v1148, %v1528
    %v1581 = vadd.f32 %v1149, %v1530
    %v1582 = vadd.f32 %v1150, %v1532
    %v1583 = vadd.f32 %v1151, %v1534
    %v1584 = vadd.f32 %v1152, %v1536
    %v1585 = vmul.f32 %v769, -0.43124697
    %v1586 = vmul.f32 %v770, -0.43124697
    %v1587 = vmul.f32 %v771, -0.43124697
    %v1588 = vmul.f32 %v772, -0.43124697
    %v1589 = vmul.f32 %v773, -0.43124697
    %v1590 = vmul.f32 %v774, -0.43124697
    %v1591 = vmul.f32 %v775, -0.43124697
    %v1592 = vmul.f32 %v776, -0.43124697
    %v1593 = vmul.f32 %v777, -0.43124697
    %v1594 = vmul.f32 %v778, -0.43124697
    %v1595 = vmul.f32 %v779, -0.43124697
    %v1596 = vmul.f32 %v780, -0.43124697
    %v1597 = vmul.f32 %v781, -0.43124697
    %v1598 = vmul.f32 %v782, -0.43124697
    %v1599 = vmul.f32 %v783, -0.43124697
    %v1600 = vmul.f32 %v784, -0.43124697
    %v1601 = vmul.f32 %v785, -0.43124697
    %v1602 = vmul.f32 %v786, -0.43124697
    %v1603 = vmul.f32 %v787, -0.43124697
    %v1604 = vmul.f32 %v788, -0.43124697
    %v1605 = vmul.f32 %v789, -0.43124697
    %v1606 = vmul.f32 %v790, -0.43124697
    %v1607 = vmul.f32 %v791, -0.43124697
    %v1608 = vmul.f32 %v792, -0.43124697
    %1633 = vrot.lane.b32.xlu0 %v1585, 126
    %v1634 = vpop.permute.xlu0 %1633
    %1635 = vrot.lane.b32.xlu0 %v1586, 126
    %v1636 = vpop.permute.xlu0 %1635
    %1637 = vrot.lane.b32.xlu0 %v1587, 126
    %v1638 = vpop.permute.xlu0 %1637
    %1639 = vrot.lane.b32.xlu0 %v1588, 126
    %v1640 = vpop.permute.xlu0 %1639
    %1641 = vrot.lane.b32.xlu0 %v1589, 126
    %v1642 = vpop.permute.xlu0 %1641
    %1643 = vrot.lane.b32.xlu0 %v1590, 126
    %v1644 = vpop.permute.xlu0 %1643
    %1645 = vrot.lane.b32.xlu0 %v1591, 126
    %v1646 = vpop.permute.xlu0 %1645
    %1647 = vrot.lane.b32.xlu0 %v1592, 126
    %v1648 = vpop.permute.xlu0 %1647
    %1649 = vrot.lane.b32.xlu0 %v1593, 126
    %v1650 = vpop.permute.xlu0 %1649
    %1651 = vrot.lane.b32.xlu0 %v1594, 126
    %v1652 = vpop.permute.xlu0 %1651
    %1653 = vrot.lane.b32.xlu0 %v1595, 126
    %v1654 = vpop.permute.xlu0 %1653
    %1655 = vrot.lane.b32.xlu0 %v1596, 126
    %v1656 = vpop.permute.xlu0 %1655
    %1657 = vrot.lane.b32.xlu0 %v1597, 126
    %v1658 = vpop.permute.xlu0 %1657
    %1659 = vrot.lane.b32.xlu0 %v1598, 126
    %v1660 = vpop.permute.xlu0 %1659
    %1661 = vrot.lane.b32.xlu0 %v1599, 126
    %v1662 = vpop.permute.xlu0 %1661
    %1663 = vrot.lane.b32.xlu0 %v1600, 126
    %v1664 = vpop.permute.xlu0 %1663
    %1665 = vrot.lane.b32.xlu0 %v1601, 126
    %v1666 = vpop.permute.xlu0 %1665
    %1667 = vrot.lane.b32.xlu0 %v1602, 126
    %v1668 = vpop.permute.xlu0 %1667
    %1669 = vrot.lane.b32.xlu0 %v1603, 126
    %v1670 = vpop.permute.xlu0 %1669
    %1671 = vrot.lane.b32.xlu0 %v1604, 126
    %v1672 = vpop.permute.xlu0 %1671
    %1673 = vrot.lane.b32.xlu0 %v1605, 126
    %v1674 = vpop.permute.xlu0 %1673
    %1675 = vrot.lane.b32.xlu0 %v1606, 126
    %v1676 = vpop.permute.xlu0 %1675
    %1677 = vrot.lane.b32.xlu0 %v1607, 126
    %v1678 = vpop.permute.xlu0 %1677
    %1679 = vrot.lane.b32.xlu0 %v1608, 126
    %v1680 = vpop.permute.xlu0 %1679
    %v1705 = vadd.f32 %v1273, %v1634
    %v1706 = vadd.f32 %v1274, %v1636
    %v1707 = vadd.f32 %v1275, %v1638
    %v1708 = vadd.f32 %v1276, %v1640
    %v1709 = vadd.f32 %v1277, %v1642
    %v1710 = vadd.f32 %v1278, %v1644
    %v1711 = vadd.f32 %v1279, %v1646
    %v1712 = vadd.f32 %v1280, %v1648
    %v1713 = vadd.f32 %v1281, %v1650
    %v1714 = vadd.f32 %v1282, %v1652
    %v1715 = vadd.f32 %v1283, %v1654
    %v1716 = vadd.f32 %v1284, %v1656
    %v1717 = vadd.f32 %v1285, %v1658
    %v1718 = vadd.f32 %v1286, %v1660
    %v1719 = vadd.f32 %v1287, %v1662
    %v1720 = vadd.f32 %v1288, %v1664
    %v1721 = vadd.f32 %v1289, %v1666
    %v1722 = vadd.f32 %v1290, %v1668
    %v1723 = vadd.f32 %v1291, %v1670
    %v1724 = vadd.f32 %v1292, %v1672
    %v1725 = vadd.f32 %v1293, %v1674
    %v1726 = vadd.f32 %v1294, %v1676
    %v1727 = vadd.f32 %v1295, %v1678
    %v1728 = vadd.f32 %v1296, %v1680
    %1729 = vrot.lane.b32.xlu0 %v865, 125
    %v1730 = vpop.permute.xlu0 %1729
    %1731 = vrot.lane.b32.xlu0 %v866, 125
    %v1732 = vpop.permute.xlu0 %1731
    %1733 = vrot.lane.b32.xlu0 %v867, 125
    %v1734 = vpop.permute.xlu0 %1733
    %1735 = vrot.lane.b32.xlu0 %v868, 125
    %v1736 = vpop.permute.xlu0 %1735
    %1737 = vrot.lane.b32.xlu0 %v869, 125
    %v1738 = vpop.permute.xlu0 %1737
    %1739 = vrot.lane.b32.xlu0 %v870, 125
    %v1740 = vpop.permute.xlu0 %1739
    %1741 = vrot.lane.b32.xlu0 %v871, 125
    %v1742 = vpop.permute.xlu0 %1741
    %1743 = vrot.lane.b32.xlu0 %v872, 125
    %v1744 = vpop.permute.xlu0 %1743
    %1745 = vrot.lane.b32.xlu0 %v873, 125
    %v1746 = vpop.permute.xlu0 %1745
    %1747 = vrot.lane.b32.xlu0 %v874, 125
    %v1748 = vpop.permute.xlu0 %1747
    %1749 = vrot.lane.b32.xlu0 %v875, 125
    %v1750 = vpop.permute.xlu0 %1749
    %1751 = vrot.lane.b32.xlu0 %v876, 125
    %v1752 = vpop.permute.xlu0 %1751
    %1753 = vrot.lane.b32.xlu0 %v877, 125
    %v1754 = vpop.permute.xlu0 %1753
    %1755 = vrot.lane.b32.xlu0 %v878, 125
    %v1756 = vpop.permute.xlu0 %1755
    %1757 = vrot.lane.b32.xlu0 %v879, 125
    %v1758 = vpop.permute.xlu0 %1757
    %1759 = vrot.lane.b32.xlu0 %v880, 125
    %v1760 = vpop.permute.xlu0 %1759
    %1761 = vrot.lane.b32.xlu0 %v881, 125
    %v1762 = vpop.permute.xlu0 %1761
    %1763 = vrot.lane.b32.xlu0 %v882, 125
    %v1764 = vpop.permute.xlu0 %1763
    %1765 = vrot.lane.b32.xlu0 %v883, 125
    %v1766 = vpop.permute.xlu0 %1765
    %1767 = vrot.lane.b32.xlu0 %v884, 125
    %v1768 = vpop.permute.xlu0 %1767
    %1769 = vrot.lane.b32.xlu0 %v885, 125
    %v1770 = vpop.permute.xlu0 %1769
    %1771 = vrot.lane.b32.xlu0 %v886, 125
    %v1772 = vpop.permute.xlu0 %1771
    %1773 = vrot.lane.b32.xlu0 %v887, 125
    %v1774 = vpop.permute.xlu0 %1773
    %1775 = vrot.lane.b32.xlu0 %v888, 125
    %v1776 = vpop.permute.xlu0 %1775
    %v1801 = vadd.f32 %v1417, %v1730
    %v1802 = vadd.f32 %v1418, %v1732
    %v1803 = vadd.f32 %v1419, %v1734
    %v1804 = vadd.f32 %v1420, %v1736
    %v1805 = vadd.f32 %v1421, %v1738
    %v1806 = vadd.f32 %v1422, %v1740
    %v1807 = vadd.f32 %v1423, %v1742
    %v1808 = vadd.f32 %v1424, %v1744
    %v1809 = vadd.f32 %v1425, %v1746
    %v1810 = vadd.f32 %v1426, %v1748
    %v1811 = vadd.f32 %v1427, %v1750
    %v1812 = vadd.f32 %v1428, %v1752
    %v1813 = vadd.f32 %v1429, %v1754
    %v1814 = vadd.f32 %v1430, %v1756
    %v1815 = vadd.f32 %v1431, %v1758
    %v1816 = vadd.f32 %v1432, %v1760
    %v1817 = vadd.f32 %v1433, %v1762
    %v1818 = vadd.f32 %v1434, %v1764
    %v1819 = vadd.f32 %v1435, %v1766
    %v1820 = vadd.f32 %v1436, %v1768
    %v1821 = vadd.f32 %v1437, %v1770
    %v1822 = vadd.f32 %v1438, %v1772
    %v1823 = vadd.f32 %v1439, %v1774
    %v1824 = vadd.f32 %v1440, %v1776
    %1825 = vrot.lane.b32.xlu0 %v1009, 125
    %v1826 = vpop.permute.xlu0 %1825
    %1827 = vrot.lane.b32.xlu0 %v1010, 125
    %v1828 = vpop.permute.xlu0 %1827
    %1829 = vrot.lane.b32.xlu0 %v1011, 125
    %v1830 = vpop.permute.xlu0 %1829
    %1831 = vrot.lane.b32.xlu0 %v1012, 125
    %v1832 = vpop.permute.xlu0 %1831
    %1833 = vrot.lane.b32.xlu0 %v1013, 125
    %v1834 = vpop.permute.xlu0 %1833
    %1835 = vrot.lane.b32.xlu0 %v1014, 125
    %v1836 = vpop.permute.xlu0 %1835
    %1837 = vrot.lane.b32.xlu0 %v1015, 125
    %v1838 = vpop.permute.xlu0 %1837
    %1839 = vrot.lane.b32.xlu0 %v1016, 125
    %v1840 = vpop.permute.xlu0 %1839
    %1841 = vrot.lane.b32.xlu0 %v1017, 125
    %v1842 = vpop.permute.xlu0 %1841
    %1843 = vrot.lane.b32.xlu0 %v1018, 125
    %v1844 = vpop.permute.xlu0 %1843
    %1845 = vrot.lane.b32.xlu0 %v1019, 125
    %v1846 = vpop.permute.xlu0 %1845
    %1847 = vrot.lane.b32.xlu0 %v1020, 125
    %v1848 = vpop.permute.xlu0 %1847
    %1849 = vrot.lane.b32.xlu0 %v1021, 125
    %v1850 = vpop.permute.xlu0 %1849
    %1851 = vrot.lane.b32.xlu0 %v1022, 125
    %v1852 = vpop.permute.xlu0 %1851
    %1853 = vrot.lane.b32.xlu0 %v1023, 125
    %v1854 = vpop.permute.xlu0 %1853
    %1855 = vrot.lane.b32.xlu0 %v1024, 125
    %v1856 = vpop.permute.xlu0 %1855
    %1857 = vrot.lane.b32.xlu0 %v1025, 125
    %v1858 = vpop.permute.xlu0 %1857
    %1859 = vrot.lane.b32.xlu0 %v1026, 125
    %v1860 = vpop.permute.xlu0 %1859
    %1861 = vrot.lane.b32.xlu0 %v1027, 125
    %v1862 = vpop.permute.xlu0 %1861
    %1863 = vrot.lane.b32.xlu0 %v1028, 125
    %v1864 = vpop.permute.xlu0 %1863
    %1865 = vrot.lane.b32.xlu0 %v1029, 125
    %v1866 = vpop.permute.xlu0 %1865
    %1867 = vrot.lane.b32.xlu0 %v1030, 125
    %v1868 = vpop.permute.xlu0 %1867
    %1869 = vrot.lane.b32.xlu0 %v1031, 125
    %v1870 = vpop.permute.xlu0 %1869
    %1871 = vrot.lane.b32.xlu0 %v1032, 125
    %v1872 = vpop.permute.xlu0 %1871
    %v1897 = vadd.f32 %v1561, %v1826
    %v1898 = vadd.f32 %v1562, %v1828
    %v1899 = vadd.f32 %v1563, %v1830
    %v1900 = vadd.f32 %v1564, %v1832
    %v1901 = vadd.f32 %v1565, %v1834
    %v1902 = vadd.f32 %v1566, %v1836
    %v1903 = vadd.f32 %v1567, %v1838
    %v1904 = vadd.f32 %v1568, %v1840
    %v1905 = vadd.f32 %v1569, %v1842
    %v1906 = vadd.f32 %v1570, %v1844
    %v1907 = vadd.f32 %v1571, %v1846
    %v1908 = vadd.f32 %v1572, %v1848
    %v1909 = vadd.f32 %v1573, %v1850
    %v1910 = vadd.f32 %v1574, %v1852
    %v1911 = vadd.f32 %v1575, %v1854
    %v1912 = vadd.f32 %v1576, %v1856
    %v1913 = vadd.f32 %v1577, %v1858
    %v1914 = vadd.f32 %v1578, %v1860
    %v1915 = vadd.f32 %v1579, %v1862
    %v1916 = vadd.f32 %v1580, %v1864
    %v1917 = vadd.f32 %v1581, %v1866
    %v1918 = vadd.f32 %v1582, %v1868
    %v1919 = vadd.f32 %v1583, %v1870
    %v1920 = vadd.f32 %v1584, %v1872
    %v1921 = vmul.f32 %v769, 0.4615814
    %v1922 = vmul.f32 %v770, 0.4615814
    %v1923 = vmul.f32 %v771, 0.4615814
    %v1924 = vmul.f32 %v772, 0.4615814
    %v1925 = vmul.f32 %v773, 0.4615814
    %v1926 = vmul.f32 %v774, 0.4615814
    %v1927 = vmul.f32 %v775, 0.4615814
    %v1928 = vmul.f32 %v776, 0.4615814
    %v1929 = vmul.f32 %v777, 0.4615814
    %v1930 = vmul.f32 %v778, 0.4615814
    %v1931 = vmul.f32 %v779, 0.4615814
    %v1932 = vmul.f32 %v780, 0.4615814
    %v1933 = vmul.f32 %v781, 0.4615814
    %v1934 = vmul.f32 %v782, 0.4615814
    %v1935 = vmul.f32 %v783, 0.4615814
    %v1936 = vmul.f32 %v784, 0.4615814
    %v1937 = vmul.f32 %v785, 0.4615814
    %v1938 = vmul.f32 %v786, 0.4615814
    %v1939 = vmul.f32 %v787, 0.4615814
    %v1940 = vmul.f32 %v788, 0.4615814
    %v1941 = vmul.f32 %v789, 0.4615814
    %v1942 = vmul.f32 %v790, 0.4615814
    %v1943 = vmul.f32 %v791, 0.4615814
    %v1944 = vmul.f32 %v792, 0.4615814
    %1969 = vrot.lane.b32.xlu0 %v1921, 125
    %v1970 = vpop.permute.xlu0 %1969
    %1971 = vrot.lane.b32.xlu0 %v1922, 125
    %v1972 = vpop.permute.xlu0 %1971
    %1973 = vrot.lane.b32.xlu0 %v1923, 125
    %v1974 = vpop.permute.xlu0 %1973
    %1975 = vrot.lane.b32.xlu0 %v1924, 125
    %v1976 = vpop.permute.xlu0 %1975
    %1977 = vrot.lane.b32.xlu0 %v1925, 125
    %v1978 = vpop.permute.xlu0 %1977
    %1979 = vrot.lane.b32.xlu0 %v1926, 125
    %v1980 = vpop.permute.xlu0 %1979
    %1981 = vrot.lane.b32.xlu0 %v1927, 125
    %v1982 = vpop.permute.xlu0 %1981
    %1983 = vrot.lane.b32.xlu0 %v1928, 125
    %v1984 = vpop.permute.xlu0 %1983
    %1985 = vrot.lane.b32.xlu0 %v1929, 125
    %v1986 = vpop.permute.xlu0 %1985
    %1987 = vrot.lane.b32.xlu0 %v1930, 125
    %v1988 = vpop.permute.xlu0 %1987
    %1989 = vrot.lane.b32.xlu0 %v1931, 125
    %v1990 = vpop.permute.xlu0 %1989
    %1991 = vrot.lane.b32.xlu0 %v1932, 125
    %v1992 = vpop.permute.xlu0 %1991
    %1993 = vrot.lane.b32.xlu0 %v1933, 125
    %v1994 = vpop.permute.xlu0 %1993
    %1995 = vrot.lane.b32.xlu0 %v1934, 125
    %v1996 = vpop.permute.xlu0 %1995
    %1997 = vrot.lane.b32.xlu0 %v1935, 125
    %v1998 = vpop.permute.xlu0 %1997
    %1999 = vrot.lane.b32.xlu0 %v1936, 125
    %v2000 = vpop.permute.xlu0 %1999
    %2001 = vrot.lane.b32.xlu0 %v1937, 125
    %v2002 = vpop.permute.xlu0 %2001
    %2003 = vrot.lane.b32.xlu0 %v1938, 125
    %v2004 = vpop.permute.xlu0 %2003
    %2005 = vrot.lane.b32.xlu0 %v1939, 125
    %v2006 = vpop.permute.xlu0 %2005
    %2007 = vrot.lane.b32.xlu0 %v1940, 125
    %v2008 = vpop.permute.xlu0 %2007
    %2009 = vrot.lane.b32.xlu0 %v1941, 125
    %v2010 = vpop.permute.xlu0 %2009
    %2011 = vrot.lane.b32.xlu0 %v1942, 125
    %v2012 = vpop.permute.xlu0 %2011
    %2013 = vrot.lane.b32.xlu0 %v1943, 125
    %v2014 = vpop.permute.xlu0 %2013
    %2015 = vrot.lane.b32.xlu0 %v1944, 125
    %v2016 = vpop.permute.xlu0 %2015
    %v2041 = vadd.f32 %v1705, %v1970
    %v2042 = vadd.f32 %v1706, %v1972
    %v2043 = vadd.f32 %v1707, %v1974
    %v2044 = vadd.f32 %v1708, %v1976
    %v2045 = vadd.f32 %v1709, %v1978
    %v2046 = vadd.f32 %v1710, %v1980
    %v2047 = vadd.f32 %v1711, %v1982
    %v2048 = vadd.f32 %v1712, %v1984
    %v2049 = vadd.f32 %v1713, %v1986
    %v2050 = vadd.f32 %v1714, %v1988
    %v2051 = vadd.f32 %v1715, %v1990
    %v2052 = vadd.f32 %v1716, %v1992
    %v2053 = vadd.f32 %v1717, %v1994
    %v2054 = vadd.f32 %v1718, %v1996
    %v2055 = vadd.f32 %v1719, %v1998
    %v2056 = vadd.f32 %v1720, %v2000
    %v2057 = vadd.f32 %v1721, %v2002
    %v2058 = vadd.f32 %v1722, %v2004
    %v2059 = vadd.f32 %v1723, %v2006
    %v2060 = vadd.f32 %v1724, %v2008
    %v2061 = vadd.f32 %v1725, %v2010
    %v2062 = vadd.f32 %v1726, %v2012
    %v2063 = vadd.f32 %v1727, %v2014
    %v2064 = vadd.f32 %v1728, %v2016
    %2089 = vrot.lane.b32.xlu0 %v793, 124
    %v2090 = vpop.permute.xlu0 %2089
    %2091 = vrot.lane.b32.xlu0 %v794, 124
    %v2092 = vpop.permute.xlu0 %2091
    %2093 = vrot.lane.b32.xlu0 %v795, 124
    %v2094 = vpop.permute.xlu0 %2093
    %2095 = vrot.lane.b32.xlu0 %v796, 124
    %v2096 = vpop.permute.xlu0 %2095
    %2097 = vrot.lane.b32.xlu0 %v797, 124
    %v2098 = vpop.permute.xlu0 %2097
    %2099 = vrot.lane.b32.xlu0 %v798, 124
    %v2100 = vpop.permute.xlu0 %2099
    %2101 = vrot.lane.b32.xlu0 %v799, 124
    %v2102 = vpop.permute.xlu0 %2101
    %2103 = vrot.lane.b32.xlu0 %v800, 124
    %v2104 = vpop.permute.xlu0 %2103
    %2105 = vrot.lane.b32.xlu0 %v801, 124
    %v2106 = vpop.permute.xlu0 %2105
    %2107 = vrot.lane.b32.xlu0 %v802, 124
    %v2108 = vpop.permute.xlu0 %2107
    %2109 = vrot.lane.b32.xlu0 %v803, 124
    %v2110 = vpop.permute.xlu0 %2109
    %2111 = vrot.lane.b32.xlu0 %v804, 124
    %v2112 = vpop.permute.xlu0 %2111
    %2113 = vrot.lane.b32.xlu0 %v805, 124
    %v2114 = vpop.permute.xlu0 %2113
    %2115 = vrot.lane.b32.xlu0 %v806, 124
    %v2116 = vpop.permute.xlu0 %2115
    %2117 = vrot.lane.b32.xlu0 %v807, 124
    %v2118 = vpop.permute.xlu0 %2117
    %2119 = vrot.lane.b32.xlu0 %v808, 124
    %v2120 = vpop.permute.xlu0 %2119
    %2121 = vrot.lane.b32.xlu0 %v809, 124
    %v2122 = vpop.permute.xlu0 %2121
    %2123 = vrot.lane.b32.xlu0 %v810, 124
    %v2124 = vpop.permute.xlu0 %2123
    %2125 = vrot.lane.b32.xlu0 %v811, 124
    %v2126 = vpop.permute.xlu0 %2125
    %2127 = vrot.lane.b32.xlu0 %v812, 124
    %v2128 = vpop.permute.xlu0 %2127
    %2129 = vrot.lane.b32.xlu0 %v813, 124
    %v2130 = vpop.permute.xlu0 %2129
    %2131 = vrot.lane.b32.xlu0 %v814, 124
    %v2132 = vpop.permute.xlu0 %2131
    %2133 = vrot.lane.b32.xlu0 %v815, 124
    %v2134 = vpop.permute.xlu0 %2133
    %2135 = vrot.lane.b32.xlu0 %v816, 124
    %v2136 = vpop.permute.xlu0 %2135
    %v2161 = vadd.f32 %v1801, %v2090
    %v2162 = vadd.f32 %v1802, %v2092
    %v2163 = vadd.f32 %v1803, %v2094
    %v2164 = vadd.f32 %v1804, %v2096
    %v2165 = vadd.f32 %v1805, %v2098
    %v2166 = vadd.f32 %v1806, %v2100
    %v2167 = vadd.f32 %v1807, %v2102
    %v2168 = vadd.f32 %v1808, %v2104
    %v2169 = vadd.f32 %v1809, %v2106
    %v2170 = vadd.f32 %v1810, %v2108
    %v2171 = vadd.f32 %v1811, %v2110
    %v2172 = vadd.f32 %v1812, %v2112
    %v2173 = vadd.f32 %v1813, %v2114
    %v2174 = vadd.f32 %v1814, %v2116
    %v2175 = vadd.f32 %v1815, %v2118
    %v2176 = vadd.f32 %v1816, %v2120
    %v2177 = vadd.f32 %v1817, %v2122
    %v2178 = vadd.f32 %v1818, %v2124
    %v2179 = vadd.f32 %v1819, %v2126
    %v2180 = vadd.f32 %v1820, %v2128
    %v2181 = vadd.f32 %v1821, %v2130
    %v2182 = vadd.f32 %v1822, %v2132
    %v2183 = vadd.f32 %v1823, %v2134
    %v2184 = vadd.f32 %v1824, %v2136
    %2209 = vrot.lane.b32.xlu0 %v817, 124
    %v2210 = vpop.permute.xlu0 %2209
    %2211 = vrot.lane.b32.xlu0 %v818, 124
    %v2212 = vpop.permute.xlu0 %2211
    %2213 = vrot.lane.b32.xlu0 %v819, 124
    %v2214 = vpop.permute.xlu0 %2213
    %2215 = vrot.lane.b32.xlu0 %v820, 124
    %v2216 = vpop.permute.xlu0 %2215
    %2217 = vrot.lane.b32.xlu0 %v821, 124
    %v2218 = vpop.permute.xlu0 %2217
    %2219 = vrot.lane.b32.xlu0 %v822, 124
    %v2220 = vpop.permute.xlu0 %2219
    %2221 = vrot.lane.b32.xlu0 %v823, 124
    %v2222 = vpop.permute.xlu0 %2221
    %2223 = vrot.lane.b32.xlu0 %v824, 124
    %v2224 = vpop.permute.xlu0 %2223
    %2225 = vrot.lane.b32.xlu0 %v825, 124
    %v2226 = vpop.permute.xlu0 %2225
    %2227 = vrot.lane.b32.xlu0 %v826, 124
    %v2228 = vpop.permute.xlu0 %2227
    %2229 = vrot.lane.b32.xlu0 %v827, 124
    %v2230 = vpop.permute.xlu0 %2229
    %2231 = vrot.lane.b32.xlu0 %v828, 124
    %v2232 = vpop.permute.xlu0 %2231
    %2233 = vrot.lane.b32.xlu0 %v829, 124
    %v2234 = vpop.permute.xlu0 %2233
    %2235 = vrot.lane.b32.xlu0 %v830, 124
    %v2236 = vpop.permute.xlu0 %2235
    %2237 = vrot.lane.b32.xlu0 %v831, 124
    %v2238 = vpop.permute.xlu0 %2237
    %2239 = vrot.lane.b32.xlu0 %v832, 124
    %v2240 = vpop.permute.xlu0 %2239
    %2241 = vrot.lane.b32.xlu0 %v833, 124
    %v2242 = vpop.permute.xlu0 %2241
    %2243 = vrot.lane.b32.xlu0 %v834, 124
    %v2244 = vpop.permute.xlu0 %2243
    %2245 = vrot.lane.b32.xlu0 %v835, 124
    %v2246 = vpop.permute.xlu0 %2245
    %2247 = vrot.lane.b32.xlu0 %v836, 124
    %v2248 = vpop.permute.xlu0 %2247
    %2249 = vrot.lane.b32.xlu0 %v837, 124
    %v2250 = vpop.permute.xlu0 %2249
    %2251 = vrot.lane.b32.xlu0 %v838, 124
    %v2252 = vpop.permute.xlu0 %2251
    %2253 = vrot.lane.b32.xlu0 %v839, 124
    %v2254 = vpop.permute.xlu0 %2253
    %2255 = vrot.lane.b32.xlu0 %v840, 124
    %v2256 = vpop.permute.xlu0 %2255
    %v2281 = vadd.f32 %v1897, %v2210
    %v2282 = vadd.f32 %v1898, %v2212
    %v2283 = vadd.f32 %v1899, %v2214
    %v2284 = vadd.f32 %v1900, %v2216
    %v2285 = vadd.f32 %v1901, %v2218
    %v2286 = vadd.f32 %v1902, %v2220
    %v2287 = vadd.f32 %v1903, %v2222
    %v2288 = vadd.f32 %v1904, %v2224
    %v2289 = vadd.f32 %v1905, %v2226
    %v2290 = vadd.f32 %v1906, %v2228
    %v2291 = vadd.f32 %v1907, %v2230
    %v2292 = vadd.f32 %v1908, %v2232
    %v2293 = vadd.f32 %v1909, %v2234
    %v2294 = vadd.f32 %v1910, %v2236
    %v2295 = vadd.f32 %v1911, %v2238
    %v2296 = vadd.f32 %v1912, %v2240
    %v2297 = vadd.f32 %v1913, %v2242
    %v2298 = vadd.f32 %v1914, %v2244
    %v2299 = vadd.f32 %v1915, %v2246
    %v2300 = vadd.f32 %v1916, %v2248
    %v2301 = vadd.f32 %v1917, %v2250
    %v2302 = vadd.f32 %v1918, %v2252
    %v2303 = vadd.f32 %v1919, %v2254
    %v2304 = vadd.f32 %v1920, %v2256
    %v2305 = vmul.f32 %v769, -0.4404039
    %v2306 = vmul.f32 %v770, -0.4404039
    %v2307 = vmul.f32 %v771, -0.4404039
    %v2308 = vmul.f32 %v772, -0.4404039
    %v2309 = vmul.f32 %v773, -0.4404039
    %v2310 = vmul.f32 %v774, -0.4404039
    %v2311 = vmul.f32 %v775, -0.4404039
    %v2312 = vmul.f32 %v776, -0.4404039
    %v2313 = vmul.f32 %v777, -0.4404039
    %v2314 = vmul.f32 %v778, -0.4404039
    %v2315 = vmul.f32 %v779, -0.4404039
    %v2316 = vmul.f32 %v780, -0.4404039
    %v2317 = vmul.f32 %v781, -0.4404039
    %v2318 = vmul.f32 %v782, -0.4404039
    %v2319 = vmul.f32 %v783, -0.4404039
    %v2320 = vmul.f32 %v784, -0.4404039
    %v2321 = vmul.f32 %v785, -0.4404039
    %v2322 = vmul.f32 %v786, -0.4404039
    %v2323 = vmul.f32 %v787, -0.4404039
    %v2324 = vmul.f32 %v788, -0.4404039
    %v2325 = vmul.f32 %v789, -0.4404039
    %v2326 = vmul.f32 %v790, -0.4404039
    %v2327 = vmul.f32 %v791, -0.4404039
    %v2328 = vmul.f32 %v792, -0.4404039
    %2353 = vrot.lane.b32.xlu0 %v2305, 124
    %v2354 = vpop.permute.xlu0 %2353
    %2355 = vrot.lane.b32.xlu0 %v2306, 124
    %v2356 = vpop.permute.xlu0 %2355
    %2357 = vrot.lane.b32.xlu0 %v2307, 124
    %v2358 = vpop.permute.xlu0 %2357
    %2359 = vrot.lane.b32.xlu0 %v2308, 124
    %v2360 = vpop.permute.xlu0 %2359
    %2361 = vrot.lane.b32.xlu0 %v2309, 124
    %v2362 = vpop.permute.xlu0 %2361
    %2363 = vrot.lane.b32.xlu0 %v2310, 124
    %v2364 = vpop.permute.xlu0 %2363
    %2365 = vrot.lane.b32.xlu0 %v2311, 124
    %v2366 = vpop.permute.xlu0 %2365
    %2367 = vrot.lane.b32.xlu0 %v2312, 124
    %v2368 = vpop.permute.xlu0 %2367
    %2369 = vrot.lane.b32.xlu0 %v2313, 124
    %v2370 = vpop.permute.xlu0 %2369
    %2371 = vrot.lane.b32.xlu0 %v2314, 124
    %v2372 = vpop.permute.xlu0 %2371
    %2373 = vrot.lane.b32.xlu0 %v2315, 124
    %v2374 = vpop.permute.xlu0 %2373
    %2375 = vrot.lane.b32.xlu0 %v2316, 124
    %v2376 = vpop.permute.xlu0 %2375
    %2377 = vrot.lane.b32.xlu0 %v2317, 124
    %v2378 = vpop.permute.xlu0 %2377
    %2379 = vrot.lane.b32.xlu0 %v2318, 124
    %v2380 = vpop.permute.xlu0 %2379
    %2381 = vrot.lane.b32.xlu0 %v2319, 124
    %v2382 = vpop.permute.xlu0 %2381
    %2383 = vrot.lane.b32.xlu0 %v2320, 124
    %v2384 = vpop.permute.xlu0 %2383
    %2385 = vrot.lane.b32.xlu0 %v2321, 124
    %v2386 = vpop.permute.xlu0 %2385
    %2387 = vrot.lane.b32.xlu0 %v2322, 124
    %v2388 = vpop.permute.xlu0 %2387
    %2389 = vrot.lane.b32.xlu0 %v2323, 124
    %v2390 = vpop.permute.xlu0 %2389
    %2391 = vrot.lane.b32.xlu0 %v2324, 124
    %v2392 = vpop.permute.xlu0 %2391
    %2393 = vrot.lane.b32.xlu0 %v2325, 124
    %v2394 = vpop.permute.xlu0 %2393
    %2395 = vrot.lane.b32.xlu0 %v2326, 124
    %v2396 = vpop.permute.xlu0 %2395
    %2397 = vrot.lane.b32.xlu0 %v2327, 124
    %v2398 = vpop.permute.xlu0 %2397
    %2399 = vrot.lane.b32.xlu0 %v2328, 124
    %v2400 = vpop.permute.xlu0 %2399
    %v2425 = vadd.f32 %v2041, %v2354
    %v2426 = vadd.f32 %v2042, %v2356
    %v2427 = vadd.f32 %v2043, %v2358
    %v2428 = vadd.f32 %v2044, %v2360
    %v2429 = vadd.f32 %v2045, %v2362
    %v2430 = vadd.f32 %v2046, %v2364
    %v2431 = vadd.f32 %v2047, %v2366
    %v2432 = vadd.f32 %v2048, %v2368
    %v2433 = vadd.f32 %v2049, %v2370
    %v2434 = vadd.f32 %v2050, %v2372
    %v2435 = vadd.f32 %v2051, %v2374
    %v2436 = vadd.f32 %v2052, %v2376
    %v2437 = vadd.f32 %v2053, %v2378
    %v2438 = vadd.f32 %v2054, %v2380
    %v2439 = vadd.f32 %v2055, %v2382
    %v2440 = vadd.f32 %v2056, %v2384
    %v2441 = vadd.f32 %v2057, %v2386
    %v2442 = vadd.f32 %v2058, %v2388
    %v2443 = vadd.f32 %v2059, %v2390
    %v2444 = vadd.f32 %v2060, %v2392
    %v2445 = vadd.f32 %v2061, %v2394
    %v2446 = vadd.f32 %v2062, %v2396
    %v2447 = vadd.f32 %v2063, %v2398
    %v2448 = vadd.f32 %v2064, %v2400
    %v2449 = vmul.f32 %v2161, 0.06682436
    %v2450 = vmul.f32 %v2162, 0.06682436
    %v2451 = vmul.f32 %v2164, 0.06682436
    %v2452 = vmul.f32 %v2165, 0.06682436
    %v2453 = vmul.f32 %v2167, 0.06682436
    %v2454 = vmul.f32 %v2168, 0.06682436
    %v2455 = vmul.f32 %v2170, 0.06682436
    %v2456 = vmul.f32 %v2171, 0.06682436
    %v2457 = vmul.f32 %v2173, 0.06682436
    %v2458 = vmul.f32 %v2174, 0.06682436
    %v2459 = vmul.f32 %v2176, 0.06682436
    %v2460 = vmul.f32 %v2177, 0.06682436
    %v2461 = vmul.f32 %v2179, 0.06682436
    %v2462 = vmul.f32 %v2180, 0.06682436
    %v2463 = vmul.f32 %v2182, 0.06682436
    %v2464 = vmul.f32 %v2183, 0.06682436
    %v2465 = vmul.f32 %v2161, -0.10189204
    %v2466 = vmul.f32 %v2162, -0.10189204
    %v2467 = vmul.f32 %v2163, -0.10189204
    %v2468 = vmul.f32 %v2164, -0.10189204
    %v2469 = vmul.f32 %v2165, -0.10189204
    %v2470 = vmul.f32 %v2166, -0.10189204
    %v2471 = vmul.f32 %v2167, -0.10189204
    %v2472 = vmul.f32 %v2168, -0.10189204
    %v2473 = vmul.f32 %v2169, -0.10189204
    %v2474 = vmul.f32 %v2170, -0.10189204
    %v2475 = vmul.f32 %v2171, -0.10189204
    %v2476 = vmul.f32 %v2172, -0.10189204
    %v2477 = vmul.f32 %v2173, -0.10189204
    %v2478 = vmul.f32 %v2174, -0.10189204
    %v2479 = vmul.f32 %v2175, -0.10189204
    %v2480 = vmul.f32 %v2176, -0.10189204
    %v2481 = vmul.f32 %v2177, -0.10189204
    %v2482 = vmul.f32 %v2178, -0.10189204
    %v2483 = vmul.f32 %v2179, -0.10189204
    %v2484 = vmul.f32 %v2180, -0.10189204
    %v2485 = vmul.f32 %v2181, -0.10189204
    %v2486 = vmul.f32 %v2182, -0.10189204
    %v2487 = vmul.f32 %v2183, -0.10189204
    %v2488 = vmul.f32 %v2184, -0.10189204
    %vm2513 = vcmask 1046528
    %v2514 = vrot.slane %v2465, 1
    %v2515 = vrot.slane %v2466, 1
    %v2516 = vsel %vm2513, %v2514, %v2515
    %v2517 = vrot.slane %v2467, 1
    %v2518 = vsel %vm2513, %v2515, %v2517
    %v2519 = vrot.slane %v2468, 1
    %v2520 = vrot.slane %v2469, 1
    %v2521 = vsel %vm2513, %v2519, %v2520
    %v2522 = vrot.slane %v2470, 1
    %v2523 = vsel %vm2513, %v2520, %v2522
    %v2524 = vrot.slane %v2471, 1
    %v2525 = vrot.slane %v2472, 1
    %v2526 = vsel %vm2513, %v2524, %v2525
    %v2527 = vrot.slane %v2473, 1
    %v2528 = vsel %vm2513, %v2525, %v2527
    %v2529 = vrot.slane %v2474, 1
    %v2530 = vrot.slane %v2475, 1
    %v2531 = vsel %vm2513, %v2529, %v2530
    %v2532 = vrot.slane %v2476, 1
    %v2533 = vsel %vm2513, %v2530, %v2532
    %v2534 = vrot.slane %v2477, 1
    %v2535 = vrot.slane %v2478, 1
    %v2536 = vsel %vm2513, %v2534, %v2535
    %v2537 = vrot.slane %v2479, 1
    %v2538 = vsel %vm2513, %v2535, %v2537
    %v2539 = vrot.slane %v2480, 1
    %v2540 = vrot.slane %v2481, 1
    %v2541 = vsel %vm2513, %v2539, %v2540
    %v2542 = vrot.slane %v2482, 1
    %v2543 = vsel %vm2513, %v2540, %v2542
    %v2544 = vrot.slane %v2483, 1
    %v2545 = vrot.slane %v2484, 1
    %v2546 = vsel %vm2513, %v2544, %v2545
    %v2547 = vrot.slane %v2485, 1
    %v2548 = vsel %vm2513, %v2545, %v2547
    %v2549 = vrot.slane %v2486, 1
    %v2550 = vrot.slane %v2487, 1
    %v2551 = vsel %vm2513, %v2549, %v2550
    %v2552 = vrot.slane %v2488, 1
    %v2553 = vsel %vm2513, %v2550, %v2552
    %v2570 = vadd.f32 %v2449, %v2516
    %v2571 = vadd.f32 %v2450, %v2518
    %v2572 = vadd.f32 %v2451, %v2521
    %v2573 = vadd.f32 %v2452, %v2523
    %v2574 = vadd.f32 %v2453, %v2526
    %v2575 = vadd.f32 %v2454, %v2528
    %v2576 = vadd.f32 %v2455, %v2531
    %v2577 = vadd.f32 %v2456, %v2533
    %v2578 = vadd.f32 %v2457, %v2536
    %v2579 = vadd.f32 %v2458, %v2538
    %v2580 = vadd.f32 %v2459, %v2541
    %v2581 = vadd.f32 %v2460, %v2543
    %v2582 = vadd.f32 %v2461, %v2546
    %v2583 = vadd.f32 %v2462, %v2548
    %v2584 = vadd.f32 %v2463, %v2551
    %v2585 = vadd.f32 %v2464, %v2553
    %v2586 = vmul.f32 %v2161, -0.35460508
    %v2587 = vmul.f32 %v2162, -0.35460508
    %v2588 = vmul.f32 %v2163, -0.35460508
    %v2589 = vmul.f32 %v2164, -0.35460508
    %v2590 = vmul.f32 %v2165, -0.35460508
    %v2591 = vmul.f32 %v2166, -0.35460508
    %v2592 = vmul.f32 %v2167, -0.35460508
    %v2593 = vmul.f32 %v2168, -0.35460508
    %v2594 = vmul.f32 %v2169, -0.35460508
    %v2595 = vmul.f32 %v2170, -0.35460508
    %v2596 = vmul.f32 %v2171, -0.35460508
    %v2597 = vmul.f32 %v2172, -0.35460508
    %v2598 = vmul.f32 %v2173, -0.35460508
    %v2599 = vmul.f32 %v2174, -0.35460508
    %v2600 = vmul.f32 %v2175, -0.35460508
    %v2601 = vmul.f32 %v2176, -0.35460508
    %v2602 = vmul.f32 %v2177, -0.35460508
    %v2603 = vmul.f32 %v2178, -0.35460508
    %v2604 = vmul.f32 %v2179, -0.35460508
    %v2605 = vmul.f32 %v2180, -0.35460508
    %v2606 = vmul.f32 %v2181, -0.35460508
    %v2607 = vmul.f32 %v2182, -0.35460508
    %v2608 = vmul.f32 %v2183, -0.35460508
    %v2609 = vmul.f32 %v2184, -0.35460508
    %vm2634 = vcmask 1045504
    %v2635 = vrot.slane %v2586, 2
    %v2636 = vrot.slane %v2587, 2
    %v2637 = vsel %vm2634, %v2635, %v2636
    %v2638 = vrot.slane %v2588, 2
    %v2639 = vsel %vm2634, %v2636, %v2638
    %v2640 = vrot.slane %v2589, 2
    %v2641 = vrot.slane %v2590, 2
    %v2642 = vsel %vm2634, %v2640, %v2641
    %v2643 = vrot.slane %v2591, 2
    %v2644 = vsel %vm2634, %v2641, %v2643
    %v2645 = vrot.slane %v2592, 2
    %v2646 = vrot.slane %v2593, 2
    %v2647 = vsel %vm2634, %v2645, %v2646
    %v2648 = vrot.slane %v2594, 2
    %v2649 = vsel %vm2634, %v2646, %v2648
    %v2650 = vrot.slane %v2595, 2
    %v2651 = vrot.slane %v2596, 2
    %v2652 = vsel %vm2634, %v2650, %v2651
    %v2653 = vrot.slane %v2597, 2
    %v2654 = vsel %vm2634, %v2651, %v2653
    %v2655 = vrot.slane %v2598, 2
    %v2656 = vrot.slane %v2599, 2
    %v2657 = vsel %vm2634, %v2655, %v2656
    %v2658 = vrot.slane %v2600, 2
    %v2659 = vsel %vm2634, %v2656, %v2658
    %v2660 = vrot.slane %v2601, 2
    %v2661 = vrot.slane %v2602, 2
    %v2662 = vsel %vm2634, %v2660, %v2661
    %v2663 = vrot.slane %v2603, 2
    %v2664 = vsel %vm2634, %v2661, %v2663
    %v2665 = vrot.slane %v2604, 2
    %v2666 = vrot.slane %v2605, 2
    %v2667 = vsel %vm2634, %v2665, %v2666
    %v2668 = vrot.slane %v2606, 2
    %v2669 = vsel %vm2634, %v2666, %v2668
    %v2670 = vrot.slane %v2607, 2
    %v2671 = vrot.slane %v2608, 2
    %v2672 = vsel %vm2634, %v2670, %v2671
    %v2673 = vrot.slane %v2609, 2
    %v2674 = vsel %vm2634, %v2671, %v2673
    %v2691 = vadd.f32 %v2570, %v2637
    %v2692 = vadd.f32 %v2571, %v2639
    %v2693 = vadd.f32 %v2572, %v2642
    %v2694 = vadd.f32 %v2573, %v2644
    %v2695 = vadd.f32 %v2574, %v2647
    %v2696 = vadd.f32 %v2575, %v2649
    %v2697 = vadd.f32 %v2576, %v2652
    %v2698 = vadd.f32 %v2577, %v2654
    %v2699 = vadd.f32 %v2578, %v2657
    %v2700 = vadd.f32 %v2579, %v2659
    %v2701 = vadd.f32 %v2580, %v2662
    %v2702 = vadd.f32 %v2581, %v2664
    %v2703 = vadd.f32 %v2582, %v2667
    %v2704 = vadd.f32 %v2583, %v2669
    %v2705 = vadd.f32 %v2584, %v2672
    %v2706 = vadd.f32 %v2585, %v2674
    %vm2707 = vcmask 1044480
    %v2708 = vrot.slane %v2465, 3
    %v2709 = vrot.slane %v2466, 3
    %v2710 = vsel %vm2707, %v2708, %v2709
    %v2711 = vrot.slane %v2467, 3
    %v2712 = vsel %vm2707, %v2709, %v2711
    %v2713 = vrot.slane %v2468, 3
    %v2714 = vrot.slane %v2469, 3
    %v2715 = vsel %vm2707, %v2713, %v2714
    %v2716 = vrot.slane %v2470, 3
    %v2717 = vsel %vm2707, %v2714, %v2716
    %v2718 = vrot.slane %v2471, 3
    %v2719 = vrot.slane %v2472, 3
    %v2720 = vsel %vm2707, %v2718, %v2719
    %v2721 = vrot.slane %v2473, 3
    %v2722 = vsel %vm2707, %v2719, %v2721
    %v2723 = vrot.slane %v2474, 3
    %v2724 = vrot.slane %v2475, 3
    %v2725 = vsel %vm2707, %v2723, %v2724
    %v2726 = vrot.slane %v2476, 3
    %v2727 = vsel %vm2707, %v2724, %v2726
    %v2728 = vrot.slane %v2477, 3
    %v2729 = vrot.slane %v2478, 3
    %v2730 = vsel %vm2707, %v2728, %v2729
    %v2731 = vrot.slane %v2479, 3
    %v2732 = vsel %vm2707, %v2729, %v2731
    %v2733 = vrot.slane %v2480, 3
    %v2734 = vrot.slane %v2481, 3
    %v2735 = vsel %vm2707, %v2733, %v2734
    %v2736 = vrot.slane %v2482, 3
    %v2737 = vsel %vm2707, %v2734, %v2736
    %v2738 = vrot.slane %v2483, 3
    %v2739 = vrot.slane %v2484, 3
    %v2740 = vsel %vm2707, %v2738, %v2739
    %v2741 = vrot.slane %v2485, 3
    %v2742 = vsel %vm2707, %v2739, %v2741
    %v2743 = vrot.slane %v2486, 3
    %v2744 = vrot.slane %v2487, 3
    %v2745 = vsel %vm2707, %v2743, %v2744
    %v2746 = vrot.slane %v2488, 3
    %v2747 = vsel %vm2707, %v2744, %v2746
    %v2764 = vadd.f32 %v2691, %v2710
    %v2765 = vadd.f32 %v2692, %v2712
    %v2766 = vadd.f32 %v2693, %v2715
    %v2767 = vadd.f32 %v2694, %v2717
    %v2768 = vadd.f32 %v2695, %v2720
    %v2769 = vadd.f32 %v2696, %v2722
    %v2770 = vadd.f32 %v2697, %v2725
    %v2771 = vadd.f32 %v2698, %v2727
    %v2772 = vadd.f32 %v2699, %v2730
    %v2773 = vadd.f32 %v2700, %v2732
    %v2774 = vadd.f32 %v2701, %v2735
    %v2775 = vadd.f32 %v2702, %v2737
    %v2776 = vadd.f32 %v2703, %v2740
    %v2777 = vadd.f32 %v2704, %v2742
    %v2778 = vadd.f32 %v2705, %v2745
    %v2779 = vadd.f32 %v2706, %v2747
    %v2780 = vmul.f32 %v2163, 0.06682436
    %v2781 = vmul.f32 %v2166, 0.06682436
    %v2782 = vmul.f32 %v2169, 0.06682436
    %v2783 = vmul.f32 %v2172, 0.06682436
    %v2784 = vmul.f32 %v2175, 0.06682436
    %v2785 = vmul.f32 %v2178, 0.06682436
    %v2786 = vmul.f32 %v2181, 0.06682436
    %v2787 = vmul.f32 %v2184, 0.06682436
    %vm2812 = vcmask 1043456
    %v2813 = vrot.slane %v2449, 4
    %v2814 = vrot.slane %v2450, 4
    %v2815 = vsel %vm2812, %v2813, %v2814
    %v2816 = vrot.slane %v2780, 4
    %v2817 = vsel %vm2812, %v2814, %v2816
    %v2818 = vrot.slane %v2451, 4
    %v2819 = vrot.slane %v2452, 4
    %v2820 = vsel %vm2812, %v2818, %v2819
    %v2821 = vrot.slane %v2781, 4
    %v2822 = vsel %vm2812, %v2819, %v2821
    %v2823 = vrot.slane %v2453, 4
    %v2824 = vrot.slane %v2454, 4
    %v2825 = vsel %vm2812, %v2823, %v2824
    %v2826 = vrot.slane %v2782, 4
    %v2827 = vsel %vm2812, %v2824, %v2826
    %v2828 = vrot.slane %v2455, 4
    %v2829 = vrot.slane %v2456, 4
    %v2830 = vsel %vm2812, %v2828, %v2829
    %v2831 = vrot.slane %v2783, 4
    %v2832 = vsel %vm2812, %v2829, %v2831
    %v2833 = vrot.slane %v2457, 4
    %v2834 = vrot.slane %v2458, 4
    %v2835 = vsel %vm2812, %v2833, %v2834
    %v2836 = vrot.slane %v2784, 4
    %v2837 = vsel %vm2812, %v2834, %v2836
    %v2838 = vrot.slane %v2459, 4
    %v2839 = vrot.slane %v2460, 4
    %v2840 = vsel %vm2812, %v2838, %v2839
    %v2841 = vrot.slane %v2785, 4
    %v2842 = vsel %vm2812, %v2839, %v2841
    %v2843 = vrot.slane %v2461, 4
    %v2844 = vrot.slane %v2462, 4
    %v2845 = vsel %vm2812, %v2843, %v2844
    %v2846 = vrot.slane %v2786, 4
    %v2847 = vsel %vm2812, %v2844, %v2846
    %v2848 = vrot.slane %v2463, 4
    %v2849 = vrot.slane %v2464, 4
    %v2850 = vsel %vm2812, %v2848, %v2849
    %v2851 = vrot.slane %v2787, 4
    %v2852 = vsel %vm2812, %v2849, %v2851
    %v2869 = vadd.f32 %v2764, %v2815
    %v2870 = vadd.f32 %v2765, %v2817
    %v2871 = vadd.f32 %v2766, %v2820
    %v2872 = vadd.f32 %v2767, %v2822
    %v2873 = vadd.f32 %v2768, %v2825
    %v2874 = vadd.f32 %v2769, %v2827
    %v2875 = vadd.f32 %v2770, %v2830
    %v2876 = vadd.f32 %v2771, %v2832
    %v2877 = vadd.f32 %v2772, %v2835
    %v2878 = vadd.f32 %v2773, %v2837
    %v2879 = vadd.f32 %v2774, %v2840
    %v2880 = vadd.f32 %v2775, %v2842
    %v2881 = vadd.f32 %v2776, %v2845
    %v2882 = vadd.f32 %v2777, %v2847
    %v2883 = vadd.f32 %v2778, %v2850
    %v2884 = vadd.f32 %v2779, %v2852
    %v2885 = vmul.f32 %v2281, 0.06531423
    %v2886 = vmul.f32 %v2282, 0.06531423
    %v2887 = vmul.f32 %v2284, 0.06531423
    %v2888 = vmul.f32 %v2285, 0.06531423
    %v2889 = vmul.f32 %v2287, 0.06531423
    %v2890 = vmul.f32 %v2288, 0.06531423
    %v2891 = vmul.f32 %v2290, 0.06531423
    %v2892 = vmul.f32 %v2291, 0.06531423
    %v2893 = vmul.f32 %v2293, 0.06531423
    %v2894 = vmul.f32 %v2294, 0.06531423
    %v2895 = vmul.f32 %v2296, 0.06531423
    %v2896 = vmul.f32 %v2297, 0.06531423
    %v2897 = vmul.f32 %v2299, 0.06531423
    %v2898 = vmul.f32 %v2300, 0.06531423
    %v2899 = vmul.f32 %v2302, 0.06531423
    %v2900 = vmul.f32 %v2303, 0.06531423
    %v2901 = vadd.f32 %v2869, %v2885
    %v2902 = vadd.f32 %v2870, %v2886
    %v2903 = vadd.f32 %v2871, %v2887
    %v2904 = vadd.f32 %v2872, %v2888
    %v2905 = vadd.f32 %v2873, %v2889
    %v2906 = vadd.f32 %v2874, %v2890
    %v2907 = vadd.f32 %v2875, %v2891
    %v2908 = vadd.f32 %v2876, %v2892
    %v2909 = vadd.f32 %v2877, %v2893
    %v2910 = vadd.f32 %v2878, %v2894
    %v2911 = vadd.f32 %v2879, %v2895
    %v2912 = vadd.f32 %v2880, %v2896
    %v2913 = vadd.f32 %v2881, %v2897
    %v2914 = vadd.f32 %v2882, %v2898
    %v2915 = vadd.f32 %v2883, %v2899
    %v2916 = vadd.f32 %v2884, %v2900
    %v2917 = vmul.f32 %v2281, 0.05819438
    %v2918 = vmul.f32 %v2282, 0.05819438
    %v2919 = vmul.f32 %v2283, 0.05819438
    %v2920 = vmul.f32 %v2284, 0.05819438
    %v2921 = vmul.f32 %v2285, 0.05819438
    %v2922 = vmul.f32 %v2286, 0.05819438
    %v2923 = vmul.f32 %v2287, 0.05819438
    %v2924 = vmul.f32 %v2288, 0.05819438
    %v2925 = vmul.f32 %v2289, 0.05819438
    %v2926 = vmul.f32 %v2290, 0.05819438
    %v2927 = vmul.f32 %v2291, 0.05819438
    %v2928 = vmul.f32 %v2292, 0.05819438
    %v2929 = vmul.f32 %v2293, 0.05819438
    %v2930 = vmul.f32 %v2294, 0.05819438
    %v2931 = vmul.f32 %v2295, 0.05819438
    %v2932 = vmul.f32 %v2296, 0.05819438
    %v2933 = vmul.f32 %v2297, 0.05819438
    %v2934 = vmul.f32 %v2298, 0.05819438
    %v2935 = vmul.f32 %v2299, 0.05819438
    %v2936 = vmul.f32 %v2300, 0.05819438
    %v2937 = vmul.f32 %v2301, 0.05819438
    %v2938 = vmul.f32 %v2302, 0.05819438
    %v2939 = vmul.f32 %v2303, 0.05819438
    %v2940 = vmul.f32 %v2304, 0.05819438
    %v2965 = vrot.slane %v2917, 1
    %v2966 = vrot.slane %v2918, 1
    %v2967 = vsel %vm2513, %v2965, %v2966
    %v2968 = vrot.slane %v2919, 1
    %v2969 = vsel %vm2513, %v2966, %v2968
    %v2970 = vrot.slane %v2920, 1
    %v2971 = vrot.slane %v2921, 1
    %v2972 = vsel %vm2513, %v2970, %v2971
    %v2973 = vrot.slane %v2922, 1
    %v2974 = vsel %vm2513, %v2971, %v2973
    %v2975 = vrot.slane %v2923, 1
    %v2976 = vrot.slane %v2924, 1
    %v2977 = vsel %vm2513, %v2975, %v2976
    %v2978 = vrot.slane %v2925, 1
    %v2979 = vsel %vm2513, %v2976, %v2978
    %v2980 = vrot.slane %v2926, 1
    %v2981 = vrot.slane %v2927, 1
    %v2982 = vsel %vm2513, %v2980, %v2981
    %v2983 = vrot.slane %v2928, 1
    %v2984 = vsel %vm2513, %v2981, %v2983
    %v2985 = vrot.slane %v2929, 1
    %v2986 = vrot.slane %v2930, 1
    %v2987 = vsel %vm2513, %v2985, %v2986
    %v2988 = vrot.slane %v2931, 1
    %v2989 = vsel %vm2513, %v2986, %v2988
    %v2990 = vrot.slane %v2932, 1
    %v2991 = vrot.slane %v2933, 1
    %v2992 = vsel %vm2513, %v2990, %v2991
    %v2993 = vrot.slane %v2934, 1
    %v2994 = vsel %vm2513, %v2991, %v2993
    %v2995 = vrot.slane %v2935, 1
    %v2996 = vrot.slane %v2936, 1
    %v2997 = vsel %vm2513, %v2995, %v2996
    %v2998 = vrot.slane %v2937, 1
    %v2999 = vsel %vm2513, %v2996, %v2998
    %v3000 = vrot.slane %v2938, 1
    %v3001 = vrot.slane %v2939, 1
    %v3002 = vsel %vm2513, %v3000, %v3001
    %v3003 = vrot.slane %v2940, 1
    %v3004 = vsel %vm2513, %v3001, %v3003
    %v3021 = vadd.f32 %v2901, %v2967
    %v3022 = vadd.f32 %v2902, %v2969
    %v3023 = vadd.f32 %v2903, %v2972
    %v3024 = vadd.f32 %v2904, %v2974
    %v3025 = vadd.f32 %v2905, %v2977
    %v3026 = vadd.f32 %v2906, %v2979
    %v3027 = vadd.f32 %v2907, %v2982
    %v3028 = vadd.f32 %v2908, %v2984
    %v3029 = vadd.f32 %v2909, %v2987
    %v3030 = vadd.f32 %v2910, %v2989
    %v3031 = vadd.f32 %v2911, %v2992
    %v3032 = vadd.f32 %v2912, %v2994
    %v3033 = vadd.f32 %v2913, %v2997
    %v3034 = vadd.f32 %v2914, %v2999
    %v3035 = vadd.f32 %v2915, %v3002
    %v3036 = vadd.f32 %v2916, %v3004
    %v3037 = vmul.f32 %v2281, -0.008826504
    %v3038 = vmul.f32 %v2282, -0.008826504
    %v3039 = vmul.f32 %v2283, -0.008826504
    %v3040 = vmul.f32 %v2284, -0.008826504
    %v3041 = vmul.f32 %v2285, -0.008826504
    %v3042 = vmul.f32 %v2286, -0.008826504
    %v3043 = vmul.f32 %v2287, -0.008826504
    %v3044 = vmul.f32 %v2288, -0.008826504
    %v3045 = vmul.f32 %v2289, -0.008826504
    %v3046 = vmul.f32 %v2290, -0.008826504
    %v3047 = vmul.f32 %v2291, -0.008826504
    %v3048 = vmul.f32 %v2292, -0.008826504
    %v3049 = vmul.f32 %v2293, -0.008826504
    %v3050 = vmul.f32 %v2294, -0.008826504
    %v3051 = vmul.f32 %v2295, -0.008826504
    %v3052 = vmul.f32 %v2296, -0.008826504
    %v3053 = vmul.f32 %v2297, -0.008826504
    %v3054 = vmul.f32 %v2298, -0.008826504
    %v3055 = vmul.f32 %v2299, -0.008826504
    %v3056 = vmul.f32 %v2300, -0.008826504
    %v3057 = vmul.f32 %v2301, -0.008826504
    %v3058 = vmul.f32 %v2302, -0.008826504
    %v3059 = vmul.f32 %v2303, -0.008826504
    %v3060 = vmul.f32 %v2304, -0.008826504
    %v3085 = vrot.slane %v3037, 2
    %v3086 = vrot.slane %v3038, 2
    %v3087 = vsel %vm2634, %v3085, %v3086
    %v3088 = vrot.slane %v3039, 2
    %v3089 = vsel %vm2634, %v3086, %v3088
    %v3090 = vrot.slane %v3040, 2
    %v3091 = vrot.slane %v3041, 2
    %v3092 = vsel %vm2634, %v3090, %v3091
    %v3093 = vrot.slane %v3042, 2
    %v3094 = vsel %vm2634, %v3091, %v3093
    %v3095 = vrot.slane %v3043, 2
    %v3096 = vrot.slane %v3044, 2
    %v3097 = vsel %vm2634, %v3095, %v3096
    %v3098 = vrot.slane %v3045, 2
    %v3099 = vsel %vm2634, %v3096, %v3098
    %v3100 = vrot.slane %v3046, 2
    %v3101 = vrot.slane %v3047, 2
    %v3102 = vsel %vm2634, %v3100, %v3101
    %v3103 = vrot.slane %v3048, 2
    %v3104 = vsel %vm2634, %v3101, %v3103
    %v3105 = vrot.slane %v3049, 2
    %v3106 = vrot.slane %v3050, 2
    %v3107 = vsel %vm2634, %v3105, %v3106
    %v3108 = vrot.slane %v3051, 2
    %v3109 = vsel %vm2634, %v3106, %v3108
    %v3110 = vrot.slane %v3052, 2
    %v3111 = vrot.slane %v3053, 2
    %v3112 = vsel %vm2634, %v3110, %v3111
    %v3113 = vrot.slane %v3054, 2
    %v3114 = vsel %vm2634, %v3111, %v3113
    %v3115 = vrot.slane %v3055, 2
    %v3116 = vrot.slane %v3056, 2
    %v3117 = vsel %vm2634, %v3115, %v3116
    %v3118 = vrot.slane %v3057, 2
    %v3119 = vsel %vm2634, %v3116, %v3118
    %v3120 = vrot.slane %v3058, 2
    %v3121 = vrot.slane %v3059, 2
    %v3122 = vsel %vm2634, %v3120, %v3121
    %v3123 = vrot.slane %v3060, 2
    %v3124 = vsel %vm2634, %v3121, %v3123
    %v3141 = vadd.f32 %v3021, %v3087
    %v3142 = vadd.f32 %v3022, %v3089
    %v3143 = vadd.f32 %v3023, %v3092
    %v3144 = vadd.f32 %v3024, %v3094
    %v3145 = vadd.f32 %v3025, %v3097
    %v3146 = vadd.f32 %v3026, %v3099
    %v3147 = vadd.f32 %v3027, %v3102
    %v3148 = vadd.f32 %v3028, %v3104
    %v3149 = vadd.f32 %v3029, %v3107
    %v3150 = vadd.f32 %v3030, %v3109
    %v3151 = vadd.f32 %v3031, %v3112
    %v3152 = vadd.f32 %v3032, %v3114
    %v3153 = vadd.f32 %v3033, %v3117
    %v3154 = vadd.f32 %v3034, %v3119
    %v3155 = vadd.f32 %v3035, %v3122
    %v3156 = vadd.f32 %v3036, %v3124
    %v3157 = vrot.slane %v2917, 3
    %v3158 = vrot.slane %v2918, 3
    %v3159 = vsel %vm2707, %v3157, %v3158
    %v3160 = vrot.slane %v2919, 3
    %v3161 = vsel %vm2707, %v3158, %v3160
    %v3162 = vrot.slane %v2920, 3
    %v3163 = vrot.slane %v2921, 3
    %v3164 = vsel %vm2707, %v3162, %v3163
    %v3165 = vrot.slane %v2922, 3
    %v3166 = vsel %vm2707, %v3163, %v3165
    %v3167 = vrot.slane %v2923, 3
    %v3168 = vrot.slane %v2924, 3
    %v3169 = vsel %vm2707, %v3167, %v3168
    %v3170 = vrot.slane %v2925, 3
    %v3171 = vsel %vm2707, %v3168, %v3170
    %v3172 = vrot.slane %v2926, 3
    %v3173 = vrot.slane %v2927, 3
    %v3174 = vsel %vm2707, %v3172, %v3173
    %v3175 = vrot.slane %v2928, 3
    %v3176 = vsel %vm2707, %v3173, %v3175
    %v3177 = vrot.slane %v2929, 3
    %v3178 = vrot.slane %v2930, 3
    %v3179 = vsel %vm2707, %v3177, %v3178
    %v3180 = vrot.slane %v2931, 3
    %v3181 = vsel %vm2707, %v3178, %v3180
    %v3182 = vrot.slane %v2932, 3
    %v3183 = vrot.slane %v2933, 3
    %v3184 = vsel %vm2707, %v3182, %v3183
    %v3185 = vrot.slane %v2934, 3
    %v3186 = vsel %vm2707, %v3183, %v3185
    %v3187 = vrot.slane %v2935, 3
    %v3188 = vrot.slane %v2936, 3
    %v3189 = vsel %vm2707, %v3187, %v3188
    %v3190 = vrot.slane %v2937, 3
    %v3191 = vsel %vm2707, %v3188, %v3190
    %v3192 = vrot.slane %v2938, 3
    %v3193 = vrot.slane %v2939, 3
    %v3194 = vsel %vm2707, %v3192, %v3193
    %v3195 = vrot.slane %v2940, 3
    %v3196 = vsel %vm2707, %v3193, %v3195
    %v3213 = vadd.f32 %v3141, %v3159
    %v3214 = vadd.f32 %v3142, %v3161
    %v3215 = vadd.f32 %v3143, %v3164
    %v3216 = vadd.f32 %v3144, %v3166
    %v3217 = vadd.f32 %v3145, %v3169
    %v3218 = vadd.f32 %v3146, %v3171
    %v3219 = vadd.f32 %v3147, %v3174
    %v3220 = vadd.f32 %v3148, %v3176
    %v3221 = vadd.f32 %v3149, %v3179
    %v3222 = vadd.f32 %v3150, %v3181
    %v3223 = vadd.f32 %v3151, %v3184
    %v3224 = vadd.f32 %v3152, %v3186
    %v3225 = vadd.f32 %v3153, %v3189
    %v3226 = vadd.f32 %v3154, %v3191
    %v3227 = vadd.f32 %v3155, %v3194
    %v3228 = vadd.f32 %v3156, %v3196
    %v3229 = vmul.f32 %v2283, 0.06531423
    %v3230 = vmul.f32 %v2286, 0.06531423
    %v3231 = vmul.f32 %v2289, 0.06531423
    %v3232 = vmul.f32 %v2292, 0.06531423
    %v3233 = vmul.f32 %v2295, 0.06531423
    %v3234 = vmul.f32 %v2298, 0.06531423
    %v3235 = vmul.f32 %v2301, 0.06531423
    %v3236 = vmul.f32 %v2304, 0.06531423
    %v3261 = vrot.slane %v2885, 4
    %v3262 = vrot.slane %v2886, 4
    %v3263 = vsel %vm2812, %v3261, %v3262
    %v3264 = vrot.slane %v3229, 4
    %v3265 = vsel %vm2812, %v3262, %v3264
    %v3266 = vrot.slane %v2887, 4
    %v3267 = vrot.slane %v2888, 4
    %v3268 = vsel %vm2812, %v3266, %v3267
    %v3269 = vrot.slane %v3230, 4
    %v3270 = vsel %vm2812, %v3267, %v3269
    %v3271 = vrot.slane %v2889, 4
    %v3272 = vrot.slane %v2890, 4
    %v3273 = vsel %vm2812, %v3271, %v3272
    %v3274 = vrot.slane %v3231, 4
    %v3275 = vsel %vm2812, %v3272, %v3274
    %v3276 = vrot.slane %v2891, 4
    %v3277 = vrot.slane %v2892, 4
    %v3278 = vsel %vm2812, %v3276, %v3277
    %v3279 = vrot.slane %v3232, 4
    %v3280 = vsel %vm2812, %v3277, %v3279
    %v3281 = vrot.slane %v2893, 4
    %v3282 = vrot.slane %v2894, 4
    %v3283 = vsel %vm2812, %v3281, %v3282
    %v3284 = vrot.slane %v3233, 4
    %v3285 = vsel %vm2812, %v3282, %v3284
    %v3286 = vrot.slane %v2895, 4
    %v3287 = vrot.slane %v2896, 4
    %v3288 = vsel %vm2812, %v3286, %v3287
    %v3289 = vrot.slane %v3234, 4
    %v3290 = vsel %vm2812, %v3287, %v3289
    %v3291 = vrot.slane %v2897, 4
    %v3292 = vrot.slane %v2898, 4
    %v3293 = vsel %vm2812, %v3291, %v3292
    %v3294 = vrot.slane %v3235, 4
    %v3295 = vsel %vm2812, %v3292, %v3294
    %v3296 = vrot.slane %v2899, 4
    %v3297 = vrot.slane %v2900, 4
    %v3298 = vsel %vm2812, %v3296, %v3297
    %v3299 = vrot.slane %v3236, 4
    %v3300 = vsel %vm2812, %v3297, %v3299
    %v3317 = vadd.f32 %v3213, %v3263
    %v3318 = vadd.f32 %v3214, %v3265
    %v3319 = vadd.f32 %v3215, %v3268
    %v3320 = vadd.f32 %v3216, %v3270
    %v3321 = vadd.f32 %v3217, %v3273
    %v3322 = vadd.f32 %v3218, %v3275
    %v3323 = vadd.f32 %v3219, %v3278
    %v3324 = vadd.f32 %v3220, %v3280
    %v3325 = vadd.f32 %v3221, %v3283
    %v3326 = vadd.f32 %v3222, %v3285
    %v3327 = vadd.f32 %v3223, %v3288
    %v3328 = vadd.f32 %v3224, %v3290
    %v3329 = vadd.f32 %v3225, %v3293
    %v3330 = vadd.f32 %v3226, %v3295
    %v3331 = vadd.f32 %v3227, %v3298
    %v3332 = vadd.f32 %v3228, %v3300
    %v3333 = vmul.f32 %v2425, -4.1256995e-10
    %v3334 = vmul.f32 %v2426, -4.1256995e-10
    %v3335 = vmul.f32 %v2428, -4.1256995e-10
    %v3336 = vmul.f32 %v2429, -4.1256995e-10
    %v3337 = vmul.f32 %v2431, -4.1256995e-10
    %v3338 = vmul.f32 %v2432, -4.1256995e-10
    %v3339 = vmul.f32 %v2434, -4.1256995e-10
    %v3340 = vmul.f32 %v2435, -4.1256995e-10
    %v3341 = vmul.f32 %v2437, -4.1256995e-10
    %v3342 = vmul.f32 %v2438, -4.1256995e-10
    %v3343 = vmul.f32 %v2440, -4.1256995e-10
    %v3344 = vmul.f32 %v2441, -4.1256995e-10
    %v3345 = vmul.f32 %v2443, -4.1256995e-10
    %v3346 = vmul.f32 %v2444, -4.1256995e-10
    %v3347 = vmul.f32 %v2446, -4.1256995e-10
    %v3348 = vmul.f32 %v2447, -4.1256995e-10
    %v3349 = vadd.f32 %v3317, %v3333
    %v3350 = vadd.f32 %v3318, %v3334
    %v3351 = vadd.f32 %v3319, %v3335
    %v3352 = vadd.f32 %v3320, %v3336
    %v3353 = vadd.f32 %v3321, %v3337
    %v3354 = vadd.f32 %v3322, %v3338
    %v3355 = vadd.f32 %v3323, %v3339
    %v3356 = vadd.f32 %v3324, %v3340
    %v3357 = vadd.f32 %v3325, %v3341
    %v3358 = vadd.f32 %v3326, %v3342
    %v3359 = vadd.f32 %v3327, %v3343
    %v3360 = vadd.f32 %v3328, %v3344
    %v3361 = vadd.f32 %v3329, %v3345
    %v3362 = vadd.f32 %v3330, %v3346
    %v3363 = vadd.f32 %v3331, %v3347
    %v3364 = vadd.f32 %v3332, %v3348
    %v3365 = vmul.f32 %v2425, 4.3240903e-10
    %v3366 = vmul.f32 %v2426, 4.3240903e-10
    %v3367 = vmul.f32 %v2427, 4.3240903e-10
    %v3368 = vmul.f32 %v2428, 4.3240903e-10
    %v3369 = vmul.f32 %v2429, 4.3240903e-10
    %v3370 = vmul.f32 %v2430, 4.3240903e-10
    %v3371 = vmul.f32 %v2431, 4.3240903e-10
    %v3372 = vmul.f32 %v2432, 4.3240903e-10
    %v3373 = vmul.f32 %v2433, 4.3240903e-10
    %v3374 = vmul.f32 %v2434, 4.3240903e-10
    %v3375 = vmul.f32 %v2435, 4.3240903e-10
    %v3376 = vmul.f32 %v2436, 4.3240903e-10
    %v3377 = vmul.f32 %v2437, 4.3240903e-10
    %v3378 = vmul.f32 %v2438, 4.3240903e-10
    %v3379 = vmul.f32 %v2439, 4.3240903e-10
    %v3380 = vmul.f32 %v2440, 4.3240903e-10
    %v3381 = vmul.f32 %v2441, 4.3240903e-10
    %v3382 = vmul.f32 %v2442, 4.3240903e-10
    %v3383 = vmul.f32 %v2443, 4.3240903e-10
    %v3384 = vmul.f32 %v2444, 4.3240903e-10
    %v3385 = vmul.f32 %v2445, 4.3240903e-10
    %v3386 = vmul.f32 %v2446, 4.3240903e-10
    %v3387 = vmul.f32 %v2447, 4.3240903e-10
    %v3388 = vmul.f32 %v2448, 4.3240903e-10
    %v3413 = vrot.slane %v3365, 1
    %v3414 = vrot.slane %v3366, 1
    %v3415 = vsel %vm2513, %v3413, %v3414
    %v3416 = vrot.slane %v3367, 1
    %v3417 = vsel %vm2513, %v3414, %v3416
    %v3418 = vrot.slane %v3368, 1
    %v3419 = vrot.slane %v3369, 1
    %v3420 = vsel %vm2513, %v3418, %v3419
    %v3421 = vrot.slane %v3370, 1
    %v3422 = vsel %vm2513, %v3419, %v3421
    %v3423 = vrot.slane %v3371, 1
    %v3424 = vrot.slane %v3372, 1
    %v3425 = vsel %vm2513, %v3423, %v3424
    %v3426 = vrot.slane %v3373, 1
    %v3427 = vsel %vm2513, %v3424, %v3426
    %v3428 = vrot.slane %v3374, 1
    %v3429 = vrot.slane %v3375, 1
    %v3430 = vsel %vm2513, %v3428, %v3429
    %v3431 = vrot.slane %v3376, 1
    %v3432 = vsel %vm2513, %v3429, %v3431
    %v3433 = vrot.slane %v3377, 1
    %v3434 = vrot.slane %v3378, 1
    %v3435 = vsel %vm2513, %v3433, %v3434
    %v3436 = vrot.slane %v3379, 1
    %v3437 = vsel %vm2513, %v3434, %v3436
    %v3438 = vrot.slane %v3380, 1
    %v3439 = vrot.slane %v3381, 1
    %v3440 = vsel %vm2513, %v3438, %v3439
    %v3441 = vrot.slane %v3382, 1
    %v3442 = vsel %vm2513, %v3439, %v3441
    %v3443 = vrot.slane %v3383, 1
    %v3444 = vrot.slane %v3384, 1
    %v3445 = vsel %vm2513, %v3443, %v3444
    %v3446 = vrot.slane %v3385, 1
    %v3447 = vsel %vm2513, %v3444, %v3446
    %v3448 = vrot.slane %v3386, 1
    %v3449 = vrot.slane %v3387, 1
    %v3450 = vsel %vm2513, %v3448, %v3449
    %v3451 = vrot.slane %v3388, 1
    %v3452 = vsel %vm2513, %v3449, %v3451
    %v3469 = vadd.f32 %v3349, %v3415
    %v3470 = vadd.f32 %v3350, %v3417
    %v3471 = vadd.f32 %v3351, %v3420
    %v3472 = vadd.f32 %v3352, %v3422
    %v3473 = vadd.f32 %v3353, %v3425
    %v3474 = vadd.f32 %v3354, %v3427
    %v3475 = vadd.f32 %v3355, %v3430
    %v3476 = vadd.f32 %v3356, %v3432
    %v3477 = vadd.f32 %v3357, %v3435
    %v3478 = vadd.f32 %v3358, %v3437
    %v3479 = vadd.f32 %v3359, %v3440
    %v3480 = vadd.f32 %v3360, %v3442
    %v3481 = vadd.f32 %v3361, %v3445
    %v3482 = vadd.f32 %v3362, %v3447
    %v3483 = vadd.f32 %v3363, %v3450
    %v3484 = vadd.f32 %v3364, %v3452
    %v3485 = vmul.f32 %v2425, -4.0399173e-10
    %v3486 = vmul.f32 %v2426, -4.0399173e-10
    %v3487 = vmul.f32 %v2427, -4.0399173e-10
    %v3488 = vmul.f32 %v2428, -4.0399173e-10
    %v3489 = vmul.f32 %v2429, -4.0399173e-10
    %v3490 = vmul.f32 %v2430, -4.0399173e-10
    %v3491 = vmul.f32 %v2431, -4.0399173e-10
    %v3492 = vmul.f32 %v2432, -4.0399173e-10
    %v3493 = vmul.f32 %v2433, -4.0399173e-10
    %v3494 = vmul.f32 %v2434, -4.0399173e-10
    %v3495 = vmul.f32 %v2435, -4.0399173e-10
    %v3496 = vmul.f32 %v2436, -4.0399173e-10
    %v3497 = vmul.f32 %v2437, -4.0399173e-10
    %v3498 = vmul.f32 %v2438, -4.0399173e-10
    %v3499 = vmul.f32 %v2439, -4.0399173e-10
    %v3500 = vmul.f32 %v2440, -4.0399173e-10
    %v3501 = vmul.f32 %v2441, -4.0399173e-10
    %v3502 = vmul.f32 %v2442, -4.0399173e-10
    %v3503 = vmul.f32 %v2443, -4.0399173e-10
    %v3504 = vmul.f32 %v2444, -4.0399173e-10
    %v3505 = vmul.f32 %v2445, -4.0399173e-10
    %v3506 = vmul.f32 %v2446, -4.0399173e-10
    %v3507 = vmul.f32 %v2447, -4.0399173e-10
    %v3508 = vmul.f32 %v2448, -4.0399173e-10
    %v3533 = vrot.slane %v3485, 2
    %v3534 = vrot.slane %v3486, 2
    %v3535 = vsel %vm2634, %v3533, %v3534
    %v3536 = vrot.slane %v3487, 2
    %v3537 = vsel %vm2634, %v3534, %v3536
    %v3538 = vrot.slane %v3488, 2
    %v3539 = vrot.slane %v3489, 2
    %v3540 = vsel %vm2634, %v3538, %v3539
    %v3541 = vrot.slane %v3490, 2
    %v3542 = vsel %vm2634, %v3539, %v3541
    %v3543 = vrot.slane %v3491, 2
    %v3544 = vrot.slane %v3492, 2
    %v3545 = vsel %vm2634, %v3543, %v3544
    %v3546 = vrot.slane %v3493, 2
    %v3547 = vsel %vm2634, %v3544, %v3546
    %v3548 = vrot.slane %v3494, 2
    %v3549 = vrot.slane %v3495, 2
    %v3550 = vsel %vm2634, %v3548, %v3549
    %v3551 = vrot.slane %v3496, 2
    %v3552 = vsel %vm2634, %v3549, %v3551
    %v3553 = vrot.slane %v3497, 2
    %v3554 = vrot.slane %v3498, 2
    %v3555 = vsel %vm2634, %v3553, %v3554
    %v3556 = vrot.slane %v3499, 2
    %v3557 = vsel %vm2634, %v3554, %v3556
    %v3558 = vrot.slane %v3500, 2
    %v3559 = vrot.slane %v3501, 2
    %v3560 = vsel %vm2634, %v3558, %v3559
    %v3561 = vrot.slane %v3502, 2
    %v3562 = vsel %vm2634, %v3559, %v3561
    %v3563 = vrot.slane %v3503, 2
    %v3564 = vrot.slane %v3504, 2
    %v3565 = vsel %vm2634, %v3563, %v3564
    %v3566 = vrot.slane %v3505, 2
    %v3567 = vsel %vm2634, %v3564, %v3566
    %v3568 = vrot.slane %v3506, 2
    %v3569 = vrot.slane %v3507, 2
    %v3570 = vsel %vm2634, %v3568, %v3569
    %v3571 = vrot.slane %v3508, 2
    %v3572 = vsel %vm2634, %v3569, %v3571
    %v3589 = vadd.f32 %v3469, %v3535
    %v3590 = vadd.f32 %v3470, %v3537
    %v3591 = vadd.f32 %v3471, %v3540
    %v3592 = vadd.f32 %v3472, %v3542
    %v3593 = vadd.f32 %v3473, %v3545
    %v3594 = vadd.f32 %v3474, %v3547
    %v3595 = vadd.f32 %v3475, %v3550
    %v3596 = vadd.f32 %v3476, %v3552
    %v3597 = vadd.f32 %v3477, %v3555
    %v3598 = vadd.f32 %v3478, %v3557
    %v3599 = vadd.f32 %v3479, %v3560
    %v3600 = vadd.f32 %v3480, %v3562
    %v3601 = vadd.f32 %v3481, %v3565
    %v3602 = vadd.f32 %v3482, %v3567
    %v3603 = vadd.f32 %v3483, %v3570
    %v3604 = vadd.f32 %v3484, %v3572
    %v3605 = vmul.f32 %v2425, 4.32409e-10
    %v3606 = vmul.f32 %v2426, 4.32409e-10
    %v3607 = vmul.f32 %v2427, 4.32409e-10
    %v3608 = vmul.f32 %v2428, 4.32409e-10
    %v3609 = vmul.f32 %v2429, 4.32409e-10
    %v3610 = vmul.f32 %v2430, 4.32409e-10
    %v3611 = vmul.f32 %v2431, 4.32409e-10
    %v3612 = vmul.f32 %v2432, 4.32409e-10
    %v3613 = vmul.f32 %v2433, 4.32409e-10
    %v3614 = vmul.f32 %v2434, 4.32409e-10
    %v3615 = vmul.f32 %v2435, 4.32409e-10
    %v3616 = vmul.f32 %v2436, 4.32409e-10
    %v3617 = vmul.f32 %v2437, 4.32409e-10
    %v3618 = vmul.f32 %v2438, 4.32409e-10
    %v3619 = vmul.f32 %v2439, 4.32409e-10
    %v3620 = vmul.f32 %v2440, 4.32409e-10
    %v3621 = vmul.f32 %v2441, 4.32409e-10
    %v3622 = vmul.f32 %v2442, 4.32409e-10
    %v3623 = vmul.f32 %v2443, 4.32409e-10
    %v3624 = vmul.f32 %v2444, 4.32409e-10
    %v3625 = vmul.f32 %v2445, 4.32409e-10
    %v3626 = vmul.f32 %v2446, 4.32409e-10
    %v3627 = vmul.f32 %v2447, 4.32409e-10
    %v3628 = vmul.f32 %v2448, 4.32409e-10
    %v3653 = vrot.slane %v3605, 3
    %v3654 = vrot.slane %v3606, 3
    %v3655 = vsel %vm2707, %v3653, %v3654
    %v3656 = vrot.slane %v3607, 3
    %v3657 = vsel %vm2707, %v3654, %v3656
    %v3658 = vrot.slane %v3608, 3
    %v3659 = vrot.slane %v3609, 3
    %v3660 = vsel %vm2707, %v3658, %v3659
    %v3661 = vrot.slane %v3610, 3
    %v3662 = vsel %vm2707, %v3659, %v3661
    %v3663 = vrot.slane %v3611, 3
    %v3664 = vrot.slane %v3612, 3
    %v3665 = vsel %vm2707, %v3663, %v3664
    %v3666 = vrot.slane %v3613, 3
    %v3667 = vsel %vm2707, %v3664, %v3666
    %v3668 = vrot.slane %v3614, 3
    %v3669 = vrot.slane %v3615, 3
    %v3670 = vsel %vm2707, %v3668, %v3669
    %v3671 = vrot.slane %v3616, 3
    %v3672 = vsel %vm2707, %v3669, %v3671
    %v3673 = vrot.slane %v3617, 3
    %v3674 = vrot.slane %v3618, 3
    %v3675 = vsel %vm2707, %v3673, %v3674
    %v3676 = vrot.slane %v3619, 3
    %v3677 = vsel %vm2707, %v3674, %v3676
    %v3678 = vrot.slane %v3620, 3
    %v3679 = vrot.slane %v3621, 3
    %v3680 = vsel %vm2707, %v3678, %v3679
    %v3681 = vrot.slane %v3622, 3
    %v3682 = vsel %vm2707, %v3679, %v3681
    %v3683 = vrot.slane %v3623, 3
    %v3684 = vrot.slane %v3624, 3
    %v3685 = vsel %vm2707, %v3683, %v3684
    %v3686 = vrot.slane %v3625, 3
    %v3687 = vsel %vm2707, %v3684, %v3686
    %v3688 = vrot.slane %v3626, 3
    %v3689 = vrot.slane %v3627, 3
    %v3690 = vsel %vm2707, %v3688, %v3689
    %v3691 = vrot.slane %v3628, 3
    %v3692 = vsel %vm2707, %v3689, %v3691
    %v3709 = vadd.f32 %v3589, %v3655
    %v3710 = vadd.f32 %v3590, %v3657
    %v3711 = vadd.f32 %v3591, %v3660
    %v3712 = vadd.f32 %v3592, %v3662
    %v3713 = vadd.f32 %v3593, %v3665
    %v3714 = vadd.f32 %v3594, %v3667
    %v3715 = vadd.f32 %v3595, %v3670
    %v3716 = vadd.f32 %v3596, %v3672
    %v3717 = vadd.f32 %v3597, %v3675
    %v3718 = vadd.f32 %v3598, %v3677
    %v3719 = vadd.f32 %v3599, %v3680
    %v3720 = vadd.f32 %v3600, %v3682
    %v3721 = vadd.f32 %v3601, %v3685
    %v3722 = vadd.f32 %v3602, %v3687
    %v3723 = vadd.f32 %v3603, %v3690
    %v3724 = vadd.f32 %v3604, %v3692
    %v3725 = vmul.f32 %v2425, -4.1256998e-10
    %v3726 = vmul.f32 %v2426, -4.1256998e-10
    %v3727 = vmul.f32 %v2427, -4.1256998e-10
    %v3728 = vmul.f32 %v2428, -4.1256998e-10
    %v3729 = vmul.f32 %v2429, -4.1256998e-10
    %v3730 = vmul.f32 %v2430, -4.1256998e-10
    %v3731 = vmul.f32 %v2431, -4.1256998e-10
    %v3732 = vmul.f32 %v2432, -4.1256998e-10
    %v3733 = vmul.f32 %v2433, -4.1256998e-10
    %v3734 = vmul.f32 %v2434, -4.1256998e-10
    %v3735 = vmul.f32 %v2435, -4.1256998e-10
    %v3736 = vmul.f32 %v2436, -4.1256998e-10
    %v3737 = vmul.f32 %v2437, -4.1256998e-10
    %v3738 = vmul.f32 %v2438, -4.1256998e-10
    %v3739 = vmul.f32 %v2439, -4.1256998e-10
    %v3740 = vmul.f32 %v2440, -4.1256998e-10
    %v3741 = vmul.f32 %v2441, -4.1256998e-10
    %v3742 = vmul.f32 %v2442, -4.1256998e-10
    %v3743 = vmul.f32 %v2443, -4.1256998e-10
    %v3744 = vmul.f32 %v2444, -4.1256998e-10
    %v3745 = vmul.f32 %v2445, -4.1256998e-10
    %v3746 = vmul.f32 %v2446, -4.1256998e-10
    %v3747 = vmul.f32 %v2447, -4.1256998e-10
    %v3748 = vmul.f32 %v2448, -4.1256998e-10
    %v3773 = vrot.slane %v3725, 4
    %v3774 = vrot.slane %v3726, 4
    %v3775 = vsel %vm2812, %v3773, %v3774
    %v3776 = vrot.slane %v3727, 4
    %v3777 = vsel %vm2812, %v3774, %v3776
    %v3778 = vrot.slane %v3728, 4
    %v3779 = vrot.slane %v3729, 4
    %v3780 = vsel %vm2812, %v3778, %v3779
    %v3781 = vrot.slane %v3730, 4
    %v3782 = vsel %vm2812, %v3779, %v3781
    %v3783 = vrot.slane %v3731, 4
    %v3784 = vrot.slane %v3732, 4
    %v3785 = vsel %vm2812, %v3783, %v3784
    %v3786 = vrot.slane %v3733, 4
    %v3787 = vsel %vm2812, %v3784, %v3786
    %v3788 = vrot.slane %v3734, 4
    %v3789 = vrot.slane %v3735, 4
    %v3790 = vsel %vm2812, %v3788, %v3789
    %v3791 = vrot.slane %v3736, 4
    %v3792 = vsel %vm2812, %v3789, %v3791
    %v3793 = vrot.slane %v3737, 4
    %v3794 = vrot.slane %v3738, 4
    %v3795 = vsel %vm2812, %v3793, %v3794
    %v3796 = vrot.slane %v3739, 4
    %v3797 = vsel %vm2812, %v3794, %v3796
    %v3798 = vrot.slane %v3740, 4
    %v3799 = vrot.slane %v3741, 4
    %v3800 = vsel %vm2812, %v3798, %v3799
    %v3801 = vrot.slane %v3742, 4
    %v3802 = vsel %vm2812, %v3799, %v3801
    %v3803 = vrot.slane %v3743, 4
    %v3804 = vrot.slane %v3744, 4
    %v3805 = vsel %vm2812, %v3803, %v3804
    %v3806 = vrot.slane %v3745, 4
    %v3807 = vsel %vm2812, %v3804, %v3806
    %v3808 = vrot.slane %v3746, 4
    %v3809 = vrot.slane %v3747, 4
    %v3810 = vsel %vm2812, %v3808, %v3809
    %v3811 = vrot.slane %v3748, 4
    %v3812 = vsel %vm2812, %v3809, %v3811
    %v3829 = vadd.f32 %v3709, %v3775
    %v3830 = vadd.f32 %v3710, %v3777
    %v3831 = vadd.f32 %v3711, %v3780
    %v3832 = vadd.f32 %v3712, %v3782
    %v3833 = vadd.f32 %v3713, %v3785
    %v3834 = vadd.f32 %v3714, %v3787
    %v3835 = vadd.f32 %v3715, %v3790
    %v3836 = vadd.f32 %v3716, %v3792
    %v3837 = vadd.f32 %v3717, %v3795
    %v3838 = vadd.f32 %v3718, %v3797
    %v3839 = vadd.f32 %v3719, %v3800
    %v3840 = vadd.f32 %v3720, %v3802
    %v3841 = vadd.f32 %v3721, %v3805
    %v3842 = vadd.f32 %v3722, %v3807
    %v3843 = vadd.f32 %v3723, %v3810
    %v3844 = vadd.f32 %v3724, %v3812
    %vm3845 = vcmask 130048
    %3846 = vst.msk [vmem:[#allocation6] sm:$0xff] %vm3845, %v3829
    %3847 = vst.msk [vmem:[#allocation6 + $0x8] sm:$0xff] %vm3845, %v3830
    %3848 = vst.msk [vmem:[#allocation6 + $0x10] sm:$0xff] %vm3845, %v3831
    %3849 = vst.msk [vmem:[#allocation6 + $0x18] sm:$0xff] %vm3845, %v3832
    %3850 = vst.msk [vmem:[#allocation6 + $0x20] sm:$0xff] %vm3845, %v3833
    %3851 = vst.msk [vmem:[#allocation6 + $0x28] sm:$0xff] %vm3845, %v3834
    %3852 = vst.msk [vmem:[#allocation6 + $0x30] sm:$0xff] %vm3845, %v3835
    %3853 = vst.msk [vmem:[#allocation6 + $0x38] sm:$0xff] %vm3845, %v3836
    %3854 = vst.msk [vmem:[#allocation6 + $0x40] sm:$0xff] %vm3845, %v3837
    %3855 = vst.msk [vmem:[#allocation6 + $0x48] sm:$0xff] %vm3845, %v3838
    %3856 = vst.msk [vmem:[#allocation6 + $0x50] sm:$0xff] %vm3845, %v3839
    %3857 = vst.msk [vmem:[#allocation6 + $0x58] sm:$0xff] %vm3845, %v3840
    %3858 = vst.msk [vmem:[#allocation6 + $0x60] sm:$0xff] %vm3845, %v3841
    %3859 = vst.msk [vmem:[#allocation6 + $0x68] sm:$0xff] %vm3845, %v3842
    %3860 = vst.msk [vmem:[#allocation6 + $0x70] sm:$0xff] %vm3845, %v3843
    %3861 = vst.msk [vmem:[#allocation6 + $0x78] sm:$0xff] %vm3845, %v3844
    // Predicated region
    $region10: #{tpu_custom_call.1} parent=1 // pred_check
      _
    $region11: #{tpu_custom_call.1} parent=1 // pred_check_branch
      %3863 = sbr.rel (0) target = $region13
    $region12: #{tpu_custom_call.1} parent=1 // pred_region
      %s3865 = ssub.s32 2048, 2048
      %3866 = vsyncadd [#allocation5], %s3865
      %s3867 = sshll.u32 [#allocation6], 4
      %s3868 = int_to_ptr.vmem [resolvable:$true] %s3867
      %3873 = dma.vmem_to_hbm [thread:$0]  %s3868, 2048, %s1, [#allocation5], 128, 128, 8
    $region13: #{tpu_custom_call.1} parent=1 // pred_fallthru
      _
    // Predicated region
    $region14: #{tpu_custom_call.1} parent=1 // pred_check
      _
    $region15: #{tpu_custom_call.1} parent=1 // pred_check_branch
      %3875 = sbr.rel (0) target = $region17
    $region16: #{tpu_custom_call.1} parent=1 // pred_region
      %3876 = dma.done [#allocation5], 2048
    $region17: #{tpu_custom_call.1} parent=1 // pred_fallthru
      _
    %3877 = vsyncpa [#allocation4], 1
    %3878 = vsyncpa [#allocation5], 1

</llo_original>
